<compile_context>
chip_gen: v7x
topology: tpu7x:2x2x1
jax: 0.10.0
libtpu: 0.0.40
codegen_flags: <defaults>
</compile_context>

<pallas_src>
import numpy as np

import jax
import jax.numpy as jnp
from jax.experimental import pallas as pl
from jax.experimental.pallas import tpu as pltpu


BN_EPS = 1e-5
IN_H = IN_W = 16
KSIZE = 3
NUM_CHANNELS = (4, 8)
LC_CHANNEL = 8
LINEAR_SIZE = 32
NUM_CLASSES = 3


# ----------------------------------------------------------------------------
# The fused kernel: whole forward pass, everything in VMEM, all matmuls on MXU.
# ----------------------------------------------------------------------------
def _lc_clf_norm_kernel(
    x_ref,
    c1_sh_ref, c1_w_ref, c1_scale_ref, c1_shift_ref, p1_l_ref, p1_r_ref,
    c2_sh_ref, c2_w_ref, c2_scale_ref, c2_shift_ref, p2_l_ref, p2_r_ref,
    lc_e_ref, lc_w_ref, lc_scale_ref, lc_shift_ref, p3_l_ref, p3_r_ref,
    fc_g_ref, f1_w_ref, f1_b_ref, f2_w_ref, f2_b_ref,
    o_ref,
):
    def mm(a, b):
        return jnp.dot(a, b, preferred_element_type=jnp.float32)

    def conv_bn_relu(x, sh_ref, w_ref, scale_ref, shift_ref):
        # 3x3 'same' conv: sum over the 3 row offsets (dh) of a row-shift
        # matmul followed by a block-tridiagonal lane-mixing matmul.
        y = mm(x, w_ref[1])                         # dh = 1 (no row shift)
        y = y + mm(mm(sh_ref[0], x), w_ref[0])      # dh = 0 (row i-1)
        y = y + mm(mm(sh_ref[1], x), w_ref[2])      # dh = 2 (row i+1)
        y = y * scale_ref[...] + shift_ref[...]     # folded bias + BatchNorm
        return jnp.maximum(y, 0.0)

    def maxpool2x2(y, l_ref, r_ref):
        # rows: even/odd row selection matmuls; lanes: even/odd column-block
        # selection matmuls; then elementwise max over the 4 window taps.
        ye = mm(l_ref[0], y)
        yo = mm(l_ref[1], y)
        return jnp.maximum(
            jnp.maximum(mm(ye, r_ref[0]), mm(ye, r_ref[1])),
            jnp.maximum(mm(yo, r_ref[0]), mm(yo, r_ref[1])),
        )

    x = x_ref[...]                                   # (N*16, 16)

    # conv block 1: Conv2d(1->4,'same') -> BN -> ReLU -> MaxPool(2,2)
    y = conv_bn_relu(x, c1_sh_ref, c1_w_ref, c1_scale_ref, c1_shift_ref)
    y = maxpool2x2(y, p1_l_ref, p1_r_ref)            # (N*8, 8*4)

    # conv block 2: Conv2d(4->8,'same') -> BN -> ReLU -> MaxPool(2,2)
    y = conv_bn_relu(y, c2_sh_ref, c2_w_ref, c2_scale_ref, c2_shift_ref)
    y = maxpool2x2(y, p2_l_ref, p2_r_ref)            # (N*4, 4*8)

    # locally-connected block: per-position unshared channel mixing on the MXU
    # (block-diagonal matrices, one per spatial row) -> BN -> ReLU -> pool.
    z = mm(mm(lc_e_ref[0], y), lc_w_ref[0])
    for i in range(1, lc_w_ref.shape[0]):
        z = z + mm(mm(lc_e_ref[i], y), lc_w_ref[i])
    z = z * lc_scale_ref[...] + lc_shift_ref[...]
    z = jnp.maximum(z, 0.0)
    z = maxpool2x2(z, p3_l_ref, p3_r_ref)            # (N*2, 2*8)

    # flatten (torch NCHW order folded into fc1 weights) + fc1 + ReLU + fc2
    h = mm(mm(fc_g_ref[0], z), f1_w_ref[0]) + mm(mm(fc_g_ref[1], z), f1_w_ref[1])
    h = jnp.maximum(h + f1_b_ref[...], 0.0)
    o_ref[...] = (mm(h, f2_w_ref[...]) + f2_b_ref[...]).astype(o_ref.dtype)


def lc_clf_forward(x_nchw, consts):
    n = x_nchw.shape[0]
    # NCHW with C=1 -> stacked (N*H, W) slab; contiguous collapse, no transpose.
    x_s = x_nchw.astype(jnp.float32).reshape(n * IN_H, IN_W)
    args = (x_s,) + tuple(consts)

    def _spec(a):
        nd = a.ndim
        return pl.BlockSpec(a.shape, lambda i, nd=nd: (0,) * nd)

    return pl.pallas_call(
        _lc_clf_norm_kernel,
        out_shape=jax.ShapeDtypeStruct((n, NUM_CLASSES), jnp.float32),
        grid=(1,),
        in_specs=[_spec(a) for a in args],
        out_specs=pl.BlockSpec((n, NUM_CLASSES), lambda i: (0, 0)),
        compiler_params=pltpu.CompilerParams(dimension_semantics=("arbitrary",)),
    )(*args)


forward = jax.jit(lc_clf_forward)


# ----------------------------------------------------------------------------
# Host-side (one-time) construction of the kernel's constant operand matrices.
# ----------------------------------------------------------------------------
def _conv_consts(w, b, scale, shift, hs, ws, n):
    w = np.asarray(w, np.float32)                   # (Co, Ci, 3, 3) torch layout
    co, ci, _, _ = w.shape
    # row-shift matrices for dh = 0 and dh = 2 (dh = 1 is identity, skipped).
    sh = np.zeros((2, hs, hs), np.float32)
    for i in range(hs):
        if i - 1 >= 0:
            sh[0, i, i - 1] = 1.0
        if i + 1 < hs:
            sh[1, i, i + 1] = 1.0
    eye_n = np.eye(n, dtype=np.float32)
    sh_n = np.stack([np.kron(eye_n, sh[a]) for a in range(2)])
    # block-tridiagonal lane-mixing matrices (one per dh): implement the
    # width-direction taps + channel mixing of the 3x3 'same' conv.
    wcol = np.zeros((3, ws * ci, ws * co), np.float32)
    for dh in range(3):
        for jo in range(ws):
            for dw in range(3):
                ji = jo + dw - 1
                if 0 <= ji < ws:
                    wcol[dh, ji * ci:(ji + 1) * ci, jo * co:(jo + 1) * co] = w[:, :, dh, dw].T
    scale = np.asarray(scale, np.float32)
    shift = np.asarray(shift, np.float32)
    b = np.asarray(b, np.float32)
    scale_l = np.tile(scale, ws)[None, :]
    shift_l = np.tile(scale * b + shift, ws)[None, :]   # conv bias folded into BN shift
    return sh_n, wcol, scale_l, shift_l


def _pool_consts(hs, ws, c, n):
    ho, wo = hs // 2, ws // 2
    l = np.zeros((2, ho, hs), np.float32)
    for a in range(2):
        for io in range(ho):
            l[a, io, 2 * io + a] = 1.0
    eye_n = np.eye(n, dtype=np.float32)
    l_n = np.stack([np.kron(eye_n, l[a]) for a in range(2)])
    r = np.zeros((2, ws * c, wo * c), np.float32)
    for bb in range(2):
        for jo in range(wo):
            for cc in range(c):
                r[bb, (2 * jo + bb) * c + cc, jo * c + cc] = 1.0
    return l_n, r


def _lc_consts(lw, lb, lscale, lshift, hs, ws, n):
    lw = np.asarray(lw, np.float32)                 # (P, Ci, Co)
    lb = np.asarray(lb, np.float32)                 # (P, Co)
    lscale = np.asarray(lscale, np.float32)
    lshift = np.asarray(lshift, np.float32)
    _, ci, co = lw.shape
    lcbd = np.zeros((hs, ws * ci, ws * co), np.float32)
    for i in range(hs):
        for j in range(ws):
            lcbd[i, j * ci:(j + 1) * ci, j * co:(j + 1) * co] = lw[i * ws + j]
    e = np.zeros((hs, n * hs, n * hs), np.float32)
    for i in range(hs):
        for nn in range(n):
            e[i, nn * hs + i, nn * hs + i] = 1.0
    scale_l = np.tile(lscale, ws)[None, :]
    shift_rows = np.zeros((n * hs, ws * co), np.float32)
    for nn in range(n):
        for i in range(hs):
            for j in range(ws):
                shift_rows[nn * hs + i, j * co:(j + 1) * co] = lscale * lb[i * ws + j] + lshift
    return e, lcbd, scale_l, shift_rows


def _fc_consts(fc1_w, fc1_b, fc2_w, fc2_b, c, ho, wo, n):
    fc1_w = np.asarray(fc1_w, np.float32)           # (out, in) torch layout
    fc2_w = np.asarray(fc2_w, np.float32)
    out1 = fc1_w.shape[0]
    # fold the torch NCHW flatten order (c*ho*wo + io*wo + jo) into fc1.
    w1p = np.zeros((ho, wo * c, out1), np.float32)
    for io in range(ho):
        for jo in range(wo):
            for cc in range(c):
                w1p[io, jo * c + cc, :] = fc1_w[:, cc * ho * wo + io * wo + jo]
    g = np.zeros((ho, n, n * ho), np.float32)       # per-io row-gather matrices
    for io in range(ho):
        for nn in range(n):
            g[io, nn, nn * ho + io] = 1.0
    f1b = np.asarray(fc1_b, np.float32)[None, :]
    w2 = fc2_w.T.copy()
    f2b = np.asarray(fc2_b, np.float32)[None, :]
    return g, w1p, f1b, w2, f2b


def build_kernel_constants(params, n):
    h, w = IN_H, IN_W
    channels = [1] + list(NUM_CHANNELS)
    consts = []
    for idx, (wt, b, scale, shift) in enumerate(params["convs"]):
        sh_n, wcol, scale_l, shift_l = _conv_consts(wt, b, scale, shift, h, w, n)
        pl_n, pr = _pool_consts(h, w, channels[idx + 1], n)
        consts += [sh_n, wcol, scale_l, shift_l, pl_n, pr]
        h //= 2
        w //= 2
    lw, lb, lscale, lshift = params["lc"]
    e, lcbd, lscale_l, lshift_rows = _lc_consts(lw, lb, lscale, lshift, h, w, n)
    pl3, pr3 = _pool_consts(h, w, LC_CHANNEL, n)
    consts += [e, lcbd, lscale_l, lshift_rows, pl3, pr3]
    h //= 2
    w //= 2
    g, w1p, f1b, w2, f2b = _fc_consts(params["fc1"][0], params["fc1"][1],
                                      params["fc2"][0], params["fc2"][1],
                                      LC_CHANNEL, h, w, n)
    consts += [g, w1p, f1b, w2, f2b]
    return tuple(jnp.asarray(cst) for cst in consts)


# ----------------------------------------------------------------------------
# Synthetic parameter init (PyTorch layouts) + pure-JAX reference for checking.
# ----------------------------------------------------------------------------
def _fold_bn(key, co):
    kg, kb, km, kv = jax.random.split(key, 4)
    gamma = jax.random.uniform(kg, (co,), jnp.float32, 0.5, 1.5)
    beta = jax.random.normal(kb, (co,), jnp.float32) * 0.1
    mean = jax.random.normal(km, (co,), jnp.float32) * 0.1
    var = jax.random.uniform(kv, (co,), jnp.float32, 0.5, 1.5)
    scale = gamma / jnp.sqrt(var + BN_EPS)
    shift = beta - mean * scale
    return scale, shift


def init_params(key):
    channels = [1] + list(NUM_CHANNELS)
    keys = iter(jax.random.split(key, 32))
    params = {"convs": []}
    h, w = IN_H, IN_W
    for i in range(len(NUM_CHANNELS)):
        ci, co = channels[i], channels[i + 1]
        wt = jax.random.normal(next(keys), (co, ci, KSIZE, KSIZE), jnp.float32) * 0.1
        b = jax.random.normal(next(keys), (co,), jnp.float32) * 0.1
        scale, shift = _fold_bn(next(keys), co)
        params["convs"].append((wt, b, scale, shift))
        h //= 2
        w //= 2
    p = h * w
    lw = jax.random.normal(next(keys), (p, channels[-1], LC_CHANNEL), jnp.float32) * 0.1
    lb = jax.random.normal(next(keys), (p, LC_CHANNEL), jnp.float32) * 0.1
    lscale, lshift = _fold_bn(next(keys), LC_CHANNEL)
    params["lc"] = (lw, lb, lscale, lshift)
    h //= 2
    w //= 2
    fin = h * w * LC_CHANNEL
    params["fc1"] = (jax.random.normal(next(keys), (LINEAR_SIZE, fin), jnp.float32) * 0.1,
                     jax.random.normal(next(keys), (LINEAR_SIZE,), jnp.float32) * 0.1)
    params["fc2"] = (jax.random.normal(next(keys), (NUM_CLASSES, LINEAR_SIZE), jnp.float32) * 0.1,
                     jax.random.normal(next(keys), (NUM_CLASSES,), jnp.float32) * 0.1)
    return params


def reference_forward(params, x_nchw):
    hp = jax.lax.Precision.HIGHEST
    x = x_nchw.astype(jnp.float32)
    for (w, b, scale, shift) in params["convs"]:
        y = jax.lax.conv_general_dilated(
            x, w, window_strides=(1, 1), padding="SAME",
            dimension_numbers=("NCHW", "OIHW", "NCHW"), precision=hp)
        y = y + b[None, :, None, None]
        y = y * scale[None, :, None, None] + shift[None, :, None, None]
        y = jnp.maximum(y, 0.0)
        n_, c_, h_, w_ = y.shape
        x = y.reshape(n_, c_, h_ // 2, 2, w_ // 2, 2).max(axis=(3, 5))
    lw, lb, lscale, lshift = params["lc"]
    n_, c_, h_, w_ = x.shape
    xs = x.transpose(0, 2, 3, 1).reshape(n_, h_ * w_, c_)
    y = jnp.einsum("npc,pcd->npd", xs, lw, precision=hp) + lb[None]
    y = y * lscale[None, None, :] + lshift[None, None, :]
    y = jnp.maximum(y, 0.0)
    d = y.shape[-1]
    y = y.reshape(n_, h_, w_, d).transpose(0, 3, 1, 2)
    x = y.reshape(n_, d, h_ // 2, 2, w_ // 2, 2).max(axis=(3, 5))
    x = x.reshape(n_, -1)
    w1, b1 = params["fc1"]
    w2, b2 = params["fc2"]
    x = jnp.maximum(jnp.dot(x, w1.T, precision=hp) + b1, 0.0)
    return jnp.dot(x, w2.T, precision=hp) + b2


if __name__ == "__main__":
    key = jax.random.PRNGKey(0)
    kp, kx = jax.random.split(key)
    params = init_params(kp)

    n = 2
    x = jax.random.normal(kx, (n, 1, IN_H, IN_W), jnp.float32)   # NCHW like PyTorch

    consts = build_kernel_constants(params, n)
    logits = jax.block_until_ready(forward(x, consts))

    assert logits.shape == (n, NUM_CLASSES), logits.shape
    assert bool(jnp.all(jnp.isfinite(logits)))

    # correctness check against a plain-JAX reference of the same module
    ref = jax.block_until_ready(reference_forward(params, x))
    np.testing.assert_allclose(np.asarray(logits), np.asarray(ref), rtol=5e-3, atol=5e-3)

    print("KERNEL_OK")
</pallas_src>

<mosaic_0001>
module attributes {stable_mosaic.version = 11 : i64} {
  func.func @_lc_clf_norm_kernel(%arg0: i32, %arg1: memref<32x16xf32, #tpu.memory_space<vmem>>, %arg2: memref<2x32x32xf32, #tpu.memory_space<vmem>>, %arg3: memref<3x16x64xf32, #tpu.memory_space<vmem>>, %arg4: memref<1x64xf32, #tpu.memory_space<vmem>>, %arg5: memref<1x64xf32, #tpu.memory_space<vmem>>, %arg6: memref<2x16x32xf32, #tpu.memory_space<vmem>>, %arg7: memref<2x64x32xf32, #tpu.memory_space<vmem>>, %arg8: memref<2x16x16xf32, #tpu.memory_space<vmem>>, %arg9: memref<3x32x64xf32, #tpu.memory_space<vmem>>, %arg10: memref<1x64xf32, #tpu.memory_space<vmem>>, %arg11: memref<1x64xf32, #tpu.memory_space<vmem>>, %arg12: memref<2x8x16xf32, #tpu.memory_space<vmem>>, %arg13: memref<2x64x32xf32, #tpu.memory_space<vmem>>, %arg14: memref<4x8x8xf32, #tpu.memory_space<vmem>>, %arg15: memref<4x32x32xf32, #tpu.memory_space<vmem>>, %arg16: memref<1x32xf32, #tpu.memory_space<vmem>>, %arg17: memref<8x32xf32, #tpu.memory_space<vmem>>, %arg18: memref<2x4x8xf32, #tpu.memory_space<vmem>>, %arg19: memref<2x32x16xf32, #tpu.memory_space<vmem>>, %arg20: memref<2x2x4xf32, #tpu.memory_space<vmem>>, %arg21: memref<2x16x32xf32, #tpu.memory_space<vmem>>, %arg22: memref<1x32xf32, #tpu.memory_space<vmem>>, %arg23: memref<32x3xf32, #tpu.memory_space<vmem>>, %arg24: memref<1x3xf32, #tpu.memory_space<vmem>>, %arg25: memref<2x3xf32, #tpu.memory_space<vmem>>) attributes {dimension_semantics = [#tpu.dimension_semantics<arbitrary>], iteration_bounds = array<i64: 1>, scalar_prefetch = 0 : i64, scratch_operands = 0 : i64, tpu.core_type = #tpu.core_type<tc>, window_params = [{pipeline_mode = #tpu.pipeline_mode<synchronous>, transform_indices = @transform_0, window_bounds = array<i64: 32, 16>}, {pipeline_mode = #tpu.pipeline_mode<synchronous>, transform_indices = @transform_1, window_bounds = array<i64: 2, 32, 32>}, {pipeline_mode = #tpu.pipeline_mode<synchronous>, transform_indices = @transform_2, window_bounds = array<i64: 3, 16, 64>}, {pipeline_mode = #tpu.pipeline_mode<synchronous>, transform_indices = @transform_3, window_bounds = array<i64: 1, 64>}, {pipeline_mode = #tpu.pipeline_mode<synchronous>, transform_indices = @transform_4, window_bounds = array<i64: 1, 64>}, {pipeline_mode = #tpu.pipeline_mode<synchronous>, transform_indices = @transform_5, window_bounds = array<i64: 2, 16, 32>}, {pipeline_mode = #tpu.pipeline_mode<synchronous>, transform_indices = @transform_6, window_bounds = array<i64: 2, 64, 32>}, {pipeline_mode = #tpu.pipeline_mode<synchronous>, transform_indices = @transform_7, window_bounds = array<i64: 2, 16, 16>}, {pipeline_mode = #tpu.pipeline_mode<synchronous>, transform_indices = @transform_8, window_bounds = array<i64: 3, 32, 64>}, {pipeline_mode = #tpu.pipeline_mode<synchronous>, transform_indices = @transform_9, window_bounds = array<i64: 1, 64>}, {pipeline_mode = #tpu.pipeline_mode<synchronous>, transform_indices = @transform_10, window_bounds = array<i64: 1, 64>}, {pipeline_mode = #tpu.pipeline_mode<synchronous>, transform_indices = @transform_11, window_bounds = array<i64: 2, 8, 16>}, {pipeline_mode = #tpu.pipeline_mode<synchronous>, transform_indices = @transform_12, window_bounds = array<i64: 2, 64, 32>}, {pipeline_mode = #tpu.pipeline_mode<synchronous>, transform_indices = @transform_13, window_bounds = array<i64: 4, 8, 8>}, {pipeline_mode = #tpu.pipeline_mode<synchronous>, transform_indices = @transform_14, window_bounds = array<i64: 4, 32, 32>}, {pipeline_mode = #tpu.pipeline_mode<synchronous>, transform_indices = @transform_15, window_bounds = array<i64: 1, 32>}, {pipeline_mode = #tpu.pipeline_mode<synchronous>, transform_indices = @transform_16, window_bounds = array<i64: 8, 32>}, {pipeline_mode = #tpu.pipeline_mode<synchronous>, transform_indices = @transform_17, window_bounds = array<i64: 2, 4, 8>}, {pipeline_mode = #tpu.pipeline_mode<synchronous>, transform_indices = @transform_18, window_bounds = array<i64: 2, 32, 16>}, {pipeline_mode = #tpu.pipeline_mode<synchronous>, transform_indices = @transform_19, window_bounds = array<i64: 2, 2, 4>}, {pipeline_mode = #tpu.pipeline_mode<synchronous>, transform_indices = @transform_20, window_bounds = array<i64: 2, 16, 32>}, {pipeline_mode = #tpu.pipeline_mode<synchronous>, transform_indices = @transform_21, window_bounds = array<i64: 1, 32>}, {pipeline_mode = #tpu.pipeline_mode<synchronous>, transform_indices = @transform_22, window_bounds = array<i64: 32, 3>}, {pipeline_mode = #tpu.pipeline_mode<synchronous>, transform_indices = @transform_23, window_bounds = array<i64: 1, 3>}, {pipeline_mode = #tpu.pipeline_mode<synchronous>, transform_indices = @transform_24, window_bounds = array<i64: 2, 3>}]} {
    %c0 = arith.constant 0 : index
    %c0_0 = arith.constant 0 : index
    %0 = vector.load %arg1[%c0, %c0_0] : memref<32x16xf32, #tpu.memory_space<vmem>>, vector<32x16xf32>
    %c1 = arith.constant 1 : index
    %c0_1 = arith.constant 0 : index
    %c0_2 = arith.constant 0 : index
    %1 = vector.load %arg3[%c1, %c0_1, %c0_2] : memref<3x16x64xf32, #tpu.memory_space<vmem>>, vector<1x16x64xf32>
    %2 = vector.shape_cast %1 : vector<1x16x64xf32> to vector<16x64xf32>
    %cst = arith.constant dense<0.000000e+00> : vector<32x64xf32>
    %3 = tpu.matmul %0, %2, %cst {dimension_numbers = #tpu.dot_dimension_numbers<[1], [0], [0], [1], [0, 0, 1, 1], [], []>} : vector<32x16xf32>, vector<16x64xf32>, vector<32x64xf32> -> vector<32x64xf32>
    %c0_3 = arith.constant 0 : index
    %c0_4 = arith.constant 0 : index
    %c0_5 = arith.constant 0 : index
    %4 = vector.load %arg2[%c0_3, %c0_4, %c0_5] : memref<2x32x32xf32, #tpu.memory_space<vmem>>, vector<1x32x32xf32>
    %5 = vector.shape_cast %4 : vector<1x32x32xf32> to vector<32x32xf32>
    %cst_6 = arith.constant dense<0.000000e+00> : vector<32x16xf32>
    %6 = tpu.matmul %5, %0, %cst_6 {dimension_numbers = #tpu.dot_dimension_numbers<[1], [0], [0], [1], [0, 0, 1, 1], [], []>} : vector<32x32xf32>, vector<32x16xf32>, vector<32x16xf32> -> vector<32x16xf32>
    %c0_7 = arith.constant 0 : index
    %c0_8 = arith.constant 0 : index
    %c0_9 = arith.constant 0 : index
    %7 = vector.load %arg3[%c0_7, %c0_8, %c0_9] : memref<3x16x64xf32, #tpu.memory_space<vmem>>, vector<1x16x64xf32>
    %8 = vector.shape_cast %7 : vector<1x16x64xf32> to vector<16x64xf32>
    %cst_10 = arith.constant dense<0.000000e+00> : vector<32x64xf32>
    %9 = tpu.matmul %6, %8, %cst_10 {dimension_numbers = #tpu.dot_dimension_numbers<[1], [0], [0], [1], [0, 0, 1, 1], [], []>} : vector<32x16xf32>, vector<16x64xf32>, vector<32x64xf32> -> vector<32x64xf32>
    %10 = arith.addf %3, %9 : vector<32x64xf32>
    %c1_11 = arith.constant 1 : index
    %c0_12 = arith.constant 0 : index
    %c0_13 = arith.constant 0 : index
    %11 = vector.load %arg2[%c1_11, %c0_12, %c0_13] : memref<2x32x32xf32, #tpu.memory_space<vmem>>, vector<1x32x32xf32>
    %12 = vector.shape_cast %11 : vector<1x32x32xf32> to vector<32x32xf32>
    %cst_14 = arith.constant dense<0.000000e+00> : vector<32x16xf32>
    %13 = tpu.matmul %12, %0, %cst_14 {dimension_numbers = #tpu.dot_dimension_numbers<[1], [0], [0], [1], [0, 0, 1, 1], [], []>} : vector<32x32xf32>, vector<32x16xf32>, vector<32x16xf32> -> vector<32x16xf32>
    %c2 = arith.constant 2 : index
    %c0_15 = arith.constant 0 : index
    %c0_16 = arith.constant 0 : index
    %14 = vector.load %arg3[%c2, %c0_15, %c0_16] : memref<3x16x64xf32, #tpu.memory_space<vmem>>, vector<1x16x64xf32>
    %15 = vector.shape_cast %14 : vector<1x16x64xf32> to vector<16x64xf32>
    %cst_17 = arith.constant dense<0.000000e+00> : vector<32x64xf32>
    %16 = tpu.matmul %13, %15, %cst_17 {dimension_numbers = #tpu.dot_dimension_numbers<[1], [0], [0], [1], [0, 0, 1, 1], [], []>} : vector<32x16xf32>, vector<16x64xf32>, vector<32x64xf32> -> vector<32x64xf32>
    %17 = arith.addf %10, %16 : vector<32x64xf32>
    %c0_18 = arith.constant 0 : index
    %c0_19 = arith.constant 0 : index
    %18 = vector.load %arg4[%c0_18, %c0_19] : memref<1x64xf32, #tpu.memory_space<vmem>>, vector<1x64xf32>
    %19 = vector.broadcast %18 : vector<1x64xf32> to vector<32x64xf32>
    %20 = arith.mulf %17, %19 : vector<32x64xf32>
    %c0_20 = arith.constant 0 : index
    %c0_21 = arith.constant 0 : index
    %21 = vector.load %arg5[%c0_20, %c0_21] : memref<1x64xf32, #tpu.memory_space<vmem>>, vector<1x64xf32>
    %22 = vector.broadcast %21 : vector<1x64xf32> to vector<32x64xf32>
    %23 = arith.addf %20, %22 : vector<32x64xf32>
    %cst_22 = arith.constant 0.000000e+00 : f32
    %24 = vector.broadcast %cst_22 : f32 to vector<32x64xf32>
    %25 = arith.maximumf %23, %24 : vector<32x64xf32>
    %c0_23 = arith.constant 0 : index
    %c0_24 = arith.constant 0 : index
    %c0_25 = arith.constant 0 : index
    %26 = vector.load %arg6[%c0_23, %c0_24, %c0_25] : memref<2x16x32xf32, #tpu.memory_space<vmem>>, vector<1x16x32xf32>
    %27 = vector.shape_cast %26 : vector<1x16x32xf32> to vector<16x32xf32>
    %cst_26 = arith.constant dense<0.000000e+00> : vector<16x64xf32>
    %28 = tpu.matmul %27, %25, %cst_26 {dimension_numbers = #tpu.dot_dimension_numbers<[1], [0], [0], [1], [0, 0, 1, 1], [], []>} : vector<16x32xf32>, vector<32x64xf32>, vector<16x64xf32> -> vector<16x64xf32>
    %c1_27 = arith.constant 1 : index
    %c0_28 = arith.constant 0 : index
    %c0_29 = arith.constant 0 : index
    %29 = vector.load %arg6[%c1_27, %c0_28, %c0_29] : memref<2x16x32xf32, #tpu.memory_space<vmem>>, vector<1x16x32xf32>
    %30 = vector.shape_cast %29 : vector<1x16x32xf32> to vector<16x32xf32>
    %cst_30 = arith.constant dense<0.000000e+00> : vector<16x64xf32>
    %31 = tpu.matmul %30, %25, %cst_30 {dimension_numbers = #tpu.dot_dimension_numbers<[1], [0], [0], [1], [0, 0, 1, 1], [], []>} : vector<16x32xf32>, vector<32x64xf32>, vector<16x64xf32> -> vector<16x64xf32>
    %c0_31 = arith.constant 0 : index
    %c0_32 = arith.constant 0 : index
    %c0_33 = arith.constant 0 : index
    %32 = vector.load %arg7[%c0_31, %c0_32, %c0_33] : memref<2x64x32xf32, #tpu.memory_space<vmem>>, vector<1x64x32xf32>
    %33 = vector.shape_cast %32 : vector<1x64x32xf32> to vector<64x32xf32>
    %cst_34 = arith.constant dense<0.000000e+00> : vector<16x32xf32>
    %34 = tpu.matmul %28, %33, %cst_34 {dimension_numbers = #tpu.dot_dimension_numbers<[1], [0], [0], [1], [0, 0, 1, 1], [], []>} : vector<16x64xf32>, vector<64x32xf32>, vector<16x32xf32> -> vector<16x32xf32>
    %c1_35 = arith.constant 1 : index
    %c0_36 = arith.constant 0 : index
    %c0_37 = arith.constant 0 : index
    %35 = vector.load %arg7[%c1_35, %c0_36, %c0_37] : memref<2x64x32xf32, #tpu.memory_space<vmem>>, vector<1x64x32xf32>
    %36 = vector.shape_cast %35 : vector<1x64x32xf32> to vector<64x32xf32>
    %cst_38 = arith.constant dense<0.000000e+00> : vector<16x32xf32>
    %37 = tpu.matmul %28, %36, %cst_38 {dimension_numbers = #tpu.dot_dimension_numbers<[1], [0], [0], [1], [0, 0, 1, 1], [], []>} : vector<16x64xf32>, vector<64x32xf32>, vector<16x32xf32> -> vector<16x32xf32>
    %38 = arith.maximumf %34, %37 : vector<16x32xf32>
    %c0_39 = arith.constant 0 : index
    %c0_40 = arith.constant 0 : index
    %c0_41 = arith.constant 0 : index
    %39 = vector.load %arg7[%c0_39, %c0_40, %c0_41] : memref<2x64x32xf32, #tpu.memory_space<vmem>>, vector<1x64x32xf32>
    %40 = vector.shape_cast %39 : vector<1x64x32xf32> to vector<64x32xf32>
    %cst_42 = arith.constant dense<0.000000e+00> : vector<16x32xf32>
    %41 = tpu.matmul %31, %40, %cst_42 {dimension_numbers = #tpu.dot_dimension_numbers<[1], [0], [0], [1], [0, 0, 1, 1], [], []>} : vector<16x64xf32>, vector<64x32xf32>, vector<16x32xf32> -> vector<16x32xf32>
    %c1_43 = arith.constant 1 : index
    %c0_44 = arith.constant 0 : index
    %c0_45 = arith.constant 0 : index
    %42 = vector.load %arg7[%c1_43, %c0_44, %c0_45] : memref<2x64x32xf32, #tpu.memory_space<vmem>>, vector<1x64x32xf32>
    %43 = vector.shape_cast %42 : vector<1x64x32xf32> to vector<64x32xf32>
    %cst_46 = arith.constant dense<0.000000e+00> : vector<16x32xf32>
    %44 = tpu.matmul %31, %43, %cst_46 {dimension_numbers = #tpu.dot_dimension_numbers<[1], [0], [0], [1], [0, 0, 1, 1], [], []>} : vector<16x64xf32>, vector<64x32xf32>, vector<16x32xf32> -> vector<16x32xf32>
    %45 = arith.maximumf %41, %44 : vector<16x32xf32>
    %46 = arith.maximumf %38, %45 : vector<16x32xf32>
    %c1_47 = arith.constant 1 : index
    %c0_48 = arith.constant 0 : index
    %c0_49 = arith.constant 0 : index
    %47 = vector.load %arg9[%c1_47, %c0_48, %c0_49] : memref<3x32x64xf32, #tpu.memory_space<vmem>>, vector<1x32x64xf32>
    %48 = vector.shape_cast %47 : vector<1x32x64xf32> to vector<32x64xf32>
    %cst_50 = arith.constant dense<0.000000e+00> : vector<16x64xf32>
    %49 = tpu.matmul %46, %48, %cst_50 {dimension_numbers = #tpu.dot_dimension_numbers<[1], [0], [0], [1], [0, 0, 1, 1], [], []>} : vector<16x32xf32>, vector<32x64xf32>, vector<16x64xf32> -> vector<16x64xf32>
    %c0_51 = arith.constant 0 : index
    %c0_52 = arith.constant 0 : index
    %c0_53 = arith.constant 0 : index
    %50 = vector.load %arg8[%c0_51, %c0_52, %c0_53] : memref<2x16x16xf32, #tpu.memory_space<vmem>>, vector<1x16x16xf32>
    %51 = vector.shape_cast %50 : vector<1x16x16xf32> to vector<16x16xf32>
    %cst_54 = arith.constant dense<0.000000e+00> : vector<16x32xf32>
    %52 = tpu.matmul %51, %46, %cst_54 {dimension_numbers = #tpu.dot_dimension_numbers<[1], [0], [0], [1], [0, 0, 1, 1], [], []>} : vector<16x16xf32>, vector<16x32xf32>, vector<16x32xf32> -> vector<16x32xf32>
    %c0_55 = arith.constant 0 : index
    %c0_56 = arith.constant 0 : index
    %c0_57 = arith.constant 0 : index
    %53 = vector.load %arg9[%c0_55, %c0_56, %c0_57] : memref<3x32x64xf32, #tpu.memory_space<vmem>>, vector<1x32x64xf32>
    %54 = vector.shape_cast %53 : vector<1x32x64xf32> to vector<32x64xf32>
    %cst_58 = arith.constant dense<0.000000e+00> : vector<16x64xf32>
    %55 = tpu.matmul %52, %54, %cst_58 {dimension_numbers = #tpu.dot_dimension_numbers<[1], [0], [0], [1], [0, 0, 1, 1], [], []>} : vector<16x32xf32>, vector<32x64xf32>, vector<16x64xf32> -> vector<16x64xf32>
    %56 = arith.addf %49, %55 : vector<16x64xf32>
    %c1_59 = arith.constant 1 : index
    %c0_60 = arith.constant 0 : index
    %c0_61 = arith.constant 0 : index
    %57 = vector.load %arg8[%c1_59, %c0_60, %c0_61] : memref<2x16x16xf32, #tpu.memory_space<vmem>>, vector<1x16x16xf32>
    %58 = vector.shape_cast %57 : vector<1x16x16xf32> to vector<16x16xf32>
    %cst_62 = arith.constant dense<0.000000e+00> : vector<16x32xf32>
    %59 = tpu.matmul %58, %46, %cst_62 {dimension_numbers = #tpu.dot_dimension_numbers<[1], [0], [0], [1], [0, 0, 1, 1], [], []>} : vector<16x16xf32>, vector<16x32xf32>, vector<16x32xf32> -> vector<16x32xf32>
    %c2_63 = arith.constant 2 : index
    %c0_64 = arith.constant 0 : index
    %c0_65 = arith.constant 0 : index
    %60 = vector.load %arg9[%c2_63, %c0_64, %c0_65] : memref<3x32x64xf32, #tpu.memory_space<vmem>>, vector<1x32x64xf32>
    %61 = vector.shape_cast %60 : vector<1x32x64xf32> to vector<32x64xf32>
    %cst_66 = arith.constant dense<0.000000e+00> : vector<16x64xf32>
    %62 = tpu.matmul %59, %61, %cst_66 {dimension_numbers = #tpu.dot_dimension_numbers<[1], [0], [0], [1], [0, 0, 1, 1], [], []>} : vector<16x32xf32>, vector<32x64xf32>, vector<16x64xf32> -> vector<16x64xf32>
    %63 = arith.addf %56, %62 : vector<16x64xf32>
    %c0_67 = arith.constant 0 : index
    %c0_68 = arith.constant 0 : index
    %64 = vector.load %arg10[%c0_67, %c0_68] : memref<1x64xf32, #tpu.memory_space<vmem>>, vector<1x64xf32>
    %65 = vector.broadcast %64 : vector<1x64xf32> to vector<16x64xf32>
    %66 = arith.mulf %63, %65 : vector<16x64xf32>
    %c0_69 = arith.constant 0 : index
    %c0_70 = arith.constant 0 : index
    %67 = vector.load %arg11[%c0_69, %c0_70] : memref<1x64xf32, #tpu.memory_space<vmem>>, vector<1x64xf32>
    %68 = vector.broadcast %67 : vector<1x64xf32> to vector<16x64xf32>
    %69 = arith.addf %66, %68 : vector<16x64xf32>
    %cst_71 = arith.constant 0.000000e+00 : f32
    %70 = vector.broadcast %cst_71 : f32 to vector<16x64xf32>
    %71 = arith.maximumf %69, %70 : vector<16x64xf32>
    %c0_72 = arith.constant 0 : index
    %c0_73 = arith.constant 0 : index
    %c0_74 = arith.constant 0 : index
    %72 = vector.load %arg12[%c0_72, %c0_73, %c0_74] : memref<2x8x16xf32, #tpu.memory_space<vmem>>, vector<1x8x16xf32>
    %73 = vector.shape_cast %72 : vector<1x8x16xf32> to vector<8x16xf32>
    %cst_75 = arith.constant dense<0.000000e+00> : vector<8x64xf32>
    %74 = tpu.matmul %73, %71, %cst_75 {dimension_numbers = #tpu.dot_dimension_numbers<[1], [0], [0], [1], [0, 0, 1, 1], [], []>} : vector<8x16xf32>, vector<16x64xf32>, vector<8x64xf32> -> vector<8x64xf32>
    %c1_76 = arith.constant 1 : index
    %c0_77 = arith.constant 0 : index
    %c0_78 = arith.constant 0 : index
    %75 = vector.load %arg12[%c1_76, %c0_77, %c0_78] : memref<2x8x16xf32, #tpu.memory_space<vmem>>, vector<1x8x16xf32>
    %76 = vector.shape_cast %75 : vector<1x8x16xf32> to vector<8x16xf32>
    %cst_79 = arith.constant dense<0.000000e+00> : vector<8x64xf32>
    %77 = tpu.matmul %76, %71, %cst_79 {dimension_numbers = #tpu.dot_dimension_numbers<[1], [0], [0], [1], [0, 0, 1, 1], [], []>} : vector<8x16xf32>, vector<16x64xf32>, vector<8x64xf32> -> vector<8x64xf32>
    %c0_80 = arith.constant 0 : index
    %c0_81 = arith.constant 0 : index
    %c0_82 = arith.constant 0 : index
    %78 = vector.load %arg13[%c0_80, %c0_81, %c0_82] : memref<2x64x32xf32, #tpu.memory_space<vmem>>, vector<1x64x32xf32>
    %79 = vector.shape_cast %78 : vector<1x64x32xf32> to vector<64x32xf32>
    %cst_83 = arith.constant dense<0.000000e+00> : vector<8x32xf32>
    %80 = tpu.matmul %74, %79, %cst_83 {dimension_numbers = #tpu.dot_dimension_numbers<[1], [0], [0], [1], [0, 0, 1, 1], [], []>} : vector<8x64xf32>, vector<64x32xf32>, vector<8x32xf32> -> vector<8x32xf32>
    %c1_84 = arith.constant 1 : index
    %c0_85 = arith.constant 0 : index
    %c0_86 = arith.constant 0 : index
    %81 = vector.load %arg13[%c1_84, %c0_85, %c0_86] : memref<2x64x32xf32, #tpu.memory_space<vmem>>, vector<1x64x32xf32>
    %82 = vector.shape_cast %81 : vector<1x64x32xf32> to vector<64x32xf32>
    %cst_87 = arith.constant dense<0.000000e+00> : vector<8x32xf32>
    %83 = tpu.matmul %74, %82, %cst_87 {dimension_numbers = #tpu.dot_dimension_numbers<[1], [0], [0], [1], [0, 0, 1, 1], [], []>} : vector<8x64xf32>, vector<64x32xf32>, vector<8x32xf32> -> vector<8x32xf32>
    %84 = arith.maximumf %80, %83 : vector<8x32xf32>
    %c0_88 = arith.constant 0 : index
    %c0_89 = arith.constant 0 : index
    %c0_90 = arith.constant 0 : index
    %85 = vector.load %arg13[%c0_88, %c0_89, %c0_90] : memref<2x64x32xf32, #tpu.memory_space<vmem>>, vector<1x64x32xf32>
    %86 = vector.shape_cast %85 : vector<1x64x32xf32> to vector<64x32xf32>
    %cst_91 = arith.constant dense<0.000000e+00> : vector<8x32xf32>
    %87 = tpu.matmul %77, %86, %cst_91 {dimension_numbers = #tpu.dot_dimension_numbers<[1], [0], [0], [1], [0, 0, 1, 1], [], []>} : vector<8x64xf32>, vector<64x32xf32>, vector<8x32xf32> -> vector<8x32xf32>
    %c1_92 = arith.constant 1 : index
    %c0_93 = arith.constant 0 : index
    %c0_94 = arith.constant 0 : index
    %88 = vector.load %arg13[%c1_92, %c0_93, %c0_94] : memref<2x64x32xf32, #tpu.memory_space<vmem>>, vector<1x64x32xf32>
    %89 = vector.shape_cast %88 : vector<1x64x32xf32> to vector<64x32xf32>
    %cst_95 = arith.constant dense<0.000000e+00> : vector<8x32xf32>
    %90 = tpu.matmul %77, %89, %cst_95 {dimension_numbers = #tpu.dot_dimension_numbers<[1], [0], [0], [1], [0, 0, 1, 1], [], []>} : vector<8x64xf32>, vector<64x32xf32>, vector<8x32xf32> -> vector<8x32xf32>
    %91 = arith.maximumf %87, %90 : vector<8x32xf32>
    %92 = arith.maximumf %84, %91 : vector<8x32xf32>
    %c0_96 = arith.constant 0 : index
    %c0_97 = arith.constant 0 : index
    %c0_98 = arith.constant 0 : index
    %93 = vector.load %arg14[%c0_96, %c0_97, %c0_98] : memref<4x8x8xf32, #tpu.memory_space<vmem>>, vector<1x8x8xf32>
    %94 = vector.shape_cast %93 : vector<1x8x8xf32> to vector<8x8xf32>
    %cst_99 = arith.constant dense<0.000000e+00> : vector<8x32xf32>
    %95 = tpu.matmul %94, %92, %cst_99 {dimension_numbers = #tpu.dot_dimension_numbers<[1], [0], [0], [1], [0, 0, 1, 1], [], []>} : vector<8x8xf32>, vector<8x32xf32>, vector<8x32xf32> -> vector<8x32xf32>
    %c0_100 = arith.constant 0 : index
    %c0_101 = arith.constant 0 : index
    %c0_102 = arith.constant 0 : index
    %96 = vector.load %arg15[%c0_100, %c0_101, %c0_102] : memref<4x32x32xf32, #tpu.memory_space<vmem>>, vector<1x32x32xf32>
    %97 = vector.shape_cast %96 : vector<1x32x32xf32> to vector<32x32xf32>
    %cst_103 = arith.constant dense<0.000000e+00> : vector<8x32xf32>
    %98 = tpu.matmul %95, %97, %cst_103 {dimension_numbers = #tpu.dot_dimension_numbers<[1], [0], [0], [1], [0, 0, 1, 1], [], []>} : vector<8x32xf32>, vector<32x32xf32>, vector<8x32xf32> -> vector<8x32xf32>
    %c1_104 = arith.constant 1 : index
    %c0_105 = arith.constant 0 : index
    %c0_106 = arith.constant 0 : index
    %99 = vector.load %arg14[%c1_104, %c0_105, %c0_106] : memref<4x8x8xf32, #tpu.memory_space<vmem>>, vector<1x8x8xf32>
    %100 = vector.shape_cast %99 : vector<1x8x8xf32> to vector<8x8xf32>
    %cst_107 = arith.constant dense<0.000000e+00> : vector<8x32xf32>
    %101 = tpu.matmul %100, %92, %cst_107 {dimension_numbers = #tpu.dot_dimension_numbers<[1], [0], [0], [1], [0, 0, 1, 1], [], []>} : vector<8x8xf32>, vector<8x32xf32>, vector<8x32xf32> -> vector<8x32xf32>
    %c1_108 = arith.constant 1 : index
    %c0_109 = arith.constant 0 : index
    %c0_110 = arith.constant 0 : index
    %102 = vector.load %arg15[%c1_108, %c0_109, %c0_110] : memref<4x32x32xf32, #tpu.memory_space<vmem>>, vector<1x32x32xf32>
    %103 = vector.shape_cast %102 : vector<1x32x32xf32> to vector<32x32xf32>
    %cst_111 = arith.constant dense<0.000000e+00> : vector<8x32xf32>
    %104 = tpu.matmul %101, %103, %cst_111 {dimension_numbers = #tpu.dot_dimension_numbers<[1], [0], [0], [1], [0, 0, 1, 1], [], []>} : vector<8x32xf32>, vector<32x32xf32>, vector<8x32xf32> -> vector<8x32xf32>
    %105 = arith.addf %98, %104 : vector<8x32xf32>
    %c2_112 = arith.constant 2 : index
    %c0_113 = arith.constant 0 : index
    %c0_114 = arith.constant 0 : index
    %106 = vector.load %arg14[%c2_112, %c0_113, %c0_114] : memref<4x8x8xf32, #tpu.memory_space<vmem>>, vector<1x8x8xf32>
    %107 = vector.shape_cast %106 : vector<1x8x8xf32> to vector<8x8xf32>
    %cst_115 = arith.constant dense<0.000000e+00> : vector<8x32xf32>
    %108 = tpu.matmul %107, %92, %cst_115 {dimension_numbers = #tpu.dot_dimension_numbers<[1], [0], [0], [1], [0, 0, 1, 1], [], []>} : vector<8x8xf32>, vector<8x32xf32>, vector<8x32xf32> -> vector<8x32xf32>
    %c2_116 = arith.constant 2 : index
    %c0_117 = arith.constant 0 : index
    %c0_118 = arith.constant 0 : index
    %109 = vector.load %arg15[%c2_116, %c0_117, %c0_118] : memref<4x32x32xf32, #tpu.memory_space<vmem>>, vector<1x32x32xf32>
    %110 = vector.shape_cast %109 : vector<1x32x32xf32> to vector<32x32xf32>
    %cst_119 = arith.constant dense<0.000000e+00> : vector<8x32xf32>
    %111 = tpu.matmul %108, %110, %cst_119 {dimension_numbers = #tpu.dot_dimension_numbers<[1], [0], [0], [1], [0, 0, 1, 1], [], []>} : vector<8x32xf32>, vector<32x32xf32>, vector<8x32xf32> -> vector<8x32xf32>
    %112 = arith.addf %105, %111 : vector<8x32xf32>
    %c3 = arith.constant 3 : index
    %c0_120 = arith.constant 0 : index
    %c0_121 = arith.constant 0 : index
    %113 = vector.load %arg14[%c3, %c0_120, %c0_121] : memref<4x8x8xf32, #tpu.memory_space<vmem>>, vector<1x8x8xf32>
    %114 = vector.shape_cast %113 : vector<1x8x8xf32> to vector<8x8xf32>
    %cst_122 = arith.constant dense<0.000000e+00> : vector<8x32xf32>
    %115 = tpu.matmul %114, %92, %cst_122 {dimension_numbers = #tpu.dot_dimension_numbers<[1], [0], [0], [1], [0, 0, 1, 1], [], []>} : vector<8x8xf32>, vector<8x32xf32>, vector<8x32xf32> -> vector<8x32xf32>
    %c3_123 = arith.constant 3 : index
    %c0_124 = arith.constant 0 : index
    %c0_125 = arith.constant 0 : index
    %116 = vector.load %arg15[%c3_123, %c0_124, %c0_125] : memref<4x32x32xf32, #tpu.memory_space<vmem>>, vector<1x32x32xf32>
    %117 = vector.shape_cast %116 : vector<1x32x32xf32> to vector<32x32xf32>
    %cst_126 = arith.constant dense<0.000000e+00> : vector<8x32xf32>
    %118 = tpu.matmul %115, %117, %cst_126 {dimension_numbers = #tpu.dot_dimension_numbers<[1], [0], [0], [1], [0, 0, 1, 1], [], []>} : vector<8x32xf32>, vector<32x32xf32>, vector<8x32xf32> -> vector<8x32xf32>
    %119 = arith.addf %112, %118 : vector<8x32xf32>
    %c0_127 = arith.constant 0 : index
    %c0_128 = arith.constant 0 : index
    %120 = vector.load %arg16[%c0_127, %c0_128] : memref<1x32xf32, #tpu.memory_space<vmem>>, vector<1x32xf32>
    %121 = vector.broadcast %120 : vector<1x32xf32> to vector<8x32xf32>
    %122 = arith.mulf %119, %121 : vector<8x32xf32>
    %c0_129 = arith.constant 0 : index
    %c0_130 = arith.constant 0 : index
    %123 = vector.load %arg17[%c0_129, %c0_130] : memref<8x32xf32, #tpu.memory_space<vmem>>, vector<8x32xf32>
    %124 = arith.addf %122, %123 : vector<8x32xf32>
    %cst_131 = arith.constant 0.000000e+00 : f32
    %125 = vector.broadcast %cst_131 : f32 to vector<8x32xf32>
    %126 = arith.maximumf %124, %125 : vector<8x32xf32>
    %c0_132 = arith.constant 0 : index
    %c0_133 = arith.constant 0 : index
    %c0_134 = arith.constant 0 : index
    %127 = vector.load %arg18[%c0_132, %c0_133, %c0_134] : memref<2x4x8xf32, #tpu.memory_space<vmem>>, vector<1x4x8xf32>
    %128 = vector.shape_cast %127 : vector<1x4x8xf32> to vector<4x8xf32>
    %cst_135 = arith.constant dense<0.000000e+00> : vector<4x32xf32>
    %129 = tpu.matmul %128, %126, %cst_135 {dimension_numbers = #tpu.dot_dimension_numbers<[1], [0], [0], [1], [0, 0, 1, 1], [], []>} : vector<4x8xf32>, vector<8x32xf32>, vector<4x32xf32> -> vector<4x32xf32>
    %c1_136 = arith.constant 1 : index
    %c0_137 = arith.constant 0 : index
    %c0_138 = arith.constant 0 : index
    %130 = vector.load %arg18[%c1_136, %c0_137, %c0_138] : memref<2x4x8xf32, #tpu.memory_space<vmem>>, vector<1x4x8xf32>
    %131 = vector.shape_cast %130 : vector<1x4x8xf32> to vector<4x8xf32>
    %cst_139 = arith.constant dense<0.000000e+00> : vector<4x32xf32>
    %132 = tpu.matmul %131, %126, %cst_139 {dimension_numbers = #tpu.dot_dimension_numbers<[1], [0], [0], [1], [0, 0, 1, 1], [], []>} : vector<4x8xf32>, vector<8x32xf32>, vector<4x32xf32> -> vector<4x32xf32>
    %c0_140 = arith.constant 0 : index
    %c0_141 = arith.constant 0 : index
    %c0_142 = arith.constant 0 : index
    %133 = vector.load %arg19[%c0_140, %c0_141, %c0_142] : memref<2x32x16xf32, #tpu.memory_space<vmem>>, vector<1x32x16xf32>
    %134 = vector.shape_cast %133 : vector<1x32x16xf32> to vector<32x16xf32>
    %cst_143 = arith.constant dense<0.000000e+00> : vector<4x16xf32>
    %135 = tpu.matmul %129, %134, %cst_143 {dimension_numbers = #tpu.dot_dimension_numbers<[1], [0], [0], [1], [0, 0, 1, 1], [], []>} : vector<4x32xf32>, vector<32x16xf32>, vector<4x16xf32> -> vector<4x16xf32>
    %c1_144 = arith.constant 1 : index
    %c0_145 = arith.constant 0 : index
    %c0_146 = arith.constant 0 : index
    %136 = vector.load %arg19[%c1_144, %c0_145, %c0_146] : memref<2x32x16xf32, #tpu.memory_space<vmem>>, vector<1x32x16xf32>
    %137 = vector.shape_cast %136 : vector<1x32x16xf32> to vector<32x16xf32>
    %cst_147 = arith.constant dense<0.000000e+00> : vector<4x16xf32>
    %138 = tpu.matmul %129, %137, %cst_147 {dimension_numbers = #tpu.dot_dimension_numbers<[1], [0], [0], [1], [0, 0, 1, 1], [], []>} : vector<4x32xf32>, vector<32x16xf32>, vector<4x16xf32> -> vector<4x16xf32>
    %139 = arith.maximumf %135, %138 : vector<4x16xf32>
    %c0_148 = arith.constant 0 : index
    %c0_149 = arith.constant 0 : index
    %c0_150 = arith.constant 0 : index
    %140 = vector.load %arg19[%c0_148, %c0_149, %c0_150] : memref<2x32x16xf32, #tpu.memory_space<vmem>>, vector<1x32x16xf32>
    %141 = vector.shape_cast %140 : vector<1x32x16xf32> to vector<32x16xf32>
    %cst_151 = arith.constant dense<0.000000e+00> : vector<4x16xf32>
    %142 = tpu.matmul %132, %141, %cst_151 {dimension_numbers = #tpu.dot_dimension_numbers<[1], [0], [0], [1], [0, 0, 1, 1], [], []>} : vector<4x32xf32>, vector<32x16xf32>, vector<4x16xf32> -> vector<4x16xf32>
    %c1_152 = arith.constant 1 : index
    %c0_153 = arith.constant 0 : index
    %c0_154 = arith.constant 0 : index
    %143 = vector.load %arg19[%c1_152, %c0_153, %c0_154] : memref<2x32x16xf32, #tpu.memory_space<vmem>>, vector<1x32x16xf32>
    %144 = vector.shape_cast %143 : vector<1x32x16xf32> to vector<32x16xf32>
    %cst_155 = arith.constant dense<0.000000e+00> : vector<4x16xf32>
    %145 = tpu.matmul %132, %144, %cst_155 {dimension_numbers = #tpu.dot_dimension_numbers<[1], [0], [0], [1], [0, 0, 1, 1], [], []>} : vector<4x32xf32>, vector<32x16xf32>, vector<4x16xf32> -> vector<4x16xf32>
    %146 = arith.maximumf %142, %145 : vector<4x16xf32>
    %147 = arith.maximumf %139, %146 : vector<4x16xf32>
    %c0_156 = arith.constant 0 : index
    %c0_157 = arith.constant 0 : index
    %c0_158 = arith.constant 0 : index
    %148 = vector.load %arg20[%c0_156, %c0_157, %c0_158] : memref<2x2x4xf32, #tpu.memory_space<vmem>>, vector<1x2x4xf32>
    %149 = vector.shape_cast %148 : vector<1x2x4xf32> to vector<2x4xf32>
    %cst_159 = arith.constant dense<0.000000e+00> : vector<2x16xf32>
    %150 = tpu.matmul %149, %147, %cst_159 {dimension_numbers = #tpu.dot_dimension_numbers<[1], [0], [0], [1], [0, 0, 1, 1], [], []>} : vector<2x4xf32>, vector<4x16xf32>, vector<2x16xf32> -> vector<2x16xf32>
    %c0_160 = arith.constant 0 : index
    %c0_161 = arith.constant 0 : index
    %c0_162 = arith.constant 0 : index
    %151 = vector.load %arg21[%c0_160, %c0_161, %c0_162] : memref<2x16x32xf32, #tpu.memory_space<vmem>>, vector<1x16x32xf32>
    %152 = vector.shape_cast %151 : vector<1x16x32xf32> to vector<16x32xf32>
    %cst_163 = arith.constant dense<0.000000e+00> : vector<2x32xf32>
    %153 = tpu.matmul %150, %152, %cst_163 {dimension_numbers = #tpu.dot_dimension_numbers<[1], [0], [0], [1], [0, 0, 1, 1], [], []>} : vector<2x16xf32>, vector<16x32xf32>, vector<2x32xf32> -> vector<2x32xf32>
    %c1_164 = arith.constant 1 : index
    %c0_165 = arith.constant 0 : index
    %c0_166 = arith.constant 0 : index
    %154 = vector.load %arg20[%c1_164, %c0_165, %c0_166] : memref<2x2x4xf32, #tpu.memory_space<vmem>>, vector<1x2x4xf32>
    %155 = vector.shape_cast %154 : vector<1x2x4xf32> to vector<2x4xf32>
    %cst_167 = arith.constant dense<0.000000e+00> : vector<2x16xf32>
    %156 = tpu.matmul %155, %147, %cst_167 {dimension_numbers = #tpu.dot_dimension_numbers<[1], [0], [0], [1], [0, 0, 1, 1], [], []>} : vector<2x4xf32>, vector<4x16xf32>, vector<2x16xf32> -> vector<2x16xf32>
    %c1_168 = arith.constant 1 : index
    %c0_169 = arith.constant 0 : index
    %c0_170 = arith.constant 0 : index
    %157 = vector.load %arg21[%c1_168, %c0_169, %c0_170] : memref<2x16x32xf32, #tpu.memory_space<vmem>>, vector<1x16x32xf32>
    %158 = vector.shape_cast %157 : vector<1x16x32xf32> to vector<16x32xf32>
    %cst_171 = arith.constant dense<0.000000e+00> : vector<2x32xf32>
    %159 = tpu.matmul %156, %158, %cst_171 {dimension_numbers = #tpu.dot_dimension_numbers<[1], [0], [0], [1], [0, 0, 1, 1], [], []>} : vector<2x16xf32>, vector<16x32xf32>, vector<2x32xf32> -> vector<2x32xf32>
    %160 = arith.addf %153, %159 : vector<2x32xf32>
    %c0_172 = arith.constant 0 : index
    %c0_173 = arith.constant 0 : index
    %161 = vector.load %arg22[%c0_172, %c0_173] : memref<1x32xf32, #tpu.memory_space<vmem>>, vector<1x32xf32>
    %162 = vector.broadcast %161 : vector<1x32xf32> to vector<2x32xf32>
    %163 = arith.addf %160, %162 : vector<2x32xf32>
    %cst_174 = arith.constant 0.000000e+00 : f32
    %164 = vector.broadcast %cst_174 : f32 to vector<2x32xf32>
    %165 = arith.maximumf %163, %164 : vector<2x32xf32>
    %c0_175 = arith.constant 0 : index
    %c0_176 = arith.constant 0 : index
    %166 = vector.load %arg23[%c0_175, %c0_176] : memref<32x3xf32, #tpu.memory_space<vmem>>, vector<32x3xf32>
    %cst_177 = arith.constant dense<0.000000e+00> : vector<2x3xf32>
    %167 = tpu.matmul %165, %166, %cst_177 {dimension_numbers = #tpu.dot_dimension_numbers<[1], [0], [0], [1], [0, 0, 1, 1], [], []>} : vector<2x32xf32>, vector<32x3xf32>, vector<2x3xf32> -> vector<2x3xf32>
    %c0_178 = arith.constant 0 : index
    %c0_179 = arith.constant 0 : index
    %168 = vector.load %arg24[%c0_178, %c0_179] : memref<1x3xf32, #tpu.memory_space<vmem>>, vector<1x3xf32>
    %169 = vector.broadcast %168 : vector<1x3xf32> to vector<2x3xf32>
    %170 = arith.addf %167, %169 : vector<2x3xf32>
    %c0_180 = arith.constant 0 : index
    %c0_181 = arith.constant 0 : index
    %171 = vector.load %arg25[%c0_180, %c0_181] : memref<2x3xf32, #tpu.memory_space<vmem>>, vector<2x3xf32>
    tpu.vector_store %arg25[%c0_180, %c0_181], %170 {strides = array<i32>} : memref<2x3xf32, #tpu.memory_space<vmem>>, vector<2x3xf32>,
    return
  }
  func.func @transform_0(%arg0: i32) -> (i32, i32) {
    %c0_i32 = arith.constant 0 : i32
    %c0_i32_0 = arith.constant 0 : i32
    %c0_i32_1 = arith.constant 0 : i32
    return %c0_i32, %c0_i32_0 : i32, i32
  }
  func.func @transform_1(%arg0: i32) -> (i32, i32, i32) {
    %c0_i32 = arith.constant 0 : i32
    %c0_i32_0 = arith.constant 0 : i32
    %c0_i32_1 = arith.constant 0 : i32
    %c0_i32_2 = arith.constant 0 : i32
    return %c0_i32, %c0_i32_0, %c0_i32_1 : i32, i32, i32
  }
  func.func @transform_2(%arg0: i32) -> (i32, i32, i32) {
    %c0_i32 = arith.constant 0 : i32
    %c0_i32_0 = arith.constant 0 : i32
    %c0_i32_1 = arith.constant 0 : i32
    %c0_i32_2 = arith.constant 0 : i32
    return %c0_i32, %c0_i32_0, %c0_i32_1 : i32, i32, i32
  }
  func.func @transform_3(%arg0: i32) -> (i32, i32) {
    %c0_i32 = arith.constant 0 : i32
    %c0_i32_0 = arith.constant 0 : i32
    %c0_i32_1 = arith.constant 0 : i32
    return %c0_i32, %c0_i32_0 : i32, i32
  }
  func.func @transform_4(%arg0: i32) -> (i32, i32) {
    %c0_i32 = arith.constant 0 : i32
    %c0_i32_0 = arith.constant 0 : i32
    %c0_i32_1 = arith.constant 0 : i32
    return %c0_i32, %c0_i32_0 : i32, i32
  }
  func.func @transform_5(%arg0: i32) -> (i32, i32, i32) {
    %c0_i32 = arith.constant 0 : i32
    %c0_i32_0 = arith.constant 0 : i32
    %c0_i32_1 = arith.constant 0 : i32
    %c0_i32_2 = arith.constant 0 : i32
    return %c0_i32, %c0_i32_0, %c0_i32_1 : i32, i32, i32
  }
  func.func @transform_6(%arg0: i32) -> (i32, i32, i32) {
    %c0_i32 = arith.constant 0 : i32
    %c0_i32_0 = arith.constant 0 : i32
    %c0_i32_1 = arith.constant 0 : i32
    %c0_i32_2 = arith.constant 0 : i32
    return %c0_i32, %c0_i32_0, %c0_i32_1 : i32, i32, i32
  }
  func.func @transform_7(%arg0: i32) -> (i32, i32, i32) {
    %c0_i32 = arith.constant 0 : i32
    %c0_i32_0 = arith.constant 0 : i32
    %c0_i32_1 = arith.constant 0 : i32
    %c0_i32_2 = arith.constant 0 : i32
    return %c0_i32, %c0_i32_0, %c0_i32_1 : i32, i32, i32
  }
  func.func @transform_8(%arg0: i32) -> (i32, i32, i32) {
    %c0_i32 = arith.constant 0 : i32
    %c0_i32_0 = arith.constant 0 : i32
    %c0_i32_1 = arith.constant 0 : i32
    %c0_i32_2 = arith.constant 0 : i32
    return %c0_i32, %c0_i32_0, %c0_i32_1 : i32, i32, i32
  }
  func.func @transform_9(%arg0: i32) -> (i32, i32) {
    %c0_i32 = arith.constant 0 : i32
    %c0_i32_0 = arith.constant 0 : i32
    %c0_i32_1 = arith.constant 0 : i32
    return %c0_i32, %c0_i32_0 : i32, i32
  }
  func.func @transform_10(%arg0: i32) -> (i32, i32) {
    %c0_i32 = arith.constant 0 : i32
    %c0_i32_0 = arith.constant 0 : i32
    %c0_i32_1 = arith.constant 0 : i32
    return %c0_i32, %c0_i32_0 : i32, i32
  }
  func.func @transform_11(%arg0: i32) -> (i32, i32, i32) {
    %c0_i32 = arith.constant 0 : i32
    %c0_i32_0 = arith.constant 0 : i32
    %c0_i32_1 = arith.constant 0 : i32
    %c0_i32_2 = arith.constant 0 : i32
    return %c0_i32, %c0_i32_0, %c0_i32_1 : i32, i32, i32
  }
  func.func @transform_12(%arg0: i32) -> (i32, i32, i32) {
    %c0_i32 = arith.constant 0 : i32
    %c0_i32_0 = arith.constant 0 : i32
    %c0_i32_1 = arith.constant 0 : i32
    %c0_i32_2 = arith.constant 0 : i32
    return %c0_i32, %c0_i32_0, %c0_i32_1 : i32, i32, i32
  }
  func.func @transform_13(%arg0: i32) -> (i32, i32, i32) {
    %c0_i32 = arith.constant 0 : i32
    %c0_i32_0 = arith.constant 0 : i32
    %c0_i32_1 = arith.constant 0 : i32
    %c0_i32_2 = arith.constant 0 : i32
    return %c0_i32, %c0_i32_0, %c0_i32_1 : i32, i32, i32
  }
  func.func @transform_14(%arg0: i32) -> (i32, i32, i32) {
    %c0_i32 = arith.constant 0 : i32
    %c0_i32_0 = arith.constant 0 : i32
    %c0_i32_1 = arith.constant 0 : i32
    %c0_i32_2 = arith.constant 0 : i32
    return %c0_i32, %c0_i32_0, %c0_i32_1 : i32, i32, i32
  }
  func.func @transform_15(%arg0: i32) -> (i32, i32) {
    %c0_i32 = arith.constant 0 : i32
    %c0_i32_0 = arith.constant 0 : i32
    %c0_i32_1 = arith.constant 0 : i32
    return %c0_i32, %c0_i32_0 : i32, i32
  }
  func.func @transform_16(%arg0: i32) -> (i32, i32) {
    %c0_i32 = arith.constant 0 : i32
    %c0_i32_0 = arith.constant 0 : i32
    %c0_i32_1 = arith.constant 0 : i32
    return %c0_i32, %c0_i32_0 : i32, i32
  }
  func.func @transform_17(%arg0: i32) -> (i32, i32, i32) {
    %c0_i32 = arith.constant 0 : i32
    %c0_i32_0 = arith.constant 0 : i32
    %c0_i32_1 = arith.constant 0 : i32
    %c0_i32_2 = arith.constant 0 : i32
    return %c0_i32, %c0_i32_0, %c0_i32_1 : i32, i32, i32
  }
  func.func @transform_18(%arg0: i32) -> (i32, i32, i32) {
    %c0_i32 = arith.constant 0 : i32
    %c0_i32_0 = arith.constant 0 : i32
    %c0_i32_1 = arith.constant 0 : i32
    %c0_i32_2 = arith.constant 0 : i32
    return %c0_i32, %c0_i32_0, %c0_i32_1 : i32, i32, i32
  }
  func.func @transform_19(%arg0: i32) -> (i32, i32, i32) {
    %c0_i32 = arith.constant 0 : i32
    %c0_i32_0 = arith.constant 0 : i32
    %c0_i32_1 = arith.constant 0 : i32
    %c0_i32_2 = arith.constant 0 : i32
    return %c0_i32, %c0_i32_0, %c0_i32_1 : i32, i32, i32
  }
  func.func @transform_20(%arg0: i32) -> (i32, i32, i32) {
    %c0_i32 = arith.constant 0 : i32
    %c0_i32_0 = arith.constant 0 : i32
    %c0_i32_1 = arith.constant 0 : i32
    %c0_i32_2 = arith.constant 0 : i32
    return %c0_i32, %c0_i32_0, %c0_i32_1 : i32, i32, i32
  }
  func.func @transform_21(%arg0: i32) -> (i32, i32) {
    %c0_i32 = arith.constant 0 : i32
    %c0_i32_0 = arith.constant 0 : i32
    %c0_i32_1 = arith.constant 0 : i32
    return %c0_i32, %c0_i32_0 : i32, i32
  }
  func.func @transform_22(%arg0: i32) -> (i32, i32) {
    %c0_i32 = arith.constant 0 : i32
    %c0_i32_0 = arith.constant 0 : i32
    %c0_i32_1 = arith.constant 0 : i32
    return %c0_i32, %c0_i32_0 : i32, i32
  }
  func.func @transform_23(%arg0: i32) -> (i32, i32) {
    %c0_i32 = arith.constant 0 : i32
    %c0_i32_0 = arith.constant 0 : i32
    %c0_i32_1 = arith.constant 0 : i32
    return %c0_i32, %c0_i32_0 : i32, i32
  }
  func.func @transform_24(%arg0: i32) -> (i32, i32) {
    %c0_i32 = arith.constant 0 : i32
    %c0_i32_0 = arith.constant 0 : i32
    %c0_i32_1 = arith.constant 0 : i32
    return %c0_i32, %c0_i32_0 : i32, i32
  }
}

</mosaic_0001>

<llo_original>
// kernel: lc_clf_forward.1
$region0: #{lc_clf_forward.1}
  #allocation0 [shape = 'u32[]', space=smem, size = 0x4, offset = 0x4, fixed_abs, tag = 'smem constant byte address 0x4 - core index']
  #allocation1 [shape = 'u32[144,128]{1,0:T(1,128)}', space=vmem, size = 0x12000, scoped, tag = 'internal scratch']
  %s0 = inlined_call_operand.vmem [shape: f32[32,16], index: 0, kind: input, shape index: {}]
  %s1 = inlined_call_operand.vmem [shape: f32[2,32,32], index: 1, kind: input, shape index: {}]
  %s2 = inlined_call_operand.vmem [shape: f32[3,16,64], index: 2, kind: input, shape index: {}]
  %s3 = inlined_call_operand.hbm [shape: f32[1,64], index: 3, kind: input, shape index: {}]
  %s4 = inlined_call_operand.hbm [shape: f32[1,64], index: 4, kind: input, shape index: {}]
  %s5 = inlined_call_operand.hbm [shape: f32[2,16,32], index: 5, kind: input, shape index: {}]
  %s6 = inlined_call_operand.vmem [shape: f32[2,64,32], index: 6, kind: input, shape index: {}]
  %s7 = inlined_call_operand.hbm [shape: f32[2,16,16], index: 7, kind: input, shape index: {}]
  %s8 = inlined_call_operand.vmem [shape: f32[3,32,64], index: 8, kind: input, shape index: {}]
  %s9 = inlined_call_operand.hbm [shape: f32[1,64], index: 9, kind: input, shape index: {}]
  %s10 = inlined_call_operand.hbm [shape: f32[1,64], index: 10, kind: input, shape index: {}]
  %s11 = inlined_call_operand.hbm [shape: f32[2,8,16], index: 11, kind: input, shape index: {}]
  %s12 = inlined_call_operand.vmem [shape: f32[2,64,32], index: 12, kind: input, shape index: {}]
  %s13 = inlined_call_operand.vmem [shape: f32[4,8,8], index: 13, kind: input, shape index: {}]
  %s14 = inlined_call_operand.vmem [shape: f32[4,32,32], index: 14, kind: input, shape index: {}]
  %s15 = inlined_call_operand.hbm [shape: f32[1,32], index: 15, kind: input, shape index: {}]
  %s16 = inlined_call_operand.vmem [shape: f32[8,32], index: 16, kind: input, shape index: {}]
  %s17 = inlined_call_operand.vmem [shape: f32[2,4,8], index: 17, kind: input, shape index: {}]
  %s18 = inlined_call_operand.vmem [shape: f32[2,32,16], index: 18, kind: input, shape index: {}]
  %s19 = inlined_call_operand.vmem [shape: f32[2,2,4], index: 19, kind: input, shape index: {}]
  %s20 = inlined_call_operand.hbm [shape: f32[2,16,32], index: 20, kind: input, shape index: {}]
  %s21 = inlined_call_operand.vmem [shape: f32[1,32], index: 21, kind: input, shape index: {}]
  %s22 = inlined_call_operand.vmem [shape: f32[32,3], index: 22, kind: input, shape index: {}]
  %s23 = inlined_call_operand.vmem [shape: f32[1,3], index: 23, kind: input, shape index: {}]
  %s24 = inlined_call_operand.hbm [shape: f32[2,3], index: 24, kind: output, shape index: {}]
  %s25 = sld [smem:[#allocation0]]
  $region142: #{lc_clf_forward.1} parent=0
    _
  %s27 = ssub.s32 1, %s25
  %s28 = scalar_select 0, %s27, %s25
  $region1: #{lc_clf_forward.1} parent=0
    #allocation2 [shape = 'u8[512]{0}', space=vmem, size = 0x400, scoped, tag = 'input window, operand 3, single buffered']
    #allocation3 [shape = 's32[1]{0}', space=sflag, size = 0x4, scoped, tag = 'scoped memory for lc_clf_forward.1']
    #allocation4 [shape = 's32[1]{0}', space=sflag, size = 0x4, scoped, tag = 'scoped memory for lc_clf_forward.1']
    #allocation5 [shape = 'u8[512]{0}', space=vmem, size = 0x400, scoped, tag = 'input window, operand 4, single buffered']
    #allocation6 [shape = 's32[1]{0}', space=sflag, size = 0x4, scoped, tag = 'scoped memory for lc_clf_forward.1']
    #allocation7 [shape = 'u8[16384]{0}', space=vmem, size = 0x4000, scoped, tag = 'input window, operand 5, single buffered']
    #allocation8 [shape = 'u8[16384]{0}', space=vmem, size = 0x4000, scoped, tag = 'input window, operand 7, single buffered']
    #allocation9 [shape = 's32[1]{0}', space=sflag, size = 0x4, scoped, tag = 'scoped memory for lc_clf_forward.1']
    #allocation10 [shape = 'u8[512]{0}', space=vmem, size = 0x400, scoped, tag = 'input window, operand 9, single buffered']
    #allocation11 [shape = 'u8[512]{0}', space=vmem, size = 0x400, scoped, tag = 'input window, operand 10, single buffered']
    #allocation12 [shape = 's32[1]{0}', space=sflag, size = 0x4, scoped, tag = 'scoped memory for lc_clf_forward.1']
    #allocation13 [shape = 'u8[8192]{0}', space=vmem, size = 0x2000, scoped, tag = 'input window, operand 11, single buffered']
    #allocation14 [shape = 'u8[512]{0}', space=vmem, size = 0x400, scoped, tag = 'input window, operand 15, single buffered']
    #allocation15 [shape = 's32[1]{0}', space=sflag, size = 0x4, scoped, tag = 'scoped memory for lc_clf_forward.1']
    #allocation16 [shape = 'u8[16384]{0}', space=vmem, size = 0x4000, scoped, tag = 'input window, operand 20, single buffered']
    #allocation17 [shape = 'u8[1024]{0}', space=vmem, size = 0x400, scoped, tag = 'output window, operand 0, single buffered']
    %29 = vsyncpa [#allocation3], 0
    %30 = vsyncpa [#allocation6], 0
    %31 = vsyncpa [#allocation9], 0
    %32 = vsyncpa [#allocation12], 0
    %33 = vsyncpa [#allocation15], 0
    %34 = vsyncpa [#allocation4], 0
    // Predicated region
    $region2: #{lc_clf_forward.1} parent=1 // pred_check
      _
    $region3: #{lc_clf_forward.1} parent=1 // pred_check_branch
      %36 = sbr.rel (0) target = $region5
    $region4: #{lc_clf_forward.1} parent=1 // pred_region
      _
    $region5: #{lc_clf_forward.1} parent=1 // pred_fallthru
      _
    // Predicated region
    $region6: #{lc_clf_forward.1} parent=1 // pred_check
      _
    $region7: #{lc_clf_forward.1} parent=1 // pred_check_branch
      %38 = sbr.rel (0) target = $region9
    $region8: #{lc_clf_forward.1} parent=1 // pred_region
      _
    $region9: #{lc_clf_forward.1} parent=1 // pred_fallthru
      _
    // Predicated region
    $region10: #{lc_clf_forward.1} parent=1 // pred_check
      _
    $region11: #{lc_clf_forward.1} parent=1 // pred_check_branch
      %40 = sbr.rel (0) target = $region13
    $region12: #{lc_clf_forward.1} parent=1 // pred_region
      _
    $region13: #{lc_clf_forward.1} parent=1 // pred_fallthru
      _
    // Predicated region
    $region14: #{lc_clf_forward.1} parent=1 // pred_check
      _
    $region15: #{lc_clf_forward.1} parent=1 // pred_check_branch
      %42 = sbr.rel (0) target = $region17
    $region16: #{lc_clf_forward.1} parent=1 // pred_region
      %s44 = ssub.s32 16, 16
      %45 = vsyncadd [#allocation3], %s44
      %s47 = sshll.u32 [#allocation2], 4
      %s48 = int_to_ptr.vmem [resolvable:$true] %s47
      %50 = dma.hbm_to_vmem [thread:$0]  %s3, 16, %s48, [#allocation3]
    $region17: #{lc_clf_forward.1} parent=1 // pred_fallthru
      _
    // Predicated region
    $region18: #{lc_clf_forward.1} parent=1 // pred_check
      _
    $region19: #{lc_clf_forward.1} parent=1 // pred_check_branch
      %52 = sbr.rel (0) target = $region21
    $region20: #{lc_clf_forward.1} parent=1 // pred_region
      %s54 = ssub.s32 16, 16
      %55 = vsyncadd [#allocation6], %s54
      %s57 = sshll.u32 [#allocation5], 4
      %s58 = int_to_ptr.vmem [resolvable:$true] %s57
      %60 = dma.hbm_to_vmem [thread:$0]  %s4, 16, %s58, [#allocation6]
    $region21: #{lc_clf_forward.1} parent=1 // pred_fallthru
      _
    // Predicated region
    $region22: #{lc_clf_forward.1} parent=1 // pred_check
      _
    $region23: #{lc_clf_forward.1} parent=1 // pred_check_branch
      %62 = sbr.rel (0) target = $region25
    $region24: #{lc_clf_forward.1} parent=1 // pred_region
      %s64 = ssub.s32 512, 512
      %65 = vsyncadd [#allocation6], %s64
      %s66 = sshll.u32 [#allocation7], 4
      %s67 = int_to_ptr.vmem [resolvable:$true] %s66
      %72 = dma.hbm_to_vmem [thread:$0]  %s5, 512, %s67, [#allocation6], 128, 128, 8
    $region25: #{lc_clf_forward.1} parent=1 // pred_fallthru
      _
    // Predicated region
    $region26: #{lc_clf_forward.1} parent=1 // pred_check
      _
    $region27: #{lc_clf_forward.1} parent=1 // pred_check_branch
      %74 = sbr.rel (0) target = $region29
    $region28: #{lc_clf_forward.1} parent=1 // pred_region
      _
    $region29: #{lc_clf_forward.1} parent=1 // pred_fallthru
      _
    // Predicated region
    $region30: #{lc_clf_forward.1} parent=1 // pred_check
      _
    $region31: #{lc_clf_forward.1} parent=1 // pred_check_branch
      %76 = sbr.rel (0) target = $region33
    $region32: #{lc_clf_forward.1} parent=1 // pred_region
      %s78 = ssub.s32 512, 512
      %79 = vsyncadd [#allocation9], %s78
      %s80 = sshll.u32 [#allocation8], 4
      %s81 = int_to_ptr.vmem [resolvable:$true] %s80
      %86 = dma.hbm_to_vmem [thread:$0]  %s7, 512, %s81, [#allocation9], 128, 128, 8
    $region33: #{lc_clf_forward.1} parent=1 // pred_fallthru
      _
    // Predicated region
    $region34: #{lc_clf_forward.1} parent=1 // pred_check
      _
    $region35: #{lc_clf_forward.1} parent=1 // pred_check_branch
      %88 = sbr.rel (0) target = $region37
    $region36: #{lc_clf_forward.1} parent=1 // pred_region
      _
    $region37: #{lc_clf_forward.1} parent=1 // pred_fallthru
      _
    // Predicated region
    $region38: #{lc_clf_forward.1} parent=1 // pred_check
      _
    $region39: #{lc_clf_forward.1} parent=1 // pred_check_branch
      %90 = sbr.rel (0) target = $region41
    $region40: #{lc_clf_forward.1} parent=1 // pred_region
      %s92 = ssub.s32 16, 16
      %93 = vsyncadd [#allocation9], %s92
      %s95 = sshll.u32 [#allocation10], 4
      %s96 = int_to_ptr.vmem [resolvable:$true] %s95
      %98 = dma.hbm_to_vmem [thread:$0]  %s9, 16, %s96, [#allocation9]
    $region41: #{lc_clf_forward.1} parent=1 // pred_fallthru
      _
    // Predicated region
    $region42: #{lc_clf_forward.1} parent=1 // pred_check
      _
    $region43: #{lc_clf_forward.1} parent=1 // pred_check_branch
      %100 = sbr.rel (0) target = $region45
    $region44: #{lc_clf_forward.1} parent=1 // pred_region
      %s102 = ssub.s32 16, 16
      %103 = vsyncadd [#allocation12], %s102
      %s105 = sshll.u32 [#allocation11], 4
      %s106 = int_to_ptr.vmem [resolvable:$true] %s105
      %108 = dma.hbm_to_vmem [thread:$0]  %s10, 16, %s106, [#allocation12]
    $region45: #{lc_clf_forward.1} parent=1 // pred_fallthru
      _
    // Predicated region
    $region46: #{lc_clf_forward.1} parent=1 // pred_check
      _
    $region47: #{lc_clf_forward.1} parent=1 // pred_check_branch
      %110 = sbr.rel (0) target = $region49
    $region48: #{lc_clf_forward.1} parent=1 // pred_region
      %s112 = ssub.s32 256, 256
      %113 = vsyncadd [#allocation12], %s112
      %s114 = sshll.u32 [#allocation13], 4
      %s115 = int_to_ptr.vmem [resolvable:$true] %s114
      %120 = dma.hbm_to_vmem [thread:$0]  %s11, 256, %s115, [#allocation12], 128, 128, 8
    $region49: #{lc_clf_forward.1} parent=1 // pred_fallthru
      _
    // Predicated region
    $region50: #{lc_clf_forward.1} parent=1 // pred_check
      _
    $region51: #{lc_clf_forward.1} parent=1 // pred_check_branch
      %122 = sbr.rel (0) target = $region53
    $region52: #{lc_clf_forward.1} parent=1 // pred_region
      _
    $region53: #{lc_clf_forward.1} parent=1 // pred_fallthru
      _
    // Predicated region
    $region54: #{lc_clf_forward.1} parent=1 // pred_check
      _
    $region55: #{lc_clf_forward.1} parent=1 // pred_check_branch
      %124 = sbr.rel (0) target = $region57
    $region56: #{lc_clf_forward.1} parent=1 // pred_region
      _
    $region57: #{lc_clf_forward.1} parent=1 // pred_fallthru
      _
    // Predicated region
    $region58: #{lc_clf_forward.1} parent=1 // pred_check
      _
    $region59: #{lc_clf_forward.1} parent=1 // pred_check_branch
      %126 = sbr.rel (0) target = $region61
    $region60: #{lc_clf_forward.1} parent=1 // pred_region
      _
    $region61: #{lc_clf_forward.1} parent=1 // pred_fallthru
      _
    // Predicated region
    $region62: #{lc_clf_forward.1} parent=1 // pred_check
      _
    $region63: #{lc_clf_forward.1} parent=1 // pred_check_branch
      %128 = sbr.rel (0) target = $region65
    $region64: #{lc_clf_forward.1} parent=1 // pred_region
      %s130 = ssub.s32 16, 16
      %131 = vsyncadd [#allocation15], %s130
      %s133 = sshll.u32 [#allocation14], 4
      %s134 = int_to_ptr.vmem [resolvable:$true] %s133
      %136 = dma.hbm_to_vmem [thread:$0]  %s15, 16, %s134, [#allocation15]
    $region65: #{lc_clf_forward.1} parent=1 // pred_fallthru
      _
    // Predicated region
    $region66: #{lc_clf_forward.1} parent=1 // pred_check
      _
    $region67: #{lc_clf_forward.1} parent=1 // pred_check_branch
      %138 = sbr.rel (0) target = $region69
    $region68: #{lc_clf_forward.1} parent=1 // pred_region
      _
    $region69: #{lc_clf_forward.1} parent=1 // pred_fallthru
      _
    // Predicated region
    $region70: #{lc_clf_forward.1} parent=1 // pred_check
      _
    $region71: #{lc_clf_forward.1} parent=1 // pred_check_branch
      %140 = sbr.rel (0) target = $region73
    $region72: #{lc_clf_forward.1} parent=1 // pred_region
      _
    $region73: #{lc_clf_forward.1} parent=1 // pred_fallthru
      _
    // Predicated region
    $region74: #{lc_clf_forward.1} parent=1 // pred_check
      _
    $region75: #{lc_clf_forward.1} parent=1 // pred_check_branch
      %142 = sbr.rel (0) target = $region77
    $region76: #{lc_clf_forward.1} parent=1 // pred_region
      _
    $region77: #{lc_clf_forward.1} parent=1 // pred_fallthru
      _
    // Predicated region
    $region78: #{lc_clf_forward.1} parent=1 // pred_check
      _
    $region79: #{lc_clf_forward.1} parent=1 // pred_check_branch
      %144 = sbr.rel (0) target = $region81
    $region80: #{lc_clf_forward.1} parent=1 // pred_region
      _
    $region81: #{lc_clf_forward.1} parent=1 // pred_fallthru
      _
    // Predicated region
    $region82: #{lc_clf_forward.1} parent=1 // pred_check
      _
    $region83: #{lc_clf_forward.1} parent=1 // pred_check_branch
      %146 = sbr.rel (0) target = $region85
    $region84: #{lc_clf_forward.1} parent=1 // pred_region
      %s148 = ssub.s32 512, 512
      %149 = vsyncadd [#allocation15], %s148
      %s150 = sshll.u32 [#allocation16], 4
      %s151 = int_to_ptr.vmem [resolvable:$true] %s150
      %156 = dma.hbm_to_vmem [thread:$0]  %s20, 512, %s151, [#allocation15], 128, 128, 8
    $region85: #{lc_clf_forward.1} parent=1 // pred_fallthru
      _
    // Predicated region
    $region86: #{lc_clf_forward.1} parent=1 // pred_check
      _
    $region87: #{lc_clf_forward.1} parent=1 // pred_check_branch
      %158 = sbr.rel (0) target = $region89
    $region88: #{lc_clf_forward.1} parent=1 // pred_region
      _
    $region89: #{lc_clf_forward.1} parent=1 // pred_fallthru
      _
    // Predicated region
    $region90: #{lc_clf_forward.1} parent=1 // pred_check
      _
    $region91: #{lc_clf_forward.1} parent=1 // pred_check_branch
      %160 = sbr.rel (0) target = $region93
    $region92: #{lc_clf_forward.1} parent=1 // pred_region
      _
    $region93: #{lc_clf_forward.1} parent=1 // pred_fallthru
      _
    // Predicated region
    $region94: #{lc_clf_forward.1} parent=1 // pred_check
      _
    $region95: #{lc_clf_forward.1} parent=1 // pred_check_branch
      %162 = sbr.rel (0) target = $region97
    $region96: #{lc_clf_forward.1} parent=1 // pred_region
      _
    $region97: #{lc_clf_forward.1} parent=1 // pred_fallthru
      _
    // Predicated region
    $region98: #{lc_clf_forward.1} parent=1 // pred_check
      _
    $region99: #{lc_clf_forward.1} parent=1 // pred_check_branch
      %164 = sbr.rel (0) target = $region101
    $region100: #{lc_clf_forward.1} parent=1 // pred_region
      %165 = dma.done [#allocation3], 16
    $region101: #{lc_clf_forward.1} parent=1 // pred_fallthru
      _
    // Predicated region
    $region102: #{lc_clf_forward.1} parent=1 // pred_check
      _
    $region103: #{lc_clf_forward.1} parent=1 // pred_check_branch
      %167 = sbr.rel (0) target = $region105
    $region104: #{lc_clf_forward.1} parent=1 // pred_region
      %168 = dma.done [#allocation6], 16
    $region105: #{lc_clf_forward.1} parent=1 // pred_fallthru
      _
    // Predicated region
    $region106: #{lc_clf_forward.1} parent=1 // pred_check
      _
    $region107: #{lc_clf_forward.1} parent=1 // pred_check_branch
      %170 = sbr.rel (0) target = $region109
    $region108: #{lc_clf_forward.1} parent=1 // pred_region
      %171 = dma.done [#allocation6], 512
    $region109: #{lc_clf_forward.1} parent=1 // pred_fallthru
      _
    // Predicated region
    $region110: #{lc_clf_forward.1} parent=1 // pred_check
      _
    $region111: #{lc_clf_forward.1} parent=1 // pred_check_branch
      %173 = sbr.rel (0) target = $region113
    $region112: #{lc_clf_forward.1} parent=1 // pred_region
      %174 = dma.done [#allocation9], 512
    $region113: #{lc_clf_forward.1} parent=1 // pred_fallthru
      _
    // Predicated region
    $region114: #{lc_clf_forward.1} parent=1 // pred_check
      _
    $region115: #{lc_clf_forward.1} parent=1 // pred_check_branch
      %176 = sbr.rel (0) target = $region117
    $region116: #{lc_clf_forward.1} parent=1 // pred_region
      %177 = dma.done [#allocation9], 16
    $region117: #{lc_clf_forward.1} parent=1 // pred_fallthru
      _
    // Predicated region
    $region118: #{lc_clf_forward.1} parent=1 // pred_check
      _
    $region119: #{lc_clf_forward.1} parent=1 // pred_check_branch
      %179 = sbr.rel (0) target = $region121
    $region120: #{lc_clf_forward.1} parent=1 // pred_region
      %180 = dma.done [#allocation12], 16
    $region121: #{lc_clf_forward.1} parent=1 // pred_fallthru
      _
    // Predicated region
    $region122: #{lc_clf_forward.1} parent=1 // pred_check
      _
    $region123: #{lc_clf_forward.1} parent=1 // pred_check_branch
      %182 = sbr.rel (0) target = $region125
    $region124: #{lc_clf_forward.1} parent=1 // pred_region
      %183 = dma.done [#allocation12], 256
    $region125: #{lc_clf_forward.1} parent=1 // pred_fallthru
      _
    // Predicated region
    $region126: #{lc_clf_forward.1} parent=1 // pred_check
      _
    $region127: #{lc_clf_forward.1} parent=1 // pred_check_branch
      %185 = sbr.rel (0) target = $region129
    $region128: #{lc_clf_forward.1} parent=1 // pred_region
      %186 = dma.done [#allocation15], 16
    $region129: #{lc_clf_forward.1} parent=1 // pred_fallthru
      _
    // Predicated region
    $region130: #{lc_clf_forward.1} parent=1 // pred_check
      _
    $region131: #{lc_clf_forward.1} parent=1 // pred_check_branch
      %188 = sbr.rel (0) target = $region133
    $region132: #{lc_clf_forward.1} parent=1 // pred_region
      %189 = dma.done [#allocation15], 512
    $region133: #{lc_clf_forward.1} parent=1 // pred_fallthru
      _
    %v190 = vld [vmem:[%s0] sm:$0xff]
    %v191 = vld [vmem:[%s0 + $0x8] sm:$0xff]
    %v192 = vld [vmem:[%s0 + $0x10] sm:$0xff]
    %v193 = vld [vmem:[%s0 + $0x18] sm:$0xff]
    %s194 = scalar_lea.vmem %s2, 16
    %v195 = vld [vmem:[%s194] sm:$0xff]
    %v196 = vld [vmem:[%s194 + $0x8] sm:$0xff]
    %v197 = vld [vmem:[%s1] sm:$0xff]
    %v198 = vld [vmem:[%s1 + $0x8] sm:$0xff]
    %v199 = vld [vmem:[%s1 + $0x10] sm:$0xff]
    %v200 = vld [vmem:[%s1 + $0x18] sm:$0xff]
    %vm201 = vcmask 261120
    %v203 = vsel %vm201, %v197, 0
    %v206 = vsel %vm201, %v198, 0
    %v209 = vsel %vm201, %v199, 0
    %v212 = vsel %vm201, %v200, 0
    %214 = vmatprep.subr.mxu0 0.0
    %215 = vmatpush1.msra.mxu0 %v190
    %216 = vmatprep.subr.mxu0 0.0
    %217 = vmatpush1.msra.mxu0 %v191
    %218 = vmatprep.subr.mxu0 0.0
    %219 = vmatpush1.msra.mxu0 %v192
    %220 = vmatprep.subr.mxu0 0.0
    %221 = vmatpush1.msra.mxu0 %v193
    %222 = vmatprep.subr.mxu0 0.0
    %223 = vmatpush1.msra.mxu0 0.0
    %224 = vmatprep.subr.mxu0 0.0
    %225 = vmatpush1.msra.mxu0 0.0
    %226 = vmatprep.subr.mxu0 0.0
    %227 = vmatpush1.msra.mxu0 0.0
    %228 = vmatprep.subr.mxu0 0.0
    %229 = vmatpush1.msra.mxu0 0.0
    %230 = vmatprep.subr.mxu0 0.0
    %231 = vmatpush1.msra.mxu0 0.0
    %232 = vmatprep.subr.mxu0 0.0
    %233 = vmatpush1.msra.mxu0 0.0
    %234 = vmatprep.subr.mxu0 0.0
    %235 = vmatpush1.msra.mxu0 0.0
    %236 = vmatprep.subr.mxu0 0.0
    %237 = vmatpush1.msra.mxu0 0.0
    %238 = vmatprep.subr.mxu0 0.0
    %239 = vmatpush1.msra.mxu0 0.0
    %240 = vmatprep.subr.mxu0 0.0
    %241 = vmatpush1.msra.mxu0 0.0
    %242 = vmatprep.subr.mxu0 0.0
    %243 = vmatpush1.msra.mxu0 0.0
    %244 = vmatprep.subr.mxu0 0.0
    %245 = vmatpush1.msra.mxu0 0.0
    %246 = vmatprep.subr.mxu0 0.0
    %247 = vmatpush1.msra.mxu0 0.0
    %248 = vmatprep.subr.mxu0 0.0
    %249 = vmatpush1.msra.mxu0 0.0
    %250 = vmatprep.subr.mxu0 0.0
    %251 = vmatpush1.msra.mxu0 0.0
    %252 = vmatprep.subr.mxu0 0.0
    %253 = vmatpush1.msra.mxu0 0.0
    %254 = vmatprep.subr.mxu0 0.0
    %255 = vmatpush1.msra.mxu0 0.0
    %256 = vmatprep.subr.mxu0 0.0
    %257 = vmatpush1.msra.mxu0 0.0
    %258 = vmatprep.subr.mxu0 0.0
    %259 = vmatpush1.msra.mxu0 0.0
    %260 = vmatprep.subr.mxu0 0.0
    %261 = vmatpush1.msra.mxu0 0.0
    %262 = vmatprep.subr.mxu0 0.0
    %263 = vmatpush1.msra.mxu0 0.0
    %264 = vmatprep.subr.mxu0 0.0
    %265 = vmatpush1.msra.mxu0 0.0
    %266 = vmatprep.subr.mxu0 0.0
    %267 = vmatpush1.msra.mxu0 0.0
    %268 = vmatprep.subr.mxu0 0.0
    %269 = vmatpush1.msra.mxu0 0.0
    %270 = vmatprep.subr.mxu0 0.0
    %271 = vmatpush1.msra.mxu0 0.0
    %272 = vmatprep.subr.mxu0 0.0
    %273 = vmatpush1.msra.mxu0 0.0
    %274 = vmatprep.subr.mxu0 0.0
    %275 = vmatpush1.msra.mxu0 0.0
    %276 = vmatprep.subr.mxu0 0.0
    %277 = vmatpush1.msra.mxu0 0.0
    %278 = vmatprep.mubr.f32.mxu0 0.0
    %279 = vmatmul.mubr.f32.gmra.mrb[0].mxu0 %v203
    %v280 = vpop.f32.mrb[0].mxu0
    %v281 = vadd.f32 0.0, %v280
    %v282 = vpop.f32.mrb[0].mxu0
    %283 = vmatprep.mubr.f32.mxu0 0.0
    %284 = vmatmul.mubr.f32.gmra.mrb[0].mxu0 %v206
    %v285 = vpop.f32.mrb[0].mxu0
    %v286 = vadd.f32 0.0, %v285
    %v287 = vpop.f32.mrb[0].mxu0
    %288 = vmatprep.mubr.f32.mxu0 0.0
    %289 = vmatmul.mubr.f32.gmra.mrb[0].mxu0 %v209
    %v290 = vpop.f32.mrb[0].mxu0
    %v291 = vadd.f32 0.0, %v290
    %v292 = vpop.f32.mrb[0].mxu0
    %293 = vmatprep.mubr.f32.mxu0 0.0
    %294 = vmatmul.mubr.f32.gmra.mrb[0].mxu0 %v212
    %v295 = vpop.f32.mrb[0].mxu0
    %v296 = vadd.f32 0.0, %v295
    %v297 = vpop.f32.mrb[0].mxu0
    %298 = vdwg.mxu0
    %v299 = vld [vmem:[%s2] sm:$0xff]
    %v300 = vld [vmem:[%s2 + $0x8] sm:$0xff]
    %vm301 = vcmask 130048
    %v303 = vsel %vm301, %v281, 0
    %v306 = vsel %vm301, %v286, 0
    %v309 = vsel %vm301, %v291, 0
    %v312 = vsel %vm301, %v296, 0
    %314 = vmatprep.subr.mxu0 0.0
    %315 = vmatpush1.msra.mxu0 %v299
    %316 = vmatprep.subr.mxu0 0.0
    %317 = vmatpush1.msra.mxu0 %v300
    %318 = vmatprep.subr.mxu0 0.0
    %319 = vmatpush1.msra.mxu0 0.0
    %320 = vmatprep.subr.mxu0 0.0
    %321 = vmatpush1.msra.mxu0 0.0
    %322 = vmatprep.subr.mxu0 0.0
    %323 = vmatpush1.msra.mxu0 0.0
    %324 = vmatprep.subr.mxu0 0.0
    %325 = vmatpush1.msra.mxu0 0.0
    %326 = vmatprep.subr.mxu0 0.0
    %327 = vmatpush1.msra.mxu0 0.0
    %328 = vmatprep.subr.mxu0 0.0
    %329 = vmatpush1.msra.mxu0 0.0
    %330 = vmatprep.subr.mxu0 0.0
    %331 = vmatpush1.msra.mxu0 0.0
    %332 = vmatprep.subr.mxu0 0.0
    %333 = vmatpush1.msra.mxu0 0.0
    %334 = vmatprep.subr.mxu0 0.0
    %335 = vmatpush1.msra.mxu0 0.0
    %336 = vmatprep.subr.mxu0 0.0
    %337 = vmatpush1.msra.mxu0 0.0
    %338 = vmatprep.subr.mxu0 0.0
    %339 = vmatpush1.msra.mxu0 0.0
    %340 = vmatprep.subr.mxu0 0.0
    %341 = vmatpush1.msra.mxu0 0.0
    %342 = vmatprep.subr.mxu0 0.0
    %343 = vmatpush1.msra.mxu0 0.0
    %344 = vmatprep.subr.mxu0 0.0
    %345 = vmatpush1.msra.mxu0 0.0
    %346 = vmatprep.subr.mxu0 0.0
    %347 = vmatpush1.msra.mxu0 0.0
    %348 = vmatprep.subr.mxu0 0.0
    %349 = vmatpush1.msra.mxu0 0.0
    %350 = vmatprep.subr.mxu0 0.0
    %351 = vmatpush1.msra.mxu0 0.0
    %352 = vmatprep.subr.mxu0 0.0
    %353 = vmatpush1.msra.mxu0 0.0
    %354 = vmatprep.subr.mxu0 0.0
    %355 = vmatpush1.msra.mxu0 0.0
    %356 = vmatprep.subr.mxu0 0.0
    %357 = vmatpush1.msra.mxu0 0.0
    %358 = vmatprep.subr.mxu0 0.0
    %359 = vmatpush1.msra.mxu0 0.0
    %360 = vmatprep.subr.mxu0 0.0
    %361 = vmatpush1.msra.mxu0 0.0
    %362 = vmatprep.subr.mxu0 0.0
    %363 = vmatpush1.msra.mxu0 0.0
    %364 = vmatprep.subr.mxu0 0.0
    %365 = vmatpush1.msra.mxu0 0.0
    %366 = vmatprep.subr.mxu0 0.0
    %367 = vmatpush1.msra.mxu0 0.0
    %368 = vmatprep.subr.mxu0 0.0
    %369 = vmatpush1.msra.mxu0 0.0
    %370 = vmatprep.subr.mxu0 0.0
    %371 = vmatpush1.msra.mxu0 0.0
    %372 = vmatprep.subr.mxu0 0.0
    %373 = vmatpush1.msra.mxu0 0.0
    %374 = vmatprep.subr.mxu0 0.0
    %375 = vmatpush1.msra.mxu0 0.0
    %376 = vmatprep.subr.mxu0 0.0
    %377 = vmatpush1.msra.mxu0 0.0
    %378 = vmatprep.mubr.f32.mxu0 0.0
    %379 = vmatmul.mubr.f32.gmra.mrb[0].mxu0 %v303
    %v380 = vpop.f32.mrb[0].mxu0
    %v381 = vadd.f32 0.0, %v380
    %v382 = vpop.f32.mrb[0].mxu0
    %383 = vmatprep.mubr.f32.mxu0 0.0
    %384 = vmatmul.mubr.f32.gmra.mrb[0].mxu0 %v306
    %v385 = vpop.f32.mrb[0].mxu0
    %v386 = vadd.f32 0.0, %v385
    %v387 = vpop.f32.mrb[0].mxu0
    %388 = vmatprep.mubr.f32.mxu0 0.0
    %389 = vmatmul.mubr.f32.gmra.mrb[0].mxu0 %v309
    %v390 = vpop.f32.mrb[0].mxu0
    %v391 = vadd.f32 0.0, %v390
    %v392 = vpop.f32.mrb[0].mxu0
    %393 = vmatprep.mubr.f32.mxu0 0.0
    %394 = vmatmul.mubr.f32.gmra.mrb[0].mxu0 %v312
    %v395 = vpop.f32.mrb[0].mxu0
    %v396 = vadd.f32 0.0, %v395
    %v397 = vpop.f32.mrb[0].mxu0
    %398 = vdwg.mxu0
    %v400 = vsel %vm301, %v190, 0
    %v403 = vsel %vm301, %v191, 0
    %v406 = vsel %vm301, %v192, 0
    %v409 = vsel %vm301, %v193, 0
    %411 = vmatprep.subr.mxu0 0.0
    %412 = vmatpush1.msra.mxu0 %v195
    %413 = vmatprep.subr.mxu0 0.0
    %414 = vmatpush1.msra.mxu0 %v196
    %415 = vmatprep.subr.mxu0 0.0
    %416 = vmatpush1.msra.mxu0 0.0
    %417 = vmatprep.subr.mxu0 0.0
    %418 = vmatpush1.msra.mxu0 0.0
    %419 = vmatprep.subr.mxu0 0.0
    %420 = vmatpush1.msra.mxu0 0.0
    %421 = vmatprep.subr.mxu0 0.0
    %422 = vmatpush1.msra.mxu0 0.0
    %423 = vmatprep.subr.mxu0 0.0
    %424 = vmatpush1.msra.mxu0 0.0
    %425 = vmatprep.subr.mxu0 0.0
    %426 = vmatpush1.msra.mxu0 0.0
    %427 = vmatprep.subr.mxu0 0.0
    %428 = vmatpush1.msra.mxu0 0.0
    %429 = vmatprep.subr.mxu0 0.0
    %430 = vmatpush1.msra.mxu0 0.0
    %431 = vmatprep.subr.mxu0 0.0
    %432 = vmatpush1.msra.mxu0 0.0
    %433 = vmatprep.subr.mxu0 0.0
    %434 = vmatpush1.msra.mxu0 0.0
    %435 = vmatprep.subr.mxu0 0.0
    %436 = vmatpush1.msra.mxu0 0.0
    %437 = vmatprep.subr.mxu0 0.0
    %438 = vmatpush1.msra.mxu0 0.0
    %439 = vmatprep.subr.mxu0 0.0
    %440 = vmatpush1.msra.mxu0 0.0
    %441 = vmatprep.subr.mxu0 0.0
    %442 = vmatpush1.msra.mxu0 0.0
    %443 = vmatprep.subr.mxu0 0.0
    %444 = vmatpush1.msra.mxu0 0.0
    %445 = vmatprep.subr.mxu0 0.0
    %446 = vmatpush1.msra.mxu0 0.0
    %447 = vmatprep.subr.mxu0 0.0
    %448 = vmatpush1.msra.mxu0 0.0
    %449 = vmatprep.subr.mxu0 0.0
    %450 = vmatpush1.msra.mxu0 0.0
    %451 = vmatprep.subr.mxu0 0.0
    %452 = vmatpush1.msra.mxu0 0.0
    %453 = vmatprep.subr.mxu0 0.0
    %454 = vmatpush1.msra.mxu0 0.0
    %455 = vmatprep.subr.mxu0 0.0
    %456 = vmatpush1.msra.mxu0 0.0
    %457 = vmatprep.subr.mxu0 0.0
    %458 = vmatpush1.msra.mxu0 0.0
    %459 = vmatprep.subr.mxu0 0.0
    %460 = vmatpush1.msra.mxu0 0.0
    %461 = vmatprep.subr.mxu0 0.0
    %462 = vmatpush1.msra.mxu0 0.0
    %463 = vmatprep.subr.mxu0 0.0
    %464 = vmatpush1.msra.mxu0 0.0
    %465 = vmatprep.subr.mxu0 0.0
    %466 = vmatpush1.msra.mxu0 0.0
    %467 = vmatprep.subr.mxu0 0.0
    %468 = vmatpush1.msra.mxu0 0.0
    %469 = vmatprep.subr.mxu0 0.0
    %470 = vmatpush1.msra.mxu0 0.0
    %471 = vmatprep.subr.mxu0 0.0
    %472 = vmatpush1.msra.mxu0 0.0
    %473 = vmatprep.subr.mxu0 0.0
    %474 = vmatpush1.msra.mxu0 0.0
    %475 = vmatprep.mubr.f32.mxu0 0.0
    %476 = vmatmul.mubr.f32.gmra.mrb[0].mxu0 %v400
    %v477 = vpop.f32.mrb[0].mxu0
    %v478 = vadd.f32 %v381, %v477
    %v479 = vpop.f32.mrb[0].mxu0
    %480 = vmatprep.mubr.f32.mxu0 0.0
    %481 = vmatmul.mubr.f32.gmra.mrb[0].mxu0 %v403
    %v482 = vpop.f32.mrb[0].mxu0
    %v483 = vadd.f32 %v386, %v482
    %v484 = vpop.f32.mrb[0].mxu0
    %485 = vmatprep.mubr.f32.mxu0 0.0
    %486 = vmatmul.mubr.f32.gmra.mrb[0].mxu0 %v406
    %v487 = vpop.f32.mrb[0].mxu0
    %v488 = vadd.f32 %v391, %v487
    %v489 = vpop.f32.mrb[0].mxu0
    %490 = vmatprep.mubr.f32.mxu0 0.0
    %491 = vmatmul.mubr.f32.gmra.mrb[0].mxu0 %v409
    %v492 = vpop.f32.mrb[0].mxu0
    %v493 = vadd.f32 %v396, %v492
    %v494 = vpop.f32.mrb[0].mxu0
    %495 = vdwg.mxu0
    %s496 = scalar_lea.vmem %s1, 32
    %v497 = vld [vmem:[%s496] sm:$0xff]
    %v498 = vld [vmem:[%s496 + $0x8] sm:$0xff]
    %v499 = vld [vmem:[%s496 + $0x10] sm:$0xff]
    %v500 = vld [vmem:[%s496 + $0x18] sm:$0xff]
    %v502 = vsel %vm201, %v497, 0
    %v505 = vsel %vm201, %v498, 0
    %v508 = vsel %vm201, %v499, 0
    %v511 = vsel %vm201, %v500, 0
    %513 = vmatprep.subr.mxu0 0.0
    %514 = vmatpush1.msra.mxu0 %v190
    %515 = vmatprep.subr.mxu0 0.0
    %516 = vmatpush1.msra.mxu0 %v191
    %517 = vmatprep.subr.mxu0 0.0
    %518 = vmatpush1.msra.mxu0 %v192
    %519 = vmatprep.subr.mxu0 0.0
    %520 = vmatpush1.msra.mxu0 %v193
    %521 = vmatprep.subr.mxu0 0.0
    %522 = vmatpush1.msra.mxu0 0.0
    %523 = vmatprep.subr.mxu0 0.0
    %524 = vmatpush1.msra.mxu0 0.0
    %525 = vmatprep.subr.mxu0 0.0
    %526 = vmatpush1.msra.mxu0 0.0
    %527 = vmatprep.subr.mxu0 0.0
    %528 = vmatpush1.msra.mxu0 0.0
    %529 = vmatprep.subr.mxu0 0.0
    %530 = vmatpush1.msra.mxu0 0.0
    %531 = vmatprep.subr.mxu0 0.0
    %532 = vmatpush1.msra.mxu0 0.0
    %533 = vmatprep.subr.mxu0 0.0
    %534 = vmatpush1.msra.mxu0 0.0
    %535 = vmatprep.subr.mxu0 0.0
    %536 = vmatpush1.msra.mxu0 0.0
    %537 = vmatprep.subr.mxu0 0.0
    %538 = vmatpush1.msra.mxu0 0.0
    %539 = vmatprep.subr.mxu0 0.0
    %540 = vmatpush1.msra.mxu0 0.0
    %541 = vmatprep.subr.mxu0 0.0
    %542 = vmatpush1.msra.mxu0 0.0
    %543 = vmatprep.subr.mxu0 0.0
    %544 = vmatpush1.msra.mxu0 0.0
    %545 = vmatprep.subr.mxu0 0.0
    %546 = vmatpush1.msra.mxu0 0.0
    %547 = vmatprep.subr.mxu0 0.0
    %548 = vmatpush1.msra.mxu0 0.0
    %549 = vmatprep.subr.mxu0 0.0
    %550 = vmatpush1.msra.mxu0 0.0
    %551 = vmatprep.subr.mxu0 0.0
    %552 = vmatpush1.msra.mxu0 0.0
    %553 = vmatprep.subr.mxu0 0.0
    %554 = vmatpush1.msra.mxu0 0.0
    %555 = vmatprep.subr.mxu0 0.0
    %556 = vmatpush1.msra.mxu0 0.0
    %557 = vmatprep.subr.mxu0 0.0
    %558 = vmatpush1.msra.mxu0 0.0
    %559 = vmatprep.subr.mxu0 0.0
    %560 = vmatpush1.msra.mxu0 0.0
    %561 = vmatprep.subr.mxu0 0.0
    %562 = vmatpush1.msra.mxu0 0.0
    %563 = vmatprep.subr.mxu0 0.0
    %564 = vmatpush1.msra.mxu0 0.0
    %565 = vmatprep.subr.mxu0 0.0
    %566 = vmatpush1.msra.mxu0 0.0
    %567 = vmatprep.subr.mxu0 0.0
    %568 = vmatpush1.msra.mxu0 0.0
    %569 = vmatprep.subr.mxu0 0.0
    %570 = vmatpush1.msra.mxu0 0.0
    %571 = vmatprep.subr.mxu0 0.0
    %572 = vmatpush1.msra.mxu0 0.0
    %573 = vmatprep.subr.mxu0 0.0
    %574 = vmatpush1.msra.mxu0 0.0
    %575 = vmatprep.subr.mxu0 0.0
    %576 = vmatpush1.msra.mxu0 0.0
    %577 = vmatprep.mubr.f32.mxu0 0.0
    %578 = vmatmul.mubr.f32.gmra.mrb[0].mxu0 %v502
    %v579 = vpop.f32.mrb[0].mxu0
    %v580 = vadd.f32 0.0, %v579
    %v581 = vpop.f32.mrb[0].mxu0
    %582 = vmatprep.mubr.f32.mxu0 0.0
    %583 = vmatmul.mubr.f32.gmra.mrb[0].mxu0 %v505
    %v584 = vpop.f32.mrb[0].mxu0
    %v585 = vadd.f32 0.0, %v584
    %v586 = vpop.f32.mrb[0].mxu0
    %587 = vmatprep.mubr.f32.mxu0 0.0
    %588 = vmatmul.mubr.f32.gmra.mrb[0].mxu0 %v508
    %v589 = vpop.f32.mrb[0].mxu0
    %v590 = vadd.f32 0.0, %v589
    %v591 = vpop.f32.mrb[0].mxu0
    %592 = vmatprep.mubr.f32.mxu0 0.0
    %593 = vmatmul.mubr.f32.gmra.mrb[0].mxu0 %v511
    %v594 = vpop.f32.mrb[0].mxu0
    %v595 = vadd.f32 0.0, %v594
    %v596 = vpop.f32.mrb[0].mxu0
    %597 = vdwg.mxu0
    %s598 = scalar_lea.vmem %s2, 32
    %v599 = vld [vmem:[%s598] sm:$0xff]
    %v600 = vld [vmem:[%s598 + $0x8] sm:$0xff]
    %v602 = vsel %vm301, %v580, 0
    %v605 = vsel %vm301, %v585, 0
    %v608 = vsel %vm301, %v590, 0
    %v611 = vsel %vm301, %v595, 0
    %613 = vmatprep.subr.mxu0 0.0
    %614 = vmatpush1.msra.mxu0 %v599
    %615 = vmatprep.subr.mxu0 0.0
    %616 = vmatpush1.msra.mxu0 %v600
    %617 = vmatprep.subr.mxu0 0.0
    %618 = vmatpush1.msra.mxu0 0.0
    %619 = vmatprep.subr.mxu0 0.0
    %620 = vmatpush1.msra.mxu0 0.0
    %621 = vmatprep.subr.mxu0 0.0
    %622 = vmatpush1.msra.mxu0 0.0
    %623 = vmatprep.subr.mxu0 0.0
    %624 = vmatpush1.msra.mxu0 0.0
    %625 = vmatprep.subr.mxu0 0.0
    %626 = vmatpush1.msra.mxu0 0.0
    %627 = vmatprep.subr.mxu0 0.0
    %628 = vmatpush1.msra.mxu0 0.0
    %629 = vmatprep.subr.mxu0 0.0
    %630 = vmatpush1.msra.mxu0 0.0
    %631 = vmatprep.subr.mxu0 0.0
    %632 = vmatpush1.msra.mxu0 0.0
    %633 = vmatprep.subr.mxu0 0.0
    %634 = vmatpush1.msra.mxu0 0.0
    %635 = vmatprep.subr.mxu0 0.0
    %636 = vmatpush1.msra.mxu0 0.0
    %637 = vmatprep.subr.mxu0 0.0
    %638 = vmatpush1.msra.mxu0 0.0
    %639 = vmatprep.subr.mxu0 0.0
    %640 = vmatpush1.msra.mxu0 0.0
    %641 = vmatprep.subr.mxu0 0.0
    %642 = vmatpush1.msra.mxu0 0.0
    %643 = vmatprep.subr.mxu0 0.0
    %644 = vmatpush1.msra.mxu0 0.0
    %645 = vmatprep.subr.mxu0 0.0
    %646 = vmatpush1.msra.mxu0 0.0
    %647 = vmatprep.subr.mxu0 0.0
    %648 = vmatpush1.msra.mxu0 0.0
    %649 = vmatprep.subr.mxu0 0.0
    %650 = vmatpush1.msra.mxu0 0.0
    %651 = vmatprep.subr.mxu0 0.0
    %652 = vmatpush1.msra.mxu0 0.0
    %653 = vmatprep.subr.mxu0 0.0
    %654 = vmatpush1.msra.mxu0 0.0
    %655 = vmatprep.subr.mxu0 0.0
    %656 = vmatpush1.msra.mxu0 0.0
    %657 = vmatprep.subr.mxu0 0.0
    %658 = vmatpush1.msra.mxu0 0.0
    %659 = vmatprep.subr.mxu0 0.0
    %660 = vmatpush1.msra.mxu0 0.0
    %661 = vmatprep.subr.mxu0 0.0
    %662 = vmatpush1.msra.mxu0 0.0
    %663 = vmatprep.subr.mxu0 0.0
    %664 = vmatpush1.msra.mxu0 0.0
    %665 = vmatprep.subr.mxu0 0.0
    %666 = vmatpush1.msra.mxu0 0.0
    %667 = vmatprep.subr.mxu0 0.0
    %668 = vmatpush1.msra.mxu0 0.0
    %669 = vmatprep.subr.mxu0 0.0
    %670 = vmatpush1.msra.mxu0 0.0
    %671 = vmatprep.subr.mxu0 0.0
    %672 = vmatpush1.msra.mxu0 0.0
    %673 = vmatprep.subr.mxu0 0.0
    %674 = vmatpush1.msra.mxu0 0.0
    %675 = vmatprep.subr.mxu0 0.0
    %676 = vmatpush1.msra.mxu0 0.0
    %677 = vmatprep.mubr.f32.mxu0 0.0
    %678 = vmatmul.mubr.f32.gmra.mrb[0].mxu0 %v602
    %v679 = vpop.f32.mrb[0].mxu0
    %v680 = vadd.f32 0.0, %v679
    %v681 = vpop.f32.mrb[0].mxu0
    %682 = vmatprep.mubr.f32.mxu0 0.0
    %683 = vmatmul.mubr.f32.gmra.mrb[0].mxu0 %v605
    %v684 = vpop.f32.mrb[0].mxu0
    %v685 = vadd.f32 0.0, %v684
    %v686 = vpop.f32.mrb[0].mxu0
    %687 = vmatprep.mubr.f32.mxu0 0.0
    %688 = vmatmul.mubr.f32.gmra.mrb[0].mxu0 %v608
    %v689 = vpop.f32.mrb[0].mxu0
    %v690 = vadd.f32 0.0, %v689
    %v691 = vpop.f32.mrb[0].mxu0
    %692 = vmatprep.mubr.f32.mxu0 0.0
    %693 = vmatmul.mubr.f32.gmra.mrb[0].mxu0 %v611
    %v694 = vpop.f32.mrb[0].mxu0
    %v695 = vadd.f32 0.0, %v694
    %v696 = vpop.f32.mrb[0].mxu0
    %697 = vdwg.mxu0
    %v698 = vadd.f32 %v478, %v680
    %v699 = vadd.f32 %v483, %v685
    %v700 = vadd.f32 %v488, %v690
    %v701 = vadd.f32 %v493, %v695
    %v702 = vld [vmem:[#allocation2] sm:$0x1]
    %v704 = vlaneseq
    %v705 = vshrl.u32 %v704, 7
    %v706 = vsub.s32 0, %v705
    %v707 = vrot.slane %v702, %v706
    %v709 = vmul.f32 %v698, %v707
    %v710 = vmul.f32 %v699, %v707
    %v711 = vmul.f32 %v700, %v707
    %v712 = vmul.f32 %v701, %v707
    %v713 = vld [vmem:[#allocation5] sm:$0x1]
    %v715 = vlaneseq
    %v716 = vshrl.u32 %v715, 7
    %v717 = vsub.s32 0, %v716
    %v718 = vrot.slane %v713, %v717
    %v720 = vadd.f32 %v709, %v718
    %v721 = vadd.f32 %v710, %v718
    %v722 = vadd.f32 %v711, %v718
    %v723 = vadd.f32 %v712, %v718
    %v724 = vmax.f32 %v720, 0.0
    %v725 = vmax.f32 %v721, 0.0
    %v726 = vmax.f32 %v722, 0.0
    %v727 = vmax.f32 %v723, 0.0
    %v728 = vld [vmem:[#allocation7] sm:$0xff]
    %v729 = vld [vmem:[#allocation7 + $0x8] sm:$0xff]
    %v731 = vsel %vm201, %v728, 0
    %v734 = vsel %vm201, %v729, 0
    %736 = vmatprep.subr.mxu0 0.0
    %737 = vmatpush1.msra.mxu0 %v724
    %738 = vmatprep.subr.mxu0 0.0
    %739 = vmatpush1.msra.mxu0 %v725
    %740 = vmatprep.subr.mxu0 0.0
    %741 = vmatpush1.msra.mxu0 %v726
    %742 = vmatprep.subr.mxu0 0.0
    %743 = vmatpush1.msra.mxu0 %v727
    %744 = vmatprep.subr.mxu0 0.0
    %745 = vmatpush1.msra.mxu0 0.0
    %746 = vmatprep.subr.mxu0 0.0
    %747 = vmatpush1.msra.mxu0 0.0
    %748 = vmatprep.subr.mxu0 0.0
    %749 = vmatpush1.msra.mxu0 0.0
    %750 = vmatprep.subr.mxu0 0.0
    %751 = vmatpush1.msra.mxu0 0.0
    %752 = vmatprep.subr.mxu0 0.0
    %753 = vmatpush1.msra.mxu0 0.0
    %754 = vmatprep.subr.mxu0 0.0
    %755 = vmatpush1.msra.mxu0 0.0
    %756 = vmatprep.subr.mxu0 0.0
    %757 = vmatpush1.msra.mxu0 0.0
    %758 = vmatprep.subr.mxu0 0.0
    %759 = vmatpush1.msra.mxu0 0.0
    %760 = vmatprep.subr.mxu0 0.0
    %761 = vmatpush1.msra.mxu0 0.0
    %762 = vmatprep.subr.mxu0 0.0
    %763 = vmatpush1.msra.mxu0 0.0
    %764 = vmatprep.subr.mxu0 0.0
    %765 = vmatpush1.msra.mxu0 0.0
    %766 = vmatprep.subr.mxu0 0.0
    %767 = vmatpush1.msra.mxu0 0.0
    %768 = vmatprep.subr.mxu0 0.0
    %769 = vmatpush1.msra.mxu0 0.0
    %770 = vmatprep.subr.mxu0 0.0
    %771 = vmatpush1.msra.mxu0 0.0
    %772 = vmatprep.subr.mxu0 0.0
    %773 = vmatpush1.msra.mxu0 0.0
    %774 = vmatprep.subr.mxu0 0.0
    %775 = vmatpush1.msra.mxu0 0.0
    %776 = vmatprep.subr.mxu0 0.0
    %777 = vmatpush1.msra.mxu0 0.0
    %778 = vmatprep.subr.mxu0 0.0
    %779 = vmatpush1.msra.mxu0 0.0
    %780 = vmatprep.subr.mxu0 0.0
    %781 = vmatpush1.msra.mxu0 0.0
    %782 = vmatprep.subr.mxu0 0.0
    %783 = vmatpush1.msra.mxu0 0.0
    %784 = vmatprep.subr.mxu0 0.0
    %785 = vmatpush1.msra.mxu0 0.0
    %786 = vmatprep.subr.mxu0 0.0
    %787 = vmatpush1.msra.mxu0 0.0
    %788 = vmatprep.subr.mxu0 0.0
    %789 = vmatpush1.msra.mxu0 0.0
    %790 = vmatprep.subr.mxu0 0.0
    %791 = vmatpush1.msra.mxu0 0.0
    %792 = vmatprep.subr.mxu0 0.0
    %793 = vmatpush1.msra.mxu0 0.0
    %794 = vmatprep.subr.mxu0 0.0
    %795 = vmatpush1.msra.mxu0 0.0
    %796 = vmatprep.subr.mxu0 0.0
    %797 = vmatpush1.msra.mxu0 0.0
    %798 = vmatprep.subr.mxu0 0.0
    %799 = vmatpush1.msra.mxu0 0.0
    %800 = vmatprep.mubr.f32.mxu0 0.0
    %801 = vmatmul.mubr.f32.gmra.mrb[0].mxu0 %v731
    %v802 = vpop.f32.mrb[0].mxu0
    %v803 = vadd.f32 0.0, %v802
    %v804 = vpop.f32.mrb[0].mxu0
    %805 = vmatprep.mubr.f32.mxu0 0.0
    %806 = vmatmul.mubr.f32.gmra.mrb[0].mxu0 %v734
    %v807 = vpop.f32.mrb[0].mxu0
    %v808 = vadd.f32 0.0, %v807
    %v809 = vpop.f32.mrb[0].mxu0
    %810 = vdwg.mxu0
    %s811 = scalar_lea.vmem [#allocation7], 16
    %v812 = vld [vmem:[%s811] sm:$0xff]
    %v813 = vld [vmem:[%s811 + $0x8] sm:$0xff]
    %v815 = vsel %vm201, %v812, 0
    %v818 = vsel %vm201, %v813, 0
    %820 = vmatprep.subr.mxu0 0.0
    %821 = vmatpush1.msra.mxu0 %v724
    %822 = vmatprep.subr.mxu0 0.0
    %823 = vmatpush1.msra.mxu0 %v725
    %824 = vmatprep.subr.mxu0 0.0
    %825 = vmatpush1.msra.mxu0 %v726
    %826 = vmatprep.subr.mxu0 0.0
    %827 = vmatpush1.msra.mxu0 %v727
    %828 = vmatprep.subr.mxu0 0.0
    %829 = vmatpush1.msra.mxu0 0.0
    %830 = vmatprep.subr.mxu0 0.0
    %831 = vmatpush1.msra.mxu0 0.0
    %832 = vmatprep.subr.mxu0 0.0
    %833 = vmatpush1.msra.mxu0 0.0
    %834 = vmatprep.subr.mxu0 0.0
    %835 = vmatpush1.msra.mxu0 0.0
    %836 = vmatprep.subr.mxu0 0.0
    %837 = vmatpush1.msra.mxu0 0.0
    %838 = vmatprep.subr.mxu0 0.0
    %839 = vmatpush1.msra.mxu0 0.0
    %840 = vmatprep.subr.mxu0 0.0
    %841 = vmatpush1.msra.mxu0 0.0
    %842 = vmatprep.subr.mxu0 0.0
    %843 = vmatpush1.msra.mxu0 0.0
    %844 = vmatprep.subr.mxu0 0.0
    %845 = vmatpush1.msra.mxu0 0.0
    %846 = vmatprep.subr.mxu0 0.0
    %847 = vmatpush1.msra.mxu0 0.0
    %848 = vmatprep.subr.mxu0 0.0
    %849 = vmatpush1.msra.mxu0 0.0
    %850 = vmatprep.subr.mxu0 0.0
    %851 = vmatpush1.msra.mxu0 0.0
    %852 = vmatprep.subr.mxu0 0.0
    %853 = vmatpush1.msra.mxu0 0.0
    %854 = vmatprep.subr.mxu0 0.0
    %855 = vmatpush1.msra.mxu0 0.0
    %856 = vmatprep.subr.mxu0 0.0
    %857 = vmatpush1.msra.mxu0 0.0
    %858 = vmatprep.subr.mxu0 0.0
    %859 = vmatpush1.msra.mxu0 0.0
    %860 = vmatprep.subr.mxu0 0.0
    %861 = vmatpush1.msra.mxu0 0.0
    %862 = vmatprep.subr.mxu0 0.0
    %863 = vmatpush1.msra.mxu0 0.0
    %864 = vmatprep.subr.mxu0 0.0
    %865 = vmatpush1.msra.mxu0 0.0
    %866 = vmatprep.subr.mxu0 0.0
    %867 = vmatpush1.msra.mxu0 0.0
    %868 = vmatprep.subr.mxu0 0.0
    %869 = vmatpush1.msra.mxu0 0.0
    %870 = vmatprep.subr.mxu0 0.0
    %871 = vmatpush1.msra.mxu0 0.0
    %872 = vmatprep.subr.mxu0 0.0
    %873 = vmatpush1.msra.mxu0 0.0
    %874 = vmatprep.subr.mxu0 0.0
    %875 = vmatpush1.msra.mxu0 0.0
    %876 = vmatprep.subr.mxu0 0.0
    %877 = vmatpush1.msra.mxu0 0.0
    %878 = vmatprep.subr.mxu0 0.0
    %879 = vmatpush1.msra.mxu0 0.0
    %880 = vmatprep.subr.mxu0 0.0
    %881 = vmatpush1.msra.mxu0 0.0
    %882 = vmatprep.subr.mxu0 0.0
    %883 = vmatpush1.msra.mxu0 0.0
    %884 = vmatprep.mubr.f32.mxu0 0.0
    %885 = vmatmul.mubr.f32.gmra.mrb[0].mxu0 %v815
    %v886 = vpop.f32.mrb[0].mxu0
    %v887 = vadd.f32 0.0, %v886
    %v888 = vpop.f32.mrb[0].mxu0
    %889 = vmatprep.mubr.f32.mxu0 0.0
    %890 = vmatmul.mubr.f32.gmra.mrb[0].mxu0 %v818
    %v891 = vpop.f32.mrb[0].mxu0
    %v892 = vadd.f32 0.0, %v891
    %v893 = vpop.f32.mrb[0].mxu0
    %894 = vdwg.mxu0
    %v895 = vld [vmem:[%s6] sm:$0xff]
    %v896 = vld [vmem:[%s6 + $0x8] sm:$0xff]
    %v897 = vld [vmem:[%s6 + $0x10] sm:$0xff]
    %v898 = vld [vmem:[%s6 + $0x18] sm:$0xff]
    %v899 = vld [vmem:[%s6 + $0x20] sm:$0xff]
    %v900 = vld [vmem:[%s6 + $0x28] sm:$0xff]
    %v901 = vld [vmem:[%s6 + $0x30] sm:$0xff]
    %v902 = vld [vmem:[%s6 + $0x38] sm:$0xff]
    %vm903 = vcmask 523264
    %v905 = vsel %vm903, %v803, 0
    %v908 = vsel %vm903, %v808, 0
    %910 = vmatprep.subr.mxu0 0.0
    %911 = vmatpush1.msra.mxu0 %v895
    %912 = vmatprep.subr.mxu0 0.0
    %913 = vmatpush1.msra.mxu0 %v896
    %914 = vmatprep.subr.mxu0 0.0
    %915 = vmatpush1.msra.mxu0 %v897
    %916 = vmatprep.subr.mxu0 0.0
    %917 = vmatpush1.msra.mxu0 %v898
    %918 = vmatprep.subr.mxu0 0.0
    %919 = vmatpush1.msra.mxu0 %v899
    %920 = vmatprep.subr.mxu0 0.0
    %921 = vmatpush1.msra.mxu0 %v900
    %922 = vmatprep.subr.mxu0 0.0
    %923 = vmatpush1.msra.mxu0 %v901
    %924 = vmatprep.subr.mxu0 0.0
    %925 = vmatpush1.msra.mxu0 %v902
    %926 = vmatprep.subr.mxu0 0.0
    %927 = vmatpush1.msra.mxu0 0.0
    %928 = vmatprep.subr.mxu0 0.0
    %929 = vmatpush1.msra.mxu0 0.0
    %930 = vmatprep.subr.mxu0 0.0
    %931 = vmatpush1.msra.mxu0 0.0
    %932 = vmatprep.subr.mxu0 0.0
    %933 = vmatpush1.msra.mxu0 0.0
    %934 = vmatprep.subr.mxu0 0.0
    %935 = vmatpush1.msra.mxu0 0.0
    %936 = vmatprep.subr.mxu0 0.0
    %937 = vmatpush1.msra.mxu0 0.0
    %938 = vmatprep.subr.mxu0 0.0
    %939 = vmatpush1.msra.mxu0 0.0
    %940 = vmatprep.subr.mxu0 0.0
    %941 = vmatpush1.msra.mxu0 0.0
    %942 = vmatprep.subr.mxu0 0.0
    %943 = vmatpush1.msra.mxu0 0.0
    %944 = vmatprep.subr.mxu0 0.0
    %945 = vmatpush1.msra.mxu0 0.0
    %946 = vmatprep.subr.mxu0 0.0
    %947 = vmatpush1.msra.mxu0 0.0
    %948 = vmatprep.subr.mxu0 0.0
    %949 = vmatpush1.msra.mxu0 0.0
    %950 = vmatprep.subr.mxu0 0.0
    %951 = vmatpush1.msra.mxu0 0.0
    %952 = vmatprep.subr.mxu0 0.0
    %953 = vmatpush1.msra.mxu0 0.0
    %954 = vmatprep.subr.mxu0 0.0
    %955 = vmatpush1.msra.mxu0 0.0
    %956 = vmatprep.subr.mxu0 0.0
    %957 = vmatpush1.msra.mxu0 0.0
    %958 = vmatprep.subr.mxu0 0.0
    %959 = vmatpush1.msra.mxu0 0.0
    %960 = vmatprep.subr.mxu0 0.0
    %961 = vmatpush1.msra.mxu0 0.0
    %962 = vmatprep.subr.mxu0 0.0
    %963 = vmatpush1.msra.mxu0 0.0
    %964 = vmatprep.subr.mxu0 0.0
    %965 = vmatpush1.msra.mxu0 0.0
    %966 = vmatprep.subr.mxu0 0.0
    %967 = vmatpush1.msra.mxu0 0.0
    %968 = vmatprep.subr.mxu0 0.0
    %969 = vmatpush1.msra.mxu0 0.0
    %970 = vmatprep.subr.mxu0 0.0
    %971 = vmatpush1.msra.mxu0 0.0
    %972 = vmatprep.subr.mxu0 0.0
    %973 = vmatpush1.msra.mxu0 0.0
    %974 = vmatprep.mubr.f32.mxu0 0.0
    %975 = vmatmul.mubr.f32.gmra.mrb[0].mxu0 %v905
    %v976 = vpop.f32.mrb[0].mxu0
    %v977 = vadd.f32 0.0, %v976
    %v978 = vpop.f32.mrb[0].mxu0
    %979 = vmatprep.mubr.f32.mxu0 0.0
    %980 = vmatmul.mubr.f32.gmra.mrb[0].mxu0 %v908
    %v981 = vpop.f32.mrb[0].mxu0
    %v982 = vadd.f32 0.0, %v981
    %v983 = vpop.f32.mrb[0].mxu0
    %984 = vdwg.mxu0
    %s985 = scalar_lea.vmem %s6, 64
    %v986 = vld [vmem:[%s985] sm:$0xff]
    %v987 = vld [vmem:[%s985 + $0x8] sm:$0xff]
    %v988 = vld [vmem:[%s985 + $0x10] sm:$0xff]
    %v989 = vld [vmem:[%s985 + $0x18] sm:$0xff]
    %v990 = vld [vmem:[%s985 + $0x20] sm:$0xff]
    %v991 = vld [vmem:[%s985 + $0x28] sm:$0xff]
    %v992 = vld [vmem:[%s985 + $0x30] sm:$0xff]
    %v993 = vld [vmem:[%s985 + $0x38] sm:$0xff]
    %994 = vmatprep.subr.mxu0 0.0
    %995 = vmatpush1.msra.mxu0 %v986
    %996 = vmatprep.subr.mxu0 0.0
    %997 = vmatpush1.msra.mxu0 %v987
    %998 = vmatprep.subr.mxu0 0.0
    %999 = vmatpush1.msra.mxu0 %v988
    %1000 = vmatprep.subr.mxu0 0.0
    %1001 = vmatpush1.msra.mxu0 %v989
    %1002 = vmatprep.subr.mxu0 0.0
    %1003 = vmatpush1.msra.mxu0 %v990
    %1004 = vmatprep.subr.mxu0 0.0
    %1005 = vmatpush1.msra.mxu0 %v991
    %1006 = vmatprep.subr.mxu0 0.0
    %1007 = vmatpush1.msra.mxu0 %v992
    %1008 = vmatprep.subr.mxu0 0.0
    %1009 = vmatpush1.msra.mxu0 %v993
    %1010 = vmatprep.subr.mxu0 0.0
    %1011 = vmatpush1.msra.mxu0 0.0
    %1012 = vmatprep.subr.mxu0 0.0
    %1013 = vmatpush1.msra.mxu0 0.0
    %1014 = vmatprep.subr.mxu0 0.0
    %1015 = vmatpush1.msra.mxu0 0.0
    %1016 = vmatprep.subr.mxu0 0.0
    %1017 = vmatpush1.msra.mxu0 0.0
    %1018 = vmatprep.subr.mxu0 0.0
    %1019 = vmatpush1.msra.mxu0 0.0
    %1020 = vmatprep.subr.mxu0 0.0
    %1021 = vmatpush1.msra.mxu0 0.0
    %1022 = vmatprep.subr.mxu0 0.0
    %1023 = vmatpush1.msra.mxu0 0.0
    %1024 = vmatprep.subr.mxu0 0.0
    %1025 = vmatpush1.msra.mxu0 0.0
    %1026 = vmatprep.subr.mxu0 0.0
    %1027 = vmatpush1.msra.mxu0 0.0
    %1028 = vmatprep.subr.mxu0 0.0
    %1029 = vmatpush1.msra.mxu0 0.0
    %1030 = vmatprep.subr.mxu0 0.0
    %1031 = vmatpush1.msra.mxu0 0.0
    %1032 = vmatprep.subr.mxu0 0.0
    %1033 = vmatpush1.msra.mxu0 0.0
    %1034 = vmatprep.subr.mxu0 0.0
    %1035 = vmatpush1.msra.mxu0 0.0
    %1036 = vmatprep.subr.mxu0 0.0
    %1037 = vmatpush1.msra.mxu0 0.0
    %1038 = vmatprep.subr.mxu0 0.0
    %1039 = vmatpush1.msra.mxu0 0.0
    %1040 = vmatprep.subr.mxu0 0.0
    %1041 = vmatpush1.msra.mxu0 0.0
    %1042 = vmatprep.subr.mxu0 0.0
    %1043 = vmatpush1.msra.mxu0 0.0
    %1044 = vmatprep.subr.mxu0 0.0
    %1045 = vmatpush1.msra.mxu0 0.0
    %1046 = vmatprep.subr.mxu0 0.0
    %1047 = vmatpush1.msra.mxu0 0.0
    %1048 = vmatprep.subr.mxu0 0.0
    %1049 = vmatpush1.msra.mxu0 0.0
    %1050 = vmatprep.subr.mxu0 0.0
    %1051 = vmatpush1.msra.mxu0 0.0
    %1052 = vmatprep.subr.mxu0 0.0
    %1053 = vmatpush1.msra.mxu0 0.0
    %1054 = vmatprep.subr.mxu0 0.0
    %1055 = vmatpush1.msra.mxu0 0.0
    %1056 = vmatprep.subr.mxu0 0.0
    %1057 = vmatpush1.msra.mxu0 0.0
    %1058 = vmatprep.mubr.f32.mxu0 0.0
    %1059 = vmatmul.mubr.f32.gmra.mrb[0].mxu0 %v905
    %v1060 = vpop.f32.mrb[0].mxu0
    %v1061 = vadd.f32 0.0, %v1060
    %v1062 = vpop.f32.mrb[0].mxu0
    %1063 = vmatprep.mubr.f32.mxu0 0.0
    %1064 = vmatmul.mubr.f32.gmra.mrb[0].mxu0 %v908
    %v1065 = vpop.f32.mrb[0].mxu0
    %v1066 = vadd.f32 0.0, %v1065
    %v1067 = vpop.f32.mrb[0].mxu0
    %1068 = vdwg.mxu0
    %v1069 = vmax.f32 %v977, %v1061
    %v1070 = vmax.f32 %v982, %v1066
    %v1072 = vsel %vm903, %v887, 0
    %v1075 = vsel %vm903, %v892, 0
    %1077 = vmatprep.subr.mxu0 0.0
    %1078 = vmatpush1.msra.mxu0 %v895
    %1079 = vmatprep.subr.mxu0 0.0
    %1080 = vmatpush1.msra.mxu0 %v896
    %1081 = vmatprep.subr.mxu0 0.0
    %1082 = vmatpush1.msra.mxu0 %v897
    %1083 = vmatprep.subr.mxu0 0.0
    %1084 = vmatpush1.msra.mxu0 %v898
    %1085 = vmatprep.subr.mxu0 0.0
    %1086 = vmatpush1.msra.mxu0 %v899
    %1087 = vmatprep.subr.mxu0 0.0
    %1088 = vmatpush1.msra.mxu0 %v900
    %1089 = vmatprep.subr.mxu0 0.0
    %1090 = vmatpush1.msra.mxu0 %v901
    %1091 = vmatprep.subr.mxu0 0.0
    %1092 = vmatpush1.msra.mxu0 %v902
    %1093 = vmatprep.subr.mxu0 0.0
    %1094 = vmatpush1.msra.mxu0 0.0
    %1095 = vmatprep.subr.mxu0 0.0
    %1096 = vmatpush1.msra.mxu0 0.0
    %1097 = vmatprep.subr.mxu0 0.0
    %1098 = vmatpush1.msra.mxu0 0.0
    %1099 = vmatprep.subr.mxu0 0.0
    %1100 = vmatpush1.msra.mxu0 0.0
    %1101 = vmatprep.subr.mxu0 0.0
    %1102 = vmatpush1.msra.mxu0 0.0
    %1103 = vmatprep.subr.mxu0 0.0
    %1104 = vmatpush1.msra.mxu0 0.0
    %1105 = vmatprep.subr.mxu0 0.0
    %1106 = vmatpush1.msra.mxu0 0.0
    %1107 = vmatprep.subr.mxu0 0.0
    %1108 = vmatpush1.msra.mxu0 0.0
    %1109 = vmatprep.subr.mxu0 0.0
    %1110 = vmatpush1.msra.mxu0 0.0
    %1111 = vmatprep.subr.mxu0 0.0
    %1112 = vmatpush1.msra.mxu0 0.0
    %1113 = vmatprep.subr.mxu0 0.0
    %1114 = vmatpush1.msra.mxu0 0.0
    %1115 = vmatprep.subr.mxu0 0.0
    %1116 = vmatpush1.msra.mxu0 0.0
    %1117 = vmatprep.subr.mxu0 0.0
    %1118 = vmatpush1.msra.mxu0 0.0
    %1119 = vmatprep.subr.mxu0 0.0
    %1120 = vmatpush1.msra.mxu0 0.0
    %1121 = vmatprep.subr.mxu0 0.0
    %1122 = vmatpush1.msra.mxu0 0.0
    %1123 = vmatprep.subr.mxu0 0.0
    %1124 = vmatpush1.msra.mxu0 0.0
    %1125 = vmatprep.subr.mxu0 0.0
    %1126 = vmatpush1.msra.mxu0 0.0
    %1127 = vmatprep.subr.mxu0 0.0
    %1128 = vmatpush1.msra.mxu0 0.0
    %1129 = vmatprep.subr.mxu0 0.0
    %1130 = vmatpush1.msra.mxu0 0.0
    %1131 = vmatprep.subr.mxu0 0.0
    %1132 = vmatpush1.msra.mxu0 0.0
    %1133 = vmatprep.subr.mxu0 0.0
    %1134 = vmatpush1.msra.mxu0 0.0
    %1135 = vmatprep.subr.mxu0 0.0
    %1136 = vmatpush1.msra.mxu0 0.0
    %1137 = vmatprep.subr.mxu0 0.0
    %1138 = vmatpush1.msra.mxu0 0.0
    %1139 = vmatprep.subr.mxu0 0.0
    %1140 = vmatpush1.msra.mxu0 0.0
    %1141 = vmatprep.mubr.f32.mxu0 0.0
    %1142 = vmatmul.mubr.f32.gmra.mrb[0].mxu0 %v1072
    %v1143 = vpop.f32.mrb[0].mxu0
    %v1144 = vadd.f32 0.0, %v1143
    %v1145 = vpop.f32.mrb[0].mxu0
    %1146 = vmatprep.mubr.f32.mxu0 0.0
    %1147 = vmatmul.mubr.f32.gmra.mrb[0].mxu0 %v1075
    %v1148 = vpop.f32.mrb[0].mxu0
    %v1149 = vadd.f32 0.0, %v1148
    %v1150 = vpop.f32.mrb[0].mxu0
    %1151 = vdwg.mxu0
    %1152 = vmatprep.subr.mxu0 0.0
    %1153 = vmatpush1.msra.mxu0 %v986
    %1154 = vmatprep.subr.mxu0 0.0
    %1155 = vmatpush1.msra.mxu0 %v987
    %1156 = vmatprep.subr.mxu0 0.0
    %1157 = vmatpush1.msra.mxu0 %v988
    %1158 = vmatprep.subr.mxu0 0.0
    %1159 = vmatpush1.msra.mxu0 %v989
    %1160 = vmatprep.subr.mxu0 0.0
    %1161 = vmatpush1.msra.mxu0 %v990
    %1162 = vmatprep.subr.mxu0 0.0
    %1163 = vmatpush1.msra.mxu0 %v991
    %1164 = vmatprep.subr.mxu0 0.0
    %1165 = vmatpush1.msra.mxu0 %v992
    %1166 = vmatprep.subr.mxu0 0.0
    %1167 = vmatpush1.msra.mxu0 %v993
    %1168 = vmatprep.subr.mxu0 0.0
    %1169 = vmatpush1.msra.mxu0 0.0
    %1170 = vmatprep.subr.mxu0 0.0
    %1171 = vmatpush1.msra.mxu0 0.0
    %1172 = vmatprep.subr.mxu0 0.0
    %1173 = vmatpush1.msra.mxu0 0.0
    %1174 = vmatprep.subr.mxu0 0.0
    %1175 = vmatpush1.msra.mxu0 0.0
    %1176 = vmatprep.subr.mxu0 0.0
    %1177 = vmatpush1.msra.mxu0 0.0
    %1178 = vmatprep.subr.mxu0 0.0
    %1179 = vmatpush1.msra.mxu0 0.0
    %1180 = vmatprep.subr.mxu0 0.0
    %1181 = vmatpush1.msra.mxu0 0.0
    %1182 = vmatprep.subr.mxu0 0.0
    %1183 = vmatpush1.msra.mxu0 0.0
    %1184 = vmatprep.subr.mxu0 0.0
    %1185 = vmatpush1.msra.mxu0 0.0
    %1186 = vmatprep.subr.mxu0 0.0
    %1187 = vmatpush1.msra.mxu0 0.0
    %1188 = vmatprep.subr.mxu0 0.0
    %1189 = vmatpush1.msra.mxu0 0.0
    %1190 = vmatprep.subr.mxu0 0.0
    %1191 = vmatpush1.msra.mxu0 0.0
    %1192 = vmatprep.subr.mxu0 0.0
    %1193 = vmatpush1.msra.mxu0 0.0
    %1194 = vmatprep.subr.mxu0 0.0
    %1195 = vmatpush1.msra.mxu0 0.0
    %1196 = vmatprep.subr.mxu0 0.0
    %1197 = vmatpush1.msra.mxu0 0.0
    %1198 = vmatprep.subr.mxu0 0.0
    %1199 = vmatpush1.msra.mxu0 0.0
    %1200 = vmatprep.subr.mxu0 0.0
    %1201 = vmatpush1.msra.mxu0 0.0
    %1202 = vmatprep.subr.mxu0 0.0
    %1203 = vmatpush1.msra.mxu0 0.0
    %1204 = vmatprep.subr.mxu0 0.0
    %1205 = vmatpush1.msra.mxu0 0.0
    %1206 = vmatprep.subr.mxu0 0.0
    %1207 = vmatpush1.msra.mxu0 0.0
    %1208 = vmatprep.subr.mxu0 0.0
    %1209 = vmatpush1.msra.mxu0 0.0
    %1210 = vmatprep.subr.mxu0 0.0
    %1211 = vmatpush1.msra.mxu0 0.0
    %1212 = vmatprep.subr.mxu0 0.0
    %1213 = vmatpush1.msra.mxu0 0.0
    %1214 = vmatprep.subr.mxu0 0.0
    %1215 = vmatpush1.msra.mxu0 0.0
    %1216 = vmatprep.mubr.f32.mxu0 0.0
    %1217 = vmatmul.mubr.f32.gmra.mrb[0].mxu0 %v1072
    %v1218 = vpop.f32.mrb[0].mxu0
    %v1219 = vadd.f32 0.0, %v1218
    %v1220 = vpop.f32.mrb[0].mxu0
    %1221 = vmatprep.mubr.f32.mxu0 0.0
    %1222 = vmatmul.mubr.f32.gmra.mrb[0].mxu0 %v1075
    %v1223 = vpop.f32.mrb[0].mxu0
    %v1224 = vadd.f32 0.0, %v1223
    %v1225 = vpop.f32.mrb[0].mxu0
    %1226 = vdwg.mxu0
    %v1227 = vmax.f32 %v1144, %v1219
    %v1228 = vmax.f32 %v1149, %v1224
    %v1229 = vmax.f32 %v1069, %v1227
    %v1230 = vmax.f32 %v1070, %v1228
    %s1231 = scalar_lea.vmem %s8, 32
    %v1232 = vld [vmem:[%s1231] sm:$0xff]
    %v1233 = vld [vmem:[%s1231 + $0x8] sm:$0xff]
    %v1234 = vld [vmem:[%s1231 + $0x10] sm:$0xff]
    %v1235 = vld [vmem:[%s1231 + $0x18] sm:$0xff]
    %v1236 = vld [vmem:[#allocation8] sm:$0xff]
    %v1237 = vld [vmem:[#allocation8 + $0x8] sm:$0xff]
    %v1239 = vsel %vm301, %v1236, 0
    %v1242 = vsel %vm301, %v1237, 0
    %1244 = vmatprep.subr.mxu0 0.0
    %1245 = vmatpush1.msra.mxu0 %v1229
    %1246 = vmatprep.subr.mxu0 0.0
    %1247 = vmatpush1.msra.mxu0 %v1230
    %1248 = vmatprep.subr.mxu0 0.0
    %1249 = vmatpush1.msra.mxu0 0.0
    %1250 = vmatprep.subr.mxu0 0.0
    %1251 = vmatpush1.msra.mxu0 0.0
    %1252 = vmatprep.subr.mxu0 0.0
    %1253 = vmatpush1.msra.mxu0 0.0
    %1254 = vmatprep.subr.mxu0 0.0
    %1255 = vmatpush1.msra.mxu0 0.0
    %1256 = vmatprep.subr.mxu0 0.0
    %1257 = vmatpush1.msra.mxu0 0.0
    %1258 = vmatprep.subr.mxu0 0.0
    %1259 = vmatpush1.msra.mxu0 0.0
    %1260 = vmatprep.subr.mxu0 0.0
    %1261 = vmatpush1.msra.mxu0 0.0
    %1262 = vmatprep.subr.mxu0 0.0
    %1263 = vmatpush1.msra.mxu0 0.0
    %1264 = vmatprep.subr.mxu0 0.0
    %1265 = vmatpush1.msra.mxu0 0.0
    %1266 = vmatprep.subr.mxu0 0.0
    %1267 = vmatpush1.msra.mxu0 0.0
    %1268 = vmatprep.subr.mxu0 0.0
    %1269 = vmatpush1.msra.mxu0 0.0
    %1270 = vmatprep.subr.mxu0 0.0
    %1271 = vmatpush1.msra.mxu0 0.0
    %1272 = vmatprep.subr.mxu0 0.0
    %1273 = vmatpush1.msra.mxu0 0.0
    %1274 = vmatprep.subr.mxu0 0.0
    %1275 = vmatpush1.msra.mxu0 0.0
    %1276 = vmatprep.subr.mxu0 0.0
    %1277 = vmatpush1.msra.mxu0 0.0
    %1278 = vmatprep.subr.mxu0 0.0
    %1279 = vmatpush1.msra.mxu0 0.0
    %1280 = vmatprep.subr.mxu0 0.0
    %1281 = vmatpush1.msra.mxu0 0.0
    %1282 = vmatprep.subr.mxu0 0.0
    %1283 = vmatpush1.msra.mxu0 0.0
    %1284 = vmatprep.subr.mxu0 0.0
    %1285 = vmatpush1.msra.mxu0 0.0
    %1286 = vmatprep.subr.mxu0 0.0
    %1287 = vmatpush1.msra.mxu0 0.0
    %1288 = vmatprep.subr.mxu0 0.0
    %1289 = vmatpush1.msra.mxu0 0.0
    %1290 = vmatprep.subr.mxu0 0.0
    %1291 = vmatpush1.msra.mxu0 0.0
    %1292 = vmatprep.subr.mxu0 0.0
    %1293 = vmatpush1.msra.mxu0 0.0
    %1294 = vmatprep.subr.mxu0 0.0
    %1295 = vmatpush1.msra.mxu0 0.0
    %1296 = vmatprep.subr.mxu0 0.0
    %1297 = vmatpush1.msra.mxu0 0.0
    %1298 = vmatprep.subr.mxu0 0.0
    %1299 = vmatpush1.msra.mxu0 0.0
    %1300 = vmatprep.subr.mxu0 0.0
    %1301 = vmatpush1.msra.mxu0 0.0
    %1302 = vmatprep.subr.mxu0 0.0
    %1303 = vmatpush1.msra.mxu0 0.0
    %1304 = vmatprep.subr.mxu0 0.0
    %1305 = vmatpush1.msra.mxu0 0.0
    %1306 = vmatprep.subr.mxu0 0.0
    %1307 = vmatpush1.msra.mxu0 0.0
    %1308 = vmatprep.mubr.f32.mxu0 0.0
    %1309 = vmatmul.mubr.f32.gmra.mrb[0].mxu0 %v1239
    %v1310 = vpop.f32.mrb[0].mxu0
    %v1311 = vadd.f32 0.0, %v1310
    %v1312 = vpop.f32.mrb[0].mxu0
    %1313 = vmatprep.mubr.f32.mxu0 0.0
    %1314 = vmatmul.mubr.f32.gmra.mrb[0].mxu0 %v1242
    %v1315 = vpop.f32.mrb[0].mxu0
    %v1316 = vadd.f32 0.0, %v1315
    %v1317 = vpop.f32.mrb[0].mxu0
    %1318 = vdwg.mxu0
    %v1319 = vld [vmem:[%s8] sm:$0xff]
    %v1320 = vld [vmem:[%s8 + $0x8] sm:$0xff]
    %v1321 = vld [vmem:[%s8 + $0x10] sm:$0xff]
    %v1322 = vld [vmem:[%s8 + $0x18] sm:$0xff]
    %v1324 = vsel %vm201, %v1311, 0
    %v1327 = vsel %vm201, %v1316, 0
    %1329 = vmatprep.subr.mxu0 0.0
    %1330 = vmatpush1.msra.mxu0 %v1319
    %1331 = vmatprep.subr.mxu0 0.0
    %1332 = vmatpush1.msra.mxu0 %v1320
    %1333 = vmatprep.subr.mxu0 0.0
    %1334 = vmatpush1.msra.mxu0 %v1321
    %1335 = vmatprep.subr.mxu0 0.0
    %1336 = vmatpush1.msra.mxu0 %v1322
    %1337 = vmatprep.subr.mxu0 0.0
    %1338 = vmatpush1.msra.mxu0 0.0
    %1339 = vmatprep.subr.mxu0 0.0
    %1340 = vmatpush1.msra.mxu0 0.0
    %1341 = vmatprep.subr.mxu0 0.0
    %1342 = vmatpush1.msra.mxu0 0.0
    %1343 = vmatprep.subr.mxu0 0.0
    %1344 = vmatpush1.msra.mxu0 0.0
    %1345 = vmatprep.subr.mxu0 0.0
    %1346 = vmatpush1.msra.mxu0 0.0
    %1347 = vmatprep.subr.mxu0 0.0
    %1348 = vmatpush1.msra.mxu0 0.0
    %1349 = vmatprep.subr.mxu0 0.0
    %1350 = vmatpush1.msra.mxu0 0.0
    %1351 = vmatprep.subr.mxu0 0.0
    %1352 = vmatpush1.msra.mxu0 0.0
    %1353 = vmatprep.subr.mxu0 0.0
    %1354 = vmatpush1.msra.mxu0 0.0
    %1355 = vmatprep.subr.mxu0 0.0
    %1356 = vmatpush1.msra.mxu0 0.0
    %1357 = vmatprep.subr.mxu0 0.0
    %1358 = vmatpush1.msra.mxu0 0.0
    %1359 = vmatprep.subr.mxu0 0.0
    %1360 = vmatpush1.msra.mxu0 0.0
    %1361 = vmatprep.subr.mxu0 0.0
    %1362 = vmatpush1.msra.mxu0 0.0
    %1363 = vmatprep.subr.mxu0 0.0
    %1364 = vmatpush1.msra.mxu0 0.0
    %1365 = vmatprep.subr.mxu0 0.0
    %1366 = vmatpush1.msra.mxu0 0.0
    %1367 = vmatprep.subr.mxu0 0.0
    %1368 = vmatpush1.msra.mxu0 0.0
    %1369 = vmatprep.subr.mxu0 0.0
    %1370 = vmatpush1.msra.mxu0 0.0
    %1371 = vmatprep.subr.mxu0 0.0
    %1372 = vmatpush1.msra.mxu0 0.0
    %1373 = vmatprep.subr.mxu0 0.0
    %1374 = vmatpush1.msra.mxu0 0.0
    %1375 = vmatprep.subr.mxu0 0.0
    %1376 = vmatpush1.msra.mxu0 0.0
    %1377 = vmatprep.subr.mxu0 0.0
    %1378 = vmatpush1.msra.mxu0 0.0
    %1379 = vmatprep.subr.mxu0 0.0
    %1380 = vmatpush1.msra.mxu0 0.0
    %1381 = vmatprep.subr.mxu0 0.0
    %1382 = vmatpush1.msra.mxu0 0.0
    %1383 = vmatprep.subr.mxu0 0.0
    %1384 = vmatpush1.msra.mxu0 0.0
    %1385 = vmatprep.subr.mxu0 0.0
    %1386 = vmatpush1.msra.mxu0 0.0
    %1387 = vmatprep.subr.mxu0 0.0
    %1388 = vmatpush1.msra.mxu0 0.0
    %1389 = vmatprep.subr.mxu0 0.0
    %1390 = vmatpush1.msra.mxu0 0.0
    %1391 = vmatprep.subr.mxu0 0.0
    %1392 = vmatpush1.msra.mxu0 0.0
    %1393 = vmatprep.mubr.f32.mxu0 0.0
    %1394 = vmatmul.mubr.f32.gmra.mrb[0].mxu0 %v1324
    %v1395 = vpop.f32.mrb[0].mxu0
    %v1396 = vadd.f32 0.0, %v1395
    %v1397 = vpop.f32.mrb[0].mxu0
    %1398 = vmatprep.mubr.f32.mxu0 0.0
    %1399 = vmatmul.mubr.f32.gmra.mrb[0].mxu0 %v1327
    %v1400 = vpop.f32.mrb[0].mxu0
    %v1401 = vadd.f32 0.0, %v1400
    %v1402 = vpop.f32.mrb[0].mxu0
    %1403 = vdwg.mxu0
    %v1405 = vsel %vm201, %v1229, 0
    %v1408 = vsel %vm201, %v1230, 0
    %1410 = vmatprep.subr.mxu0 0.0
    %1411 = vmatpush1.msra.mxu0 %v1232
    %1412 = vmatprep.subr.mxu0 0.0
    %1413 = vmatpush1.msra.mxu0 %v1233
    %1414 = vmatprep.subr.mxu0 0.0
    %1415 = vmatpush1.msra.mxu0 %v1234
    %1416 = vmatprep.subr.mxu0 0.0
    %1417 = vmatpush1.msra.mxu0 %v1235
    %1418 = vmatprep.subr.mxu0 0.0
    %1419 = vmatpush1.msra.mxu0 0.0
    %1420 = vmatprep.subr.mxu0 0.0
    %1421 = vmatpush1.msra.mxu0 0.0
    %1422 = vmatprep.subr.mxu0 0.0
    %1423 = vmatpush1.msra.mxu0 0.0
    %1424 = vmatprep.subr.mxu0 0.0
    %1425 = vmatpush1.msra.mxu0 0.0
    %1426 = vmatprep.subr.mxu0 0.0
    %1427 = vmatpush1.msra.mxu0 0.0
    %1428 = vmatprep.subr.mxu0 0.0
    %1429 = vmatpush1.msra.mxu0 0.0
    %1430 = vmatprep.subr.mxu0 0.0
    %1431 = vmatpush1.msra.mxu0 0.0
    %1432 = vmatprep.subr.mxu0 0.0
    %1433 = vmatpush1.msra.mxu0 0.0
    %1434 = vmatprep.subr.mxu0 0.0
    %1435 = vmatpush1.msra.mxu0 0.0
    %1436 = vmatprep.subr.mxu0 0.0
    %1437 = vmatpush1.msra.mxu0 0.0
    %1438 = vmatprep.subr.mxu0 0.0
    %1439 = vmatpush1.msra.mxu0 0.0
    %1440 = vmatprep.subr.mxu0 0.0
    %1441 = vmatpush1.msra.mxu0 0.0
    %1442 = vmatprep.subr.mxu0 0.0
    %1443 = vmatpush1.msra.mxu0 0.0
    %1444 = vmatprep.subr.mxu0 0.0
    %1445 = vmatpush1.msra.mxu0 0.0
    %1446 = vmatprep.subr.mxu0 0.0
    %1447 = vmatpush1.msra.mxu0 0.0
    %1448 = vmatprep.subr.mxu0 0.0
    %1449 = vmatpush1.msra.mxu0 0.0
    %1450 = vmatprep.subr.mxu0 0.0
    %1451 = vmatpush1.msra.mxu0 0.0
    %1452 = vmatprep.subr.mxu0 0.0
    %1453 = vmatpush1.msra.mxu0 0.0
    %1454 = vmatprep.subr.mxu0 0.0
    %1455 = vmatpush1.msra.mxu0 0.0
    %1456 = vmatprep.subr.mxu0 0.0
    %1457 = vmatpush1.msra.mxu0 0.0
    %1458 = vmatprep.subr.mxu0 0.0
    %1459 = vmatpush1.msra.mxu0 0.0
    %1460 = vmatprep.subr.mxu0 0.0
    %1461 = vmatpush1.msra.mxu0 0.0
    %1462 = vmatprep.subr.mxu0 0.0
    %1463 = vmatpush1.msra.mxu0 0.0
    %1464 = vmatprep.subr.mxu0 0.0
    %1465 = vmatpush1.msra.mxu0 0.0
    %1466 = vmatprep.subr.mxu0 0.0
    %1467 = vmatpush1.msra.mxu0 0.0
    %1468 = vmatprep.subr.mxu0 0.0
    %1469 = vmatpush1.msra.mxu0 0.0
    %1470 = vmatprep.subr.mxu0 0.0
    %1471 = vmatpush1.msra.mxu0 0.0
    %1472 = vmatprep.subr.mxu0 0.0
    %1473 = vmatpush1.msra.mxu0 0.0
    %1474 = vmatprep.mubr.f32.mxu0 0.0
    %1475 = vmatmul.mubr.f32.gmra.mrb[0].mxu0 %v1405
    %v1476 = vpop.f32.mrb[0].mxu0
    %v1477 = vadd.f32 %v1396, %v1476
    %v1478 = vpop.f32.mrb[0].mxu0
    %1479 = vmatprep.mubr.f32.mxu0 0.0
    %1480 = vmatmul.mubr.f32.gmra.mrb[0].mxu0 %v1408
    %v1481 = vpop.f32.mrb[0].mxu0
    %v1482 = vadd.f32 %v1401, %v1481
    %v1483 = vpop.f32.mrb[0].mxu0
    %1484 = vdwg.mxu0
    %s1485 = scalar_lea.vmem [#allocation8], 16
    %v1486 = vld [vmem:[%s1485] sm:$0xff]
    %v1487 = vld [vmem:[%s1485 + $0x8] sm:$0xff]
    %v1489 = vsel %vm301, %v1486, 0
    %v1492 = vsel %vm301, %v1487, 0
    %1494 = vmatprep.subr.mxu0 0.0
    %1495 = vmatpush1.msra.mxu0 %v1229
    %1496 = vmatprep.subr.mxu0 0.0
    %1497 = vmatpush1.msra.mxu0 %v1230
    %1498 = vmatprep.subr.mxu0 0.0
    %1499 = vmatpush1.msra.mxu0 0.0
    %1500 = vmatprep.subr.mxu0 0.0
    %1501 = vmatpush1.msra.mxu0 0.0
    %1502 = vmatprep.subr.mxu0 0.0
    %1503 = vmatpush1.msra.mxu0 0.0
    %1504 = vmatprep.subr.mxu0 0.0
    %1505 = vmatpush1.msra.mxu0 0.0
    %1506 = vmatprep.subr.mxu0 0.0
    %1507 = vmatpush1.msra.mxu0 0.0
    %1508 = vmatprep.subr.mxu0 0.0
    %1509 = vmatpush1.msra.mxu0 0.0
    %1510 = vmatprep.subr.mxu0 0.0
    %1511 = vmatpush1.msra.mxu0 0.0
    %1512 = vmatprep.subr.mxu0 0.0
    %1513 = vmatpush1.msra.mxu0 0.0
    %1514 = vmatprep.subr.mxu0 0.0
    %1515 = vmatpush1.msra.mxu0 0.0
    %1516 = vmatprep.subr.mxu0 0.0
    %1517 = vmatpush1.msra.mxu0 0.0
    %1518 = vmatprep.subr.mxu0 0.0
    %1519 = vmatpush1.msra.mxu0 0.0
    %1520 = vmatprep.subr.mxu0 0.0
    %1521 = vmatpush1.msra.mxu0 0.0
    %1522 = vmatprep.subr.mxu0 0.0
    %1523 = vmatpush1.msra.mxu0 0.0
    %1524 = vmatprep.subr.mxu0 0.0
    %1525 = vmatpush1.msra.mxu0 0.0
    %1526 = vmatprep.subr.mxu0 0.0
    %1527 = vmatpush1.msra.mxu0 0.0
    %1528 = vmatprep.subr.mxu0 0.0
    %1529 = vmatpush1.msra.mxu0 0.0
    %1530 = vmatprep.subr.mxu0 0.0
    %1531 = vmatpush1.msra.mxu0 0.0
    %1532 = vmatprep.subr.mxu0 0.0
    %1533 = vmatpush1.msra.mxu0 0.0
    %1534 = vmatprep.subr.mxu0 0.0
    %1535 = vmatpush1.msra.mxu0 0.0
    %1536 = vmatprep.subr.mxu0 0.0
    %1537 = vmatpush1.msra.mxu0 0.0
    %1538 = vmatprep.subr.mxu0 0.0
    %1539 = vmatpush1.msra.mxu0 0.0
    %1540 = vmatprep.subr.mxu0 0.0
    %1541 = vmatpush1.msra.mxu0 0.0
    %1542 = vmatprep.subr.mxu0 0.0
    %1543 = vmatpush1.msra.mxu0 0.0
    %1544 = vmatprep.subr.mxu0 0.0
    %1545 = vmatpush1.msra.mxu0 0.0
    %1546 = vmatprep.subr.mxu0 0.0
    %1547 = vmatpush1.msra.mxu0 0.0
    %1548 = vmatprep.subr.mxu0 0.0
    %1549 = vmatpush1.msra.mxu0 0.0
    %1550 = vmatprep.subr.mxu0 0.0
    %1551 = vmatpush1.msra.mxu0 0.0
    %1552 = vmatprep.subr.mxu0 0.0
    %1553 = vmatpush1.msra.mxu0 0.0
    %1554 = vmatprep.subr.mxu0 0.0
    %1555 = vmatpush1.msra.mxu0 0.0
    %1556 = vmatprep.subr.mxu0 0.0
    %1557 = vmatpush1.msra.mxu0 0.0
    %1558 = vmatprep.mubr.f32.mxu0 0.0
    %1559 = vmatmul.mubr.f32.gmra.mrb[0].mxu0 %v1489
    %v1560 = vpop.f32.mrb[0].mxu0
    %v1561 = vadd.f32 0.0, %v1560
    %v1562 = vpop.f32.mrb[0].mxu0
    %1563 = vmatprep.mubr.f32.mxu0 0.0
    %1564 = vmatmul.mubr.f32.gmra.mrb[0].mxu0 %v1492
    %v1565 = vpop.f32.mrb[0].mxu0
    %v1566 = vadd.f32 0.0, %v1565
    %v1567 = vpop.f32.mrb[0].mxu0
    %1568 = vdwg.mxu0
    %s1569 = scalar_lea.vmem %s8, 64
    %v1570 = vld [vmem:[%s1569] sm:$0xff]
    %v1571 = vld [vmem:[%s1569 + $0x8] sm:$0xff]
    %v1572 = vld [vmem:[%s1569 + $0x10] sm:$0xff]
    %v1573 = vld [vmem:[%s1569 + $0x18] sm:$0xff]
    %v1575 = vsel %vm201, %v1561, 0
    %v1578 = vsel %vm201, %v1566, 0
    %1580 = vmatprep.subr.mxu0 0.0
    %1581 = vmatpush1.msra.mxu0 %v1570
    %1582 = vmatprep.subr.mxu0 0.0
    %1583 = vmatpush1.msra.mxu0 %v1571
    %1584 = vmatprep.subr.mxu0 0.0
    %1585 = vmatpush1.msra.mxu0 %v1572
    %1586 = vmatprep.subr.mxu0 0.0
    %1587 = vmatpush1.msra.mxu0 %v1573
    %1588 = vmatprep.subr.mxu0 0.0
    %1589 = vmatpush1.msra.mxu0 0.0
    %1590 = vmatprep.subr.mxu0 0.0
    %1591 = vmatpush1.msra.mxu0 0.0
    %1592 = vmatprep.subr.mxu0 0.0
    %1593 = vmatpush1.msra.mxu0 0.0
    %1594 = vmatprep.subr.mxu0 0.0
    %1595 = vmatpush1.msra.mxu0 0.0
    %1596 = vmatprep.subr.mxu0 0.0
    %1597 = vmatpush1.msra.mxu0 0.0
    %1598 = vmatprep.subr.mxu0 0.0
    %1599 = vmatpush1.msra.mxu0 0.0
    %1600 = vmatprep.subr.mxu0 0.0
    %1601 = vmatpush1.msra.mxu0 0.0
    %1602 = vmatprep.subr.mxu0 0.0
    %1603 = vmatpush1.msra.mxu0 0.0
    %1604 = vmatprep.subr.mxu0 0.0
    %1605 = vmatpush1.msra.mxu0 0.0
    %1606 = vmatprep.subr.mxu0 0.0
    %1607 = vmatpush1.msra.mxu0 0.0
    %1608 = vmatprep.subr.mxu0 0.0
    %1609 = vmatpush1.msra.mxu0 0.0
    %1610 = vmatprep.subr.mxu0 0.0
    %1611 = vmatpush1.msra.mxu0 0.0
    %1612 = vmatprep.subr.mxu0 0.0
    %1613 = vmatpush1.msra.mxu0 0.0
    %1614 = vmatprep.subr.mxu0 0.0
    %1615 = vmatpush1.msra.mxu0 0.0
    %1616 = vmatprep.subr.mxu0 0.0
    %1617 = vmatpush1.msra.mxu0 0.0
    %1618 = vmatprep.subr.mxu0 0.0
    %1619 = vmatpush1.msra.mxu0 0.0
    %1620 = vmatprep.subr.mxu0 0.0
    %1621 = vmatpush1.msra.mxu0 0.0
    %1622 = vmatprep.subr.mxu0 0.0
    %1623 = vmatpush1.msra.mxu0 0.0
    %1624 = vmatprep.subr.mxu0 0.0
    %1625 = vmatpush1.msra.mxu0 0.0
    %1626 = vmatprep.subr.mxu0 0.0
    %1627 = vmatpush1.msra.mxu0 0.0
    %1628 = vmatprep.subr.mxu0 0.0
    %1629 = vmatpush1.msra.mxu0 0.0
    %1630 = vmatprep.subr.mxu0 0.0
    %1631 = vmatpush1.msra.mxu0 0.0
    %1632 = vmatprep.subr.mxu0 0.0
    %1633 = vmatpush1.msra.mxu0 0.0
    %1634 = vmatprep.subr.mxu0 0.0
    %1635 = vmatpush1.msra.mxu0 0.0
    %1636 = vmatprep.subr.mxu0 0.0
    %1637 = vmatpush1.msra.mxu0 0.0
    %1638 = vmatprep.subr.mxu0 0.0
    %1639 = vmatpush1.msra.mxu0 0.0
    %1640 = vmatprep.subr.mxu0 0.0
    %1641 = vmatpush1.msra.mxu0 0.0
    %1642 = vmatprep.subr.mxu0 0.0
    %1643 = vmatpush1.msra.mxu0 0.0
    %1644 = vmatprep.mubr.f32.mxu0 0.0
    %1645 = vmatmul.mubr.f32.gmra.mrb[0].mxu0 %v1575
    %v1646 = vpop.f32.mrb[0].mxu0
    %v1647 = vadd.f32 0.0, %v1646
    %v1648 = vpop.f32.mrb[0].mxu0
    %1649 = vmatprep.mubr.f32.mxu0 0.0
    %1650 = vmatmul.mubr.f32.gmra.mrb[0].mxu0 %v1578
    %v1651 = vpop.f32.mrb[0].mxu0
    %v1652 = vadd.f32 0.0, %v1651
    %v1653 = vpop.f32.mrb[0].mxu0
    %1654 = vdwg.mxu0
    %v1655 = vadd.f32 %v1477, %v1647
    %v1656 = vadd.f32 %v1482, %v1652
    %v1657 = vld [vmem:[#allocation10] sm:$0x1]
    %v1659 = vlaneseq
    %v1660 = vshrl.u32 %v1659, 7
    %v1661 = vsub.s32 0, %v1660
    %v1662 = vrot.slane %v1657, %v1661
    %v1664 = vmul.f32 %v1655, %v1662
    %v1665 = vmul.f32 %v1656, %v1662
    %v1666 = vld [vmem:[#allocation11] sm:$0x1]
    %v1668 = vlaneseq
    %v1669 = vshrl.u32 %v1668, 7
    %v1670 = vsub.s32 0, %v1669
    %v1671 = vrot.slane %v1666, %v1670
    %v1673 = vadd.f32 %v1664, %v1671
    %v1674 = vadd.f32 %v1665, %v1671
    %v1675 = vmax.f32 %v1673, 0.0
    %v1676 = vmax.f32 %v1674, 0.0
    %v1677 = vld [vmem:[#allocation13] sm:$0xff]
    %v1679 = vsel %vm301, %v1677, 0
    %1681 = vmatprep.subr.mxu0 0.0
    %1682 = vmatpush1.msra.mxu0 %v1675
    %1683 = vmatprep.subr.mxu0 0.0
    %1684 = vmatpush1.msra.mxu0 %v1676
    %1685 = vmatprep.subr.mxu0 0.0
    %1686 = vmatpush1.msra.mxu0 0.0
    %1687 = vmatprep.subr.mxu0 0.0
    %1688 = vmatpush1.msra.mxu0 0.0
    %1689 = vmatprep.subr.mxu0 0.0
    %1690 = vmatpush1.msra.mxu0 0.0
    %1691 = vmatprep.subr.mxu0 0.0
    %1692 = vmatpush1.msra.mxu0 0.0
    %1693 = vmatprep.subr.mxu0 0.0
    %1694 = vmatpush1.msra.mxu0 0.0
    %1695 = vmatprep.subr.mxu0 0.0
    %1696 = vmatpush1.msra.mxu0 0.0
    %1697 = vmatprep.subr.mxu0 0.0
    %1698 = vmatpush1.msra.mxu0 0.0
    %1699 = vmatprep.subr.mxu0 0.0
    %1700 = vmatpush1.msra.mxu0 0.0
    %1701 = vmatprep.subr.mxu0 0.0
    %1702 = vmatpush1.msra.mxu0 0.0
    %1703 = vmatprep.subr.mxu0 0.0
    %1704 = vmatpush1.msra.mxu0 0.0
    %1705 = vmatprep.subr.mxu0 0.0
    %1706 = vmatpush1.msra.mxu0 0.0
    %1707 = vmatprep.subr.mxu0 0.0
    %1708 = vmatpush1.msra.mxu0 0.0
    %1709 = vmatprep.subr.mxu0 0.0
    %1710 = vmatpush1.msra.mxu0 0.0
    %1711 = vmatprep.subr.mxu0 0.0
    %1712 = vmatpush1.msra.mxu0 0.0
    %1713 = vmatprep.subr.mxu0 0.0
    %1714 = vmatpush1.msra.mxu0 0.0
    %1715 = vmatprep.subr.mxu0 0.0
    %1716 = vmatpush1.msra.mxu0 0.0
    %1717 = vmatprep.subr.mxu0 0.0
    %1718 = vmatpush1.msra.mxu0 0.0
    %1719 = vmatprep.subr.mxu0 0.0
    %1720 = vmatpush1.msra.mxu0 0.0
    %1721 = vmatprep.subr.mxu0 0.0
    %1722 = vmatpush1.msra.mxu0 0.0
    %1723 = vmatprep.subr.mxu0 0.0
    %1724 = vmatpush1.msra.mxu0 0.0
    %1725 = vmatprep.subr.mxu0 0.0
    %1726 = vmatpush1.msra.mxu0 0.0
    %1727 = vmatprep.subr.mxu0 0.0
    %1728 = vmatpush1.msra.mxu0 0.0
    %1729 = vmatprep.subr.mxu0 0.0
    %1730 = vmatpush1.msra.mxu0 0.0
    %1731 = vmatprep.subr.mxu0 0.0
    %1732 = vmatpush1.msra.mxu0 0.0
    %1733 = vmatprep.subr.mxu0 0.0
    %1734 = vmatpush1.msra.mxu0 0.0
    %1735 = vmatprep.subr.mxu0 0.0
    %1736 = vmatpush1.msra.mxu0 0.0
    %1737 = vmatprep.subr.mxu0 0.0
    %1738 = vmatpush1.msra.mxu0 0.0
    %1739 = vmatprep.subr.mxu0 0.0
    %1740 = vmatpush1.msra.mxu0 0.0
    %1741 = vmatprep.subr.mxu0 0.0
    %1742 = vmatpush1.msra.mxu0 0.0
    %1743 = vmatprep.subr.mxu0 0.0
    %1744 = vmatpush1.msra.mxu0 0.0
    %1745 = vmatprep.mubr.f32.mxu0 0.0
    %1746 = vmatmul.mubr.f32.gmra.mrb[0].mxu0 %v1679
    %v1747 = vpop.f32.mrb[0].mxu0
    %v1748 = vadd.f32 0.0, %v1747
    %v1749 = vpop.f32.mrb[0].mxu0
    %1750 = vdwg.mxu0
    %s1751 = scalar_lea.vmem [#allocation13], 8
    %v1752 = vld [vmem:[%s1751] sm:$0xff]
    %v1754 = vsel %vm301, %v1752, 0
    %1756 = vmatprep.subr.mxu0 0.0
    %1757 = vmatpush1.msra.mxu0 %v1675
    %1758 = vmatprep.subr.mxu0 0.0
    %1759 = vmatpush1.msra.mxu0 %v1676
    %1760 = vmatprep.subr.mxu0 0.0
    %1761 = vmatpush1.msra.mxu0 0.0
    %1762 = vmatprep.subr.mxu0 0.0
    %1763 = vmatpush1.msra.mxu0 0.0
    %1764 = vmatprep.subr.mxu0 0.0
    %1765 = vmatpush1.msra.mxu0 0.0
    %1766 = vmatprep.subr.mxu0 0.0
    %1767 = vmatpush1.msra.mxu0 0.0
    %1768 = vmatprep.subr.mxu0 0.0
    %1769 = vmatpush1.msra.mxu0 0.0
    %1770 = vmatprep.subr.mxu0 0.0
    %1771 = vmatpush1.msra.mxu0 0.0
    %1772 = vmatprep.subr.mxu0 0.0
    %1773 = vmatpush1.msra.mxu0 0.0
    %1774 = vmatprep.subr.mxu0 0.0
    %1775 = vmatpush1.msra.mxu0 0.0
    %1776 = vmatprep.subr.mxu0 0.0
    %1777 = vmatpush1.msra.mxu0 0.0
    %1778 = vmatprep.subr.mxu0 0.0
    %1779 = vmatpush1.msra.mxu0 0.0
    %1780 = vmatprep.subr.mxu0 0.0
    %1781 = vmatpush1.msra.mxu0 0.0
    %1782 = vmatprep.subr.mxu0 0.0
    %1783 = vmatpush1.msra.mxu0 0.0
    %1784 = vmatprep.subr.mxu0 0.0
    %1785 = vmatpush1.msra.mxu0 0.0
    %1786 = vmatprep.subr.mxu0 0.0
    %1787 = vmatpush1.msra.mxu0 0.0
    %1788 = vmatprep.subr.mxu0 0.0
    %1789 = vmatpush1.msra.mxu0 0.0
    %1790 = vmatprep.subr.mxu0 0.0
    %1791 = vmatpush1.msra.mxu0 0.0
    %1792 = vmatprep.subr.mxu0 0.0
    %1793 = vmatpush1.msra.mxu0 0.0
    %1794 = vmatprep.subr.mxu0 0.0
    %1795 = vmatpush1.msra.mxu0 0.0
    %1796 = vmatprep.subr.mxu0 0.0
    %1797 = vmatpush1.msra.mxu0 0.0
    %1798 = vmatprep.subr.mxu0 0.0
    %1799 = vmatpush1.msra.mxu0 0.0
    %1800 = vmatprep.subr.mxu0 0.0
    %1801 = vmatpush1.msra.mxu0 0.0
    %1802 = vmatprep.subr.mxu0 0.0
    %1803 = vmatpush1.msra.mxu0 0.0
    %1804 = vmatprep.subr.mxu0 0.0
    %1805 = vmatpush1.msra.mxu0 0.0
    %1806 = vmatprep.subr.mxu0 0.0
    %1807 = vmatpush1.msra.mxu0 0.0
    %1808 = vmatprep.subr.mxu0 0.0
    %1809 = vmatpush1.msra.mxu0 0.0
    %1810 = vmatprep.subr.mxu0 0.0
    %1811 = vmatpush1.msra.mxu0 0.0
    %1812 = vmatprep.subr.mxu0 0.0
    %1813 = vmatpush1.msra.mxu0 0.0
    %1814 = vmatprep.subr.mxu0 0.0
    %1815 = vmatpush1.msra.mxu0 0.0
    %1816 = vmatprep.subr.mxu0 0.0
    %1817 = vmatpush1.msra.mxu0 0.0
    %1818 = vmatprep.subr.mxu0 0.0
    %1819 = vmatpush1.msra.mxu0 0.0
    %1820 = vmatprep.mubr.f32.mxu0 0.0
    %1821 = vmatmul.mubr.f32.gmra.mrb[0].mxu0 %v1754
    %v1822 = vpop.f32.mrb[0].mxu0
    %v1823 = vadd.f32 0.0, %v1822
    %v1824 = vpop.f32.mrb[0].mxu0
    %1825 = vdwg.mxu0
    %v1826 = vld [vmem:[%s12] sm:$0xff]
    %v1827 = vld [vmem:[%s12 + $0x8] sm:$0xff]
    %v1828 = vld [vmem:[%s12 + $0x10] sm:$0xff]
    %v1829 = vld [vmem:[%s12 + $0x18] sm:$0xff]
    %v1830 = vld [vmem:[%s12 + $0x20] sm:$0xff]
    %v1831 = vld [vmem:[%s12 + $0x28] sm:$0xff]
    %v1832 = vld [vmem:[%s12 + $0x30] sm:$0xff]
    %v1833 = vld [vmem:[%s12 + $0x38] sm:$0xff]
    %v1835 = vsel %vm903, %v1748, 0
    %1837 = vmatprep.subr.mxu0 0.0
    %1838 = vmatpush1.msra.mxu0 %v1826
    %1839 = vmatprep.subr.mxu0 0.0
    %1840 = vmatpush1.msra.mxu0 %v1827
    %1841 = vmatprep.subr.mxu0 0.0
    %1842 = vmatpush1.msra.mxu0 %v1828
    %1843 = vmatprep.subr.mxu0 0.0
    %1844 = vmatpush1.msra.mxu0 %v1829
    %1845 = vmatprep.subr.mxu0 0.0
    %1846 = vmatpush1.msra.mxu0 %v1830
    %1847 = vmatprep.subr.mxu0 0.0
    %1848 = vmatpush1.msra.mxu0 %v1831
    %1849 = vmatprep.subr.mxu0 0.0
    %1850 = vmatpush1.msra.mxu0 %v1832
    %1851 = vmatprep.subr.mxu0 0.0
    %1852 = vmatpush1.msra.mxu0 %v1833
    %1853 = vmatprep.subr.mxu0 0.0
    %1854 = vmatpush1.msra.mxu0 0.0
    %1855 = vmatprep.subr.mxu0 0.0
    %1856 = vmatpush1.msra.mxu0 0.0
    %1857 = vmatprep.subr.mxu0 0.0
    %1858 = vmatpush1.msra.mxu0 0.0
    %1859 = vmatprep.subr.mxu0 0.0
    %1860 = vmatpush1.msra.mxu0 0.0
    %1861 = vmatprep.subr.mxu0 0.0
    %1862 = vmatpush1.msra.mxu0 0.0
    %1863 = vmatprep.subr.mxu0 0.0
    %1864 = vmatpush1.msra.mxu0 0.0
    %1865 = vmatprep.subr.mxu0 0.0
    %1866 = vmatpush1.msra.mxu0 0.0
    %1867 = vmatprep.subr.mxu0 0.0
    %1868 = vmatpush1.msra.mxu0 0.0
    %1869 = vmatprep.subr.mxu0 0.0
    %1870 = vmatpush1.msra.mxu0 0.0
    %1871 = vmatprep.subr.mxu0 0.0
    %1872 = vmatpush1.msra.mxu0 0.0
    %1873 = vmatprep.subr.mxu0 0.0
    %1874 = vmatpush1.msra.mxu0 0.0
    %1875 = vmatprep.subr.mxu0 0.0
    %1876 = vmatpush1.msra.mxu0 0.0
    %1877 = vmatprep.subr.mxu0 0.0
    %1878 = vmatpush1.msra.mxu0 0.0
    %1879 = vmatprep.subr.mxu0 0.0
    %1880 = vmatpush1.msra.mxu0 0.0
    %1881 = vmatprep.subr.mxu0 0.0
    %1882 = vmatpush1.msra.mxu0 0.0
    %1883 = vmatprep.subr.mxu0 0.0
    %1884 = vmatpush1.msra.mxu0 0.0
    %1885 = vmatprep.subr.mxu0 0.0
    %1886 = vmatpush1.msra.mxu0 0.0
    %1887 = vmatprep.subr.mxu0 0.0
    %1888 = vmatpush1.msra.mxu0 0.0
    %1889 = vmatprep.subr.mxu0 0.0
    %1890 = vmatpush1.msra.mxu0 0.0
    %1891 = vmatprep.subr.mxu0 0.0
    %1892 = vmatpush1.msra.mxu0 0.0
    %1893 = vmatprep.subr.mxu0 0.0
    %1894 = vmatpush1.msra.mxu0 0.0
    %1895 = vmatprep.subr.mxu0 0.0
    %1896 = vmatpush1.msra.mxu0 0.0
    %1897 = vmatprep.subr.mxu0 0.0
    %1898 = vmatpush1.msra.mxu0 0.0
    %1899 = vmatprep.subr.mxu0 0.0
    %1900 = vmatpush1.msra.mxu0 0.0
    %1901 = vmatprep.mubr.f32.mxu0 0.0
    %1902 = vmatmul.mubr.f32.gmra.mrb[0].mxu0 %v1835
    %v1903 = vpop.f32.mrb[0].mxu0
    %v1904 = vadd.f32 0.0, %v1903
    %v1905 = vpop.f32.mrb[0].mxu0
    %1906 = vdwg.mxu0
    %s1907 = scalar_lea.vmem %s12, 64
    %v1908 = vld [vmem:[%s1907] sm:$0xff]
    %v1909 = vld [vmem:[%s1907 + $0x8] sm:$0xff]
    %v1910 = vld [vmem:[%s1907 + $0x10] sm:$0xff]
    %v1911 = vld [vmem:[%s1907 + $0x18] sm:$0xff]
    %v1912 = vld [vmem:[%s1907 + $0x20] sm:$0xff]
    %v1913 = vld [vmem:[%s1907 + $0x28] sm:$0xff]
    %v1914 = vld [vmem:[%s1907 + $0x30] sm:$0xff]
    %v1915 = vld [vmem:[%s1907 + $0x38] sm:$0xff]
    %1916 = vmatprep.subr.mxu0 0.0
    %1917 = vmatpush1.msra.mxu0 %v1908
    %1918 = vmatprep.subr.mxu0 0.0
    %1919 = vmatpush1.msra.mxu0 %v1909
    %1920 = vmatprep.subr.mxu0 0.0
    %1921 = vmatpush1.msra.mxu0 %v1910
    %1922 = vmatprep.subr.mxu0 0.0
    %1923 = vmatpush1.msra.mxu0 %v1911
    %1924 = vmatprep.subr.mxu0 0.0
    %1925 = vmatpush1.msra.mxu0 %v1912
    %1926 = vmatprep.subr.mxu0 0.0
    %1927 = vmatpush1.msra.mxu0 %v1913
    %1928 = vmatprep.subr.mxu0 0.0
    %1929 = vmatpush1.msra.mxu0 %v1914
    %1930 = vmatprep.subr.mxu0 0.0
    %1931 = vmatpush1.msra.mxu0 %v1915
    %1932 = vmatprep.subr.mxu0 0.0
    %1933 = vmatpush1.msra.mxu0 0.0
    %1934 = vmatprep.subr.mxu0 0.0
    %1935 = vmatpush1.msra.mxu0 0.0
    %1936 = vmatprep.subr.mxu0 0.0
    %1937 = vmatpush1.msra.mxu0 0.0
    %1938 = vmatprep.subr.mxu0 0.0
    %1939 = vmatpush1.msra.mxu0 0.0
    %1940 = vmatprep.subr.mxu0 0.0
    %1941 = vmatpush1.msra.mxu0 0.0
    %1942 = vmatprep.subr.mxu0 0.0
    %1943 = vmatpush1.msra.mxu0 0.0
    %1944 = vmatprep.subr.mxu0 0.0
    %1945 = vmatpush1.msra.mxu0 0.0
    %1946 = vmatprep.subr.mxu0 0.0
    %1947 = vmatpush1.msra.mxu0 0.0
    %1948 = vmatprep.subr.mxu0 0.0
    %1949 = vmatpush1.msra.mxu0 0.0
    %1950 = vmatprep.subr.mxu0 0.0
    %1951 = vmatpush1.msra.mxu0 0.0
    %1952 = vmatprep.subr.mxu0 0.0
    %1953 = vmatpush1.msra.mxu0 0.0
    %1954 = vmatprep.subr.mxu0 0.0
    %1955 = vmatpush1.msra.mxu0 0.0
    %1956 = vmatprep.subr.mxu0 0.0
    %1957 = vmatpush1.msra.mxu0 0.0
    %1958 = vmatprep.subr.mxu0 0.0
    %1959 = vmatpush1.msra.mxu0 0.0
    %1960 = vmatprep.subr.mxu0 0.0
    %1961 = vmatpush1.msra.mxu0 0.0
    %1962 = vmatprep.subr.mxu0 0.0
    %1963 = vmatpush1.msra.mxu0 0.0
    %1964 = vmatprep.subr.mxu0 0.0
    %1965 = vmatpush1.msra.mxu0 0.0
    %1966 = vmatprep.subr.mxu0 0.0
    %1967 = vmatpush1.msra.mxu0 0.0
    %1968 = vmatprep.subr.mxu0 0.0
    %1969 = vmatpush1.msra.mxu0 0.0
    %1970 = vmatprep.subr.mxu0 0.0
    %1971 = vmatpush1.msra.mxu0 0.0
    %1972 = vmatprep.subr.mxu0 0.0
    %1973 = vmatpush1.msra.mxu0 0.0
    %1974 = vmatprep.subr.mxu0 0.0
    %1975 = vmatpush1.msra.mxu0 0.0
    %1976 = vmatprep.subr.mxu0 0.0
    %1977 = vmatpush1.msra.mxu0 0.0
    %1978 = vmatprep.subr.mxu0 0.0
    %1979 = vmatpush1.msra.mxu0 0.0
    %1980 = vmatprep.mubr.f32.mxu0 0.0
    %1981 = vmatmul.mubr.f32.gmra.mrb[0].mxu0 %v1835
    %v1982 = vpop.f32.mrb[0].mxu0
    %v1983 = vadd.f32 0.0, %v1982
    %v1984 = vpop.f32.mrb[0].mxu0
    %1985 = vdwg.mxu0
    %v1986 = vmax.f32 %v1904, %v1983
    %v1988 = vsel %vm903, %v1823, 0
    %1990 = vmatprep.subr.mxu0 0.0
    %1991 = vmatpush1.msra.mxu0 %v1826
    %1992 = vmatprep.subr.mxu0 0.0
    %1993 = vmatpush1.msra.mxu0 %v1827
    %1994 = vmatprep.subr.mxu0 0.0
    %1995 = vmatpush1.msra.mxu0 %v1828
    %1996 = vmatprep.subr.mxu0 0.0
    %1997 = vmatpush1.msra.mxu0 %v1829
    %1998 = vmatprep.subr.mxu0 0.0
    %1999 = vmatpush1.msra.mxu0 %v1830
    %2000 = vmatprep.subr.mxu0 0.0
    %2001 = vmatpush1.msra.mxu0 %v1831
    %2002 = vmatprep.subr.mxu0 0.0
    %2003 = vmatpush1.msra.mxu0 %v1832
    %2004 = vmatprep.subr.mxu0 0.0
    %2005 = vmatpush1.msra.mxu0 %v1833
    %2006 = vmatprep.subr.mxu0 0.0
    %2007 = vmatpush1.msra.mxu0 0.0
    %2008 = vmatprep.subr.mxu0 0.0
    %2009 = vmatpush1.msra.mxu0 0.0
    %2010 = vmatprep.subr.mxu0 0.0
    %2011 = vmatpush1.msra.mxu0 0.0
    %2012 = vmatprep.subr.mxu0 0.0
    %2013 = vmatpush1.msra.mxu0 0.0
    %2014 = vmatprep.subr.mxu0 0.0
    %2015 = vmatpush1.msra.mxu0 0.0
    %2016 = vmatprep.subr.mxu0 0.0
    %2017 = vmatpush1.msra.mxu0 0.0
    %2018 = vmatprep.subr.mxu0 0.0
    %2019 = vmatpush1.msra.mxu0 0.0
    %2020 = vmatprep.subr.mxu0 0.0
    %2021 = vmatpush1.msra.mxu0 0.0
    %2022 = vmatprep.subr.mxu0 0.0
    %2023 = vmatpush1.msra.mxu0 0.0
    %2024 = vmatprep.subr.mxu0 0.0
    %2025 = vmatpush1.msra.mxu0 0.0
    %2026 = vmatprep.subr.mxu0 0.0
    %2027 = vmatpush1.msra.mxu0 0.0
    %2028 = vmatprep.subr.mxu0 0.0
    %2029 = vmatpush1.msra.mxu0 0.0
    %2030 = vmatprep.subr.mxu0 0.0
    %2031 = vmatpush1.msra.mxu0 0.0
    %2032 = vmatprep.subr.mxu0 0.0
    %2033 = vmatpush1.msra.mxu0 0.0
    %2034 = vmatprep.subr.mxu0 0.0
    %2035 = vmatpush1.msra.mxu0 0.0
    %2036 = vmatprep.subr.mxu0 0.0
    %2037 = vmatpush1.msra.mxu0 0.0
    %2038 = vmatprep.subr.mxu0 0.0
    %2039 = vmatpush1.msra.mxu0 0.0
    %2040 = vmatprep.subr.mxu0 0.0
    %2041 = vmatpush1.msra.mxu0 0.0
    %2042 = vmatprep.subr.mxu0 0.0
    %2043 = vmatpush1.msra.mxu0 0.0
    %2044 = vmatprep.subr.mxu0 0.0
    %2045 = vmatpush1.msra.mxu0 0.0
    %2046 = vmatprep.subr.mxu0 0.0
    %2047 = vmatpush1.msra.mxu0 0.0
    %2048 = vmatprep.subr.mxu0 0.0
    %2049 = vmatpush1.msra.mxu0 0.0
    %2050 = vmatprep.subr.mxu0 0.0
    %2051 = vmatpush1.msra.mxu0 0.0
    %2052 = vmatprep.subr.mxu0 0.0
    %2053 = vmatpush1.msra.mxu0 0.0
    %2054 = vmatprep.mubr.f32.mxu0 0.0
    %2055 = vmatmul.mubr.f32.gmra.mrb[0].mxu0 %v1988
    %v2056 = vpop.f32.mrb[0].mxu0
    %v2057 = vadd.f32 0.0, %v2056
    %v2058 = vpop.f32.mrb[0].mxu0
    %2059 = vdwg.mxu0
    %2060 = vmatprep.subr.mxu0 0.0
    %2061 = vmatpush1.msra.mxu0 %v1908
    %2062 = vmatprep.subr.mxu0 0.0
    %2063 = vmatpush1.msra.mxu0 %v1909
    %2064 = vmatprep.subr.mxu0 0.0
    %2065 = vmatpush1.msra.mxu0 %v1910
    %2066 = vmatprep.subr.mxu0 0.0
    %2067 = vmatpush1.msra.mxu0 %v1911
    %2068 = vmatprep.subr.mxu0 0.0
    %2069 = vmatpush1.msra.mxu0 %v1912
    %2070 = vmatprep.subr.mxu0 0.0
    %2071 = vmatpush1.msra.mxu0 %v1913
    %2072 = vmatprep.subr.mxu0 0.0
    %2073 = vmatpush1.msra.mxu0 %v1914
    %2074 = vmatprep.subr.mxu0 0.0
    %2075 = vmatpush1.msra.mxu0 %v1915
    %2076 = vmatprep.subr.mxu0 0.0
    %2077 = vmatpush1.msra.mxu0 0.0
    %2078 = vmatprep.subr.mxu0 0.0
    %2079 = vmatpush1.msra.mxu0 0.0
    %2080 = vmatprep.subr.mxu0 0.0
    %2081 = vmatpush1.msra.mxu0 0.0
    %2082 = vmatprep.subr.mxu0 0.0
    %2083 = vmatpush1.msra.mxu0 0.0
    %2084 = vmatprep.subr.mxu0 0.0
    %2085 = vmatpush1.msra.mxu0 0.0
    %2086 = vmatprep.subr.mxu0 0.0
    %2087 = vmatpush1.msra.mxu0 0.0
    %2088 = vmatprep.subr.mxu0 0.0
    %2089 = vmatpush1.msra.mxu0 0.0
    %2090 = vmatprep.subr.mxu0 0.0
    %2091 = vmatpush1.msra.mxu0 0.0
    %2092 = vmatprep.subr.mxu0 0.0
    %2093 = vmatpush1.msra.mxu0 0.0
    %2094 = vmatprep.subr.mxu0 0.0
    %2095 = vmatpush1.msra.mxu0 0.0
    %2096 = vmatprep.subr.mxu0 0.0
    %2097 = vmatpush1.msra.mxu0 0.0
    %2098 = vmatprep.subr.mxu0 0.0
    %2099 = vmatpush1.msra.mxu0 0.0
    %2100 = vmatprep.subr.mxu0 0.0
    %2101 = vmatpush1.msra.mxu0 0.0
    %2102 = vmatprep.subr.mxu0 0.0
    %2103 = vmatpush1.msra.mxu0 0.0
    %2104 = vmatprep.subr.mxu0 0.0
    %2105 = vmatpush1.msra.mxu0 0.0
    %2106 = vmatprep.subr.mxu0 0.0
    %2107 = vmatpush1.msra.mxu0 0.0
    %2108 = vmatprep.subr.mxu0 0.0
    %2109 = vmatpush1.msra.mxu0 0.0
    %2110 = vmatprep.subr.mxu0 0.0
    %2111 = vmatpush1.msra.mxu0 0.0
    %2112 = vmatprep.subr.mxu0 0.0
    %2113 = vmatpush1.msra.mxu0 0.0
    %2114 = vmatprep.subr.mxu0 0.0
    %2115 = vmatpush1.msra.mxu0 0.0
    %2116 = vmatprep.subr.mxu0 0.0
    %2117 = vmatpush1.msra.mxu0 0.0
    %2118 = vmatprep.subr.mxu0 0.0
    %2119 = vmatpush1.msra.mxu0 0.0
    %2120 = vmatprep.subr.mxu0 0.0
    %2121 = vmatpush1.msra.mxu0 0.0
    %2122 = vmatprep.subr.mxu0 0.0
    %2123 = vmatpush1.msra.mxu0 0.0
    %2124 = vmatprep.mubr.f32.mxu0 0.0
    %2125 = vmatmul.mubr.f32.gmra.mrb[0].mxu0 %v1988
    %v2126 = vpop.f32.mrb[0].mxu0
    %v2127 = vadd.f32 0.0, %v2126
    %v2128 = vpop.f32.mrb[0].mxu0
    %2129 = vdwg.mxu0
    %v2130 = vmax.f32 %v2057, %v2127
    %v2131 = vmax.f32 %v1986, %v2130
    %v2132 = vld [vmem:[%s13] sm:$0xff]
    %vm2133 = vcmask 64512
    %v2135 = vsel %vm2133, %v2132, 0
    %2137 = vmatprep.subr.mxu0 0.0
    %2138 = vmatpush1.msra.mxu0 %v2131
    %2139 = vmatprep.subr.mxu0 0.0
    %2140 = vmatpush1.msra.mxu0 0.0
    %2141 = vmatprep.subr.mxu0 0.0
    %2142 = vmatpush1.msra.mxu0 0.0
    %2143 = vmatprep.subr.mxu0 0.0
    %2144 = vmatpush1.msra.mxu0 0.0
    %2145 = vmatprep.subr.mxu0 0.0
    %2146 = vmatpush1.msra.mxu0 0.0
    %2147 = vmatprep.subr.mxu0 0.0
    %2148 = vmatpush1.msra.mxu0 0.0
    %2149 = vmatprep.subr.mxu0 0.0
    %2150 = vmatpush1.msra.mxu0 0.0
    %2151 = vmatprep.subr.mxu0 0.0
    %2152 = vmatpush1.msra.mxu0 0.0
    %2153 = vmatprep.subr.mxu0 0.0
    %2154 = vmatpush1.msra.mxu0 0.0
    %2155 = vmatprep.subr.mxu0 0.0
    %2156 = vmatpush1.msra.mxu0 0.0
    %2157 = vmatprep.subr.mxu0 0.0
    %2158 = vmatpush1.msra.mxu0 0.0
    %2159 = vmatprep.subr.mxu0 0.0
    %2160 = vmatpush1.msra.mxu0 0.0
    %2161 = vmatprep.subr.mxu0 0.0
    %2162 = vmatpush1.msra.mxu0 0.0
    %2163 = vmatprep.subr.mxu0 0.0
    %2164 = vmatpush1.msra.mxu0 0.0
    %2165 = vmatprep.subr.mxu0 0.0
    %2166 = vmatpush1.msra.mxu0 0.0
    %2167 = vmatprep.subr.mxu0 0.0
    %2168 = vmatpush1.msra.mxu0 0.0
    %2169 = vmatprep.subr.mxu0 0.0
    %2170 = vmatpush1.msra.mxu0 0.0
    %2171 = vmatprep.subr.mxu0 0.0
    %2172 = vmatpush1.msra.mxu0 0.0
    %2173 = vmatprep.subr.mxu0 0.0
    %2174 = vmatpush1.msra.mxu0 0.0
    %2175 = vmatprep.subr.mxu0 0.0
    %2176 = vmatpush1.msra.mxu0 0.0
    %2177 = vmatprep.subr.mxu0 0.0
    %2178 = vmatpush1.msra.mxu0 0.0
    %2179 = vmatprep.subr.mxu0 0.0
    %2180 = vmatpush1.msra.mxu0 0.0
    %2181 = vmatprep.subr.mxu0 0.0
    %2182 = vmatpush1.msra.mxu0 0.0
    %2183 = vmatprep.subr.mxu0 0.0
    %2184 = vmatpush1.msra.mxu0 0.0
    %2185 = vmatprep.subr.mxu0 0.0
    %2186 = vmatpush1.msra.mxu0 0.0
    %2187 = vmatprep.subr.mxu0 0.0
    %2188 = vmatpush1.msra.mxu0 0.0
    %2189 = vmatprep.subr.mxu0 0.0
    %2190 = vmatpush1.msra.mxu0 0.0
    %2191 = vmatprep.subr.mxu0 0.0
    %2192 = vmatpush1.msra.mxu0 0.0
    %2193 = vmatprep.subr.mxu0 0.0
    %2194 = vmatpush1.msra.mxu0 0.0
    %2195 = vmatprep.subr.mxu0 0.0
    %2196 = vmatpush1.msra.mxu0 0.0
    %2197 = vmatprep.subr.mxu0 0.0
    %2198 = vmatpush1.msra.mxu0 0.0
    %2199 = vmatprep.subr.mxu0 0.0
    %2200 = vmatpush1.msra.mxu0 0.0
    %2201 = vmatprep.mubr.f32.mxu0 0.0
    %2202 = vmatmul.mubr.f32.gmra.mrb[0].mxu0 %v2135
    %v2203 = vpop.f32.mrb[0].mxu0
    %v2204 = vadd.f32 0.0, %v2203
    %v2205 = vpop.f32.mrb[0].mxu0
    %2206 = vdwg.mxu0
    %v2207 = vld [vmem:[%s14] sm:$0xff]
    %v2208 = vld [vmem:[%s14 + $0x8] sm:$0xff]
    %v2209 = vld [vmem:[%s14 + $0x10] sm:$0xff]
    %v2210 = vld [vmem:[%s14 + $0x18] sm:$0xff]
    %s2211 = scalar_lea.vmem %s13, 8
    %v2212 = vld [vmem:[%s2211] sm:$0xff]
    %v2214 = vsel %vm2133, %v2212, 0
    %2216 = vmatprep.subr.mxu0 0.0
    %2217 = vmatpush1.msra.mxu0 %v2131
    %2218 = vmatprep.subr.mxu0 0.0
    %2219 = vmatpush1.msra.mxu0 0.0
    %2220 = vmatprep.subr.mxu0 0.0
    %2221 = vmatpush1.msra.mxu0 0.0
    %2222 = vmatprep.subr.mxu0 0.0
    %2223 = vmatpush1.msra.mxu0 0.0
    %2224 = vmatprep.subr.mxu0 0.0
    %2225 = vmatpush1.msra.mxu0 0.0
    %2226 = vmatprep.subr.mxu0 0.0
    %2227 = vmatpush1.msra.mxu0 0.0
    %2228 = vmatprep.subr.mxu0 0.0
    %2229 = vmatpush1.msra.mxu0 0.0
    %2230 = vmatprep.subr.mxu0 0.0
    %2231 = vmatpush1.msra.mxu0 0.0
    %2232 = vmatprep.subr.mxu0 0.0
    %2233 = vmatpush1.msra.mxu0 0.0
    %2234 = vmatprep.subr.mxu0 0.0
    %2235 = vmatpush1.msra.mxu0 0.0
    %2236 = vmatprep.subr.mxu0 0.0
    %2237 = vmatpush1.msra.mxu0 0.0
    %2238 = vmatprep.subr.mxu0 0.0
    %2239 = vmatpush1.msra.mxu0 0.0
    %2240 = vmatprep.subr.mxu0 0.0
    %2241 = vmatpush1.msra.mxu0 0.0
    %2242 = vmatprep.subr.mxu0 0.0
    %2243 = vmatpush1.msra.mxu0 0.0
    %2244 = vmatprep.subr.mxu0 0.0
    %2245 = vmatpush1.msra.mxu0 0.0
    %2246 = vmatprep.subr.mxu0 0.0
    %2247 = vmatpush1.msra.mxu0 0.0
    %2248 = vmatprep.subr.mxu0 0.0
    %2249 = vmatpush1.msra.mxu0 0.0
    %2250 = vmatprep.subr.mxu0 0.0
    %2251 = vmatpush1.msra.mxu0 0.0
    %2252 = vmatprep.subr.mxu0 0.0
    %2253 = vmatpush1.msra.mxu0 0.0
    %2254 = vmatprep.subr.mxu0 0.0
    %2255 = vmatpush1.msra.mxu0 0.0
    %2256 = vmatprep.subr.mxu0 0.0
    %2257 = vmatpush1.msra.mxu0 0.0
    %2258 = vmatprep.subr.mxu0 0.0
    %2259 = vmatpush1.msra.mxu0 0.0
    %2260 = vmatprep.subr.mxu0 0.0
    %2261 = vmatpush1.msra.mxu0 0.0
    %2262 = vmatprep.subr.mxu0 0.0
    %2263 = vmatpush1.msra.mxu0 0.0
    %2264 = vmatprep.subr.mxu0 0.0
    %2265 = vmatpush1.msra.mxu0 0.0
    %2266 = vmatprep.subr.mxu0 0.0
    %2267 = vmatpush1.msra.mxu0 0.0
    %2268 = vmatprep.subr.mxu0 0.0
    %2269 = vmatpush1.msra.mxu0 0.0
    %2270 = vmatprep.subr.mxu0 0.0
    %2271 = vmatpush1.msra.mxu0 0.0
    %2272 = vmatprep.subr.mxu0 0.0
    %2273 = vmatpush1.msra.mxu0 0.0
    %2274 = vmatprep.subr.mxu0 0.0
    %2275 = vmatpush1.msra.mxu0 0.0
    %2276 = vmatprep.subr.mxu0 0.0
    %2277 = vmatpush1.msra.mxu0 0.0
    %2278 = vmatprep.subr.mxu0 0.0
    %2279 = vmatpush1.msra.mxu0 0.0
    %2280 = vmatprep.mubr.f32.mxu0 0.0
    %2281 = vmatmul.mubr.f32.gmra.mrb[0].mxu0 %v2214
    %v2282 = vpop.f32.mrb[0].mxu0
    %v2283 = vadd.f32 0.0, %v2282
    %v2284 = vpop.f32.mrb[0].mxu0
    %2285 = vdwg.mxu0
    %s2286 = scalar_lea.vmem %s14, 32
    %v2287 = vld [vmem:[%s2286] sm:$0xff]
    %v2288 = vld [vmem:[%s2286 + $0x8] sm:$0xff]
    %v2289 = vld [vmem:[%s2286 + $0x10] sm:$0xff]
    %v2290 = vld [vmem:[%s2286 + $0x18] sm:$0xff]
    %v2292 = vsel %vm201, %v2283, 0
    %2294 = vmatprep.subr.mxu0 0.0
    %2295 = vmatpush1.msra.mxu0 %v2287
    %2296 = vmatprep.subr.mxu0 0.0
    %2297 = vmatpush1.msra.mxu0 %v2288
    %2298 = vmatprep.subr.mxu0 0.0
    %2299 = vmatpush1.msra.mxu0 %v2289
    %2300 = vmatprep.subr.mxu0 0.0
    %2301 = vmatpush1.msra.mxu0 %v2290
    %2302 = vmatprep.subr.mxu0 0.0
    %2303 = vmatpush1.msra.mxu0 0.0
    %2304 = vmatprep.subr.mxu0 0.0
    %2305 = vmatpush1.msra.mxu0 0.0
    %2306 = vmatprep.subr.mxu0 0.0
    %2307 = vmatpush1.msra.mxu0 0.0
    %2308 = vmatprep.subr.mxu0 0.0
    %2309 = vmatpush1.msra.mxu0 0.0
    %2310 = vmatprep.subr.mxu0 0.0
    %2311 = vmatpush1.msra.mxu0 0.0
    %2312 = vmatprep.subr.mxu0 0.0
    %2313 = vmatpush1.msra.mxu0 0.0
    %2314 = vmatprep.subr.mxu0 0.0
    %2315 = vmatpush1.msra.mxu0 0.0
    %2316 = vmatprep.subr.mxu0 0.0
    %2317 = vmatpush1.msra.mxu0 0.0
    %2318 = vmatprep.subr.mxu0 0.0
    %2319 = vmatpush1.msra.mxu0 0.0
    %2320 = vmatprep.subr.mxu0 0.0
    %2321 = vmatpush1.msra.mxu0 0.0
    %2322 = vmatprep.subr.mxu0 0.0
    %2323 = vmatpush1.msra.mxu0 0.0
    %2324 = vmatprep.subr.mxu0 0.0
    %2325 = vmatpush1.msra.mxu0 0.0
    %2326 = vmatprep.subr.mxu0 0.0
    %2327 = vmatpush1.msra.mxu0 0.0
    %2328 = vmatprep.subr.mxu0 0.0
    %2329 = vmatpush1.msra.mxu0 0.0
    %2330 = vmatprep.subr.mxu0 0.0
    %2331 = vmatpush1.msra.mxu0 0.0
    %2332 = vmatprep.subr.mxu0 0.0
    %2333 = vmatpush1.msra.mxu0 0.0
    %2334 = vmatprep.subr.mxu0 0.0
    %2335 = vmatpush1.msra.mxu0 0.0
    %2336 = vmatprep.subr.mxu0 0.0
    %2337 = vmatpush1.msra.mxu0 0.0
    %2338 = vmatprep.subr.mxu0 0.0
    %2339 = vmatpush1.msra.mxu0 0.0
    %2340 = vmatprep.subr.mxu0 0.0
    %2341 = vmatpush1.msra.mxu0 0.0
    %2342 = vmatprep.subr.mxu0 0.0
    %2343 = vmatpush1.msra.mxu0 0.0
    %2344 = vmatprep.subr.mxu0 0.0
    %2345 = vmatpush1.msra.mxu0 0.0
    %2346 = vmatprep.subr.mxu0 0.0
    %2347 = vmatpush1.msra.mxu0 0.0
    %2348 = vmatprep.subr.mxu0 0.0
    %2349 = vmatpush1.msra.mxu0 0.0
    %2350 = vmatprep.subr.mxu0 0.0
    %2351 = vmatpush1.msra.mxu0 0.0
    %2352 = vmatprep.subr.mxu0 0.0
    %2353 = vmatpush1.msra.mxu0 0.0
    %2354 = vmatprep.subr.mxu0 0.0
    %2355 = vmatpush1.msra.mxu0 0.0
    %2356 = vmatprep.subr.mxu0 0.0
    %2357 = vmatpush1.msra.mxu0 0.0
    %2358 = vmatprep.mubr.f32.mxu0 0.0
    %2359 = vmatmul.mubr.f32.gmra.mrb[0].mxu0 %v2292
    %v2360 = vpop.f32.mrb[0].mxu0
    %v2361 = vadd.f32 0.0, %v2360
    %v2362 = vpop.f32.mrb[0].mxu0
    %2363 = vdwg.mxu0
    %v2365 = vsel %vm201, %v2204, 0
    %2367 = vmatprep.subr.mxu0 0.0
    %2368 = vmatpush1.msra.mxu0 %v2207
    %2369 = vmatprep.subr.mxu0 0.0
    %2370 = vmatpush1.msra.mxu0 %v2208
    %2371 = vmatprep.subr.mxu0 0.0
    %2372 = vmatpush1.msra.mxu0 %v2209
    %2373 = vmatprep.subr.mxu0 0.0
    %2374 = vmatpush1.msra.mxu0 %v2210
    %2375 = vmatprep.subr.mxu0 0.0
    %2376 = vmatpush1.msra.mxu0 0.0
    %2377 = vmatprep.subr.mxu0 0.0
    %2378 = vmatpush1.msra.mxu0 0.0
    %2379 = vmatprep.subr.mxu0 0.0
    %2380 = vmatpush1.msra.mxu0 0.0
    %2381 = vmatprep.subr.mxu0 0.0
    %2382 = vmatpush1.msra.mxu0 0.0
    %2383 = vmatprep.subr.mxu0 0.0
    %2384 = vmatpush1.msra.mxu0 0.0
    %2385 = vmatprep.subr.mxu0 0.0
    %2386 = vmatpush1.msra.mxu0 0.0
    %2387 = vmatprep.subr.mxu0 0.0
    %2388 = vmatpush1.msra.mxu0 0.0
    %2389 = vmatprep.subr.mxu0 0.0
    %2390 = vmatpush1.msra.mxu0 0.0
    %2391 = vmatprep.subr.mxu0 0.0
    %2392 = vmatpush1.msra.mxu0 0.0
    %2393 = vmatprep.subr.mxu0 0.0
    %2394 = vmatpush1.msra.mxu0 0.0
    %2395 = vmatprep.subr.mxu0 0.0
    %2396 = vmatpush1.msra.mxu0 0.0
    %2397 = vmatprep.subr.mxu0 0.0
    %2398 = vmatpush1.msra.mxu0 0.0
    %2399 = vmatprep.subr.mxu0 0.0
    %2400 = vmatpush1.msra.mxu0 0.0
    %2401 = vmatprep.subr.mxu0 0.0
    %2402 = vmatpush1.msra.mxu0 0.0
    %2403 = vmatprep.subr.mxu0 0.0
    %2404 = vmatpush1.msra.mxu0 0.0
    %2405 = vmatprep.subr.mxu0 0.0
    %2406 = vmatpush1.msra.mxu0 0.0
    %2407 = vmatprep.subr.mxu0 0.0
    %2408 = vmatpush1.msra.mxu0 0.0
    %2409 = vmatprep.subr.mxu0 0.0
    %2410 = vmatpush1.msra.mxu0 0.0
    %2411 = vmatprep.subr.mxu0 0.0
    %2412 = vmatpush1.msra.mxu0 0.0
    %2413 = vmatprep.subr.mxu0 0.0
    %2414 = vmatpush1.msra.mxu0 0.0
    %2415 = vmatprep.subr.mxu0 0.0
    %2416 = vmatpush1.msra.mxu0 0.0
    %2417 = vmatprep.subr.mxu0 0.0
    %2418 = vmatpush1.msra.mxu0 0.0
    %2419 = vmatprep.subr.mxu0 0.0
    %2420 = vmatpush1.msra.mxu0 0.0
    %2421 = vmatprep.subr.mxu0 0.0
    %2422 = vmatpush1.msra.mxu0 0.0
    %2423 = vmatprep.subr.mxu0 0.0
    %2424 = vmatpush1.msra.mxu0 0.0
    %2425 = vmatprep.subr.mxu0 0.0
    %2426 = vmatpush1.msra.mxu0 0.0
    %2427 = vmatprep.subr.mxu0 0.0
    %2428 = vmatpush1.msra.mxu0 0.0
    %2429 = vmatprep.subr.mxu0 0.0
    %2430 = vmatpush1.msra.mxu0 0.0
    %2431 = vmatprep.mubr.f32.mxu0 0.0
    %2432 = vmatmul.mubr.f32.gmra.mrb[0].mxu0 %v2365
    %v2433 = vpop.f32.mrb[0].mxu0
    %v2434 = vadd.f32 %v2361, %v2433
    %v2435 = vpop.f32.mrb[0].mxu0
    %2436 = vdwg.mxu0
    %s2437 = scalar_lea.vmem %s13, 16
    %v2438 = vld [vmem:[%s2437] sm:$0xff]
    %v2440 = vsel %vm2133, %v2438, 0
    %2442 = vmatprep.subr.mxu0 0.0
    %2443 = vmatpush1.msra.mxu0 %v2131
    %2444 = vmatprep.subr.mxu0 0.0
    %2445 = vmatpush1.msra.mxu0 0.0
    %2446 = vmatprep.subr.mxu0 0.0
    %2447 = vmatpush1.msra.mxu0 0.0
    %2448 = vmatprep.subr.mxu0 0.0
    %2449 = vmatpush1.msra.mxu0 0.0
    %2450 = vmatprep.subr.mxu0 0.0
    %2451 = vmatpush1.msra.mxu0 0.0
    %2452 = vmatprep.subr.mxu0 0.0
    %2453 = vmatpush1.msra.mxu0 0.0
    %2454 = vmatprep.subr.mxu0 0.0
    %2455 = vmatpush1.msra.mxu0 0.0
    %2456 = vmatprep.subr.mxu0 0.0
    %2457 = vmatpush1.msra.mxu0 0.0
    %2458 = vmatprep.subr.mxu0 0.0
    %2459 = vmatpush1.msra.mxu0 0.0
    %2460 = vmatprep.subr.mxu0 0.0
    %2461 = vmatpush1.msra.mxu0 0.0
    %2462 = vmatprep.subr.mxu0 0.0
    %2463 = vmatpush1.msra.mxu0 0.0
    %2464 = vmatprep.subr.mxu0 0.0
    %2465 = vmatpush1.msra.mxu0 0.0
    %2466 = vmatprep.subr.mxu0 0.0
    %2467 = vmatpush1.msra.mxu0 0.0
    %2468 = vmatprep.subr.mxu0 0.0
    %2469 = vmatpush1.msra.mxu0 0.0
    %2470 = vmatprep.subr.mxu0 0.0
    %2471 = vmatpush1.msra.mxu0 0.0
    %2472 = vmatprep.subr.mxu0 0.0
    %2473 = vmatpush1.msra.mxu0 0.0
    %2474 = vmatprep.subr.mxu0 0.0
    %2475 = vmatpush1.msra.mxu0 0.0
    %2476 = vmatprep.subr.mxu0 0.0
    %2477 = vmatpush1.msra.mxu0 0.0
    %2478 = vmatprep.subr.mxu0 0.0
    %2479 = vmatpush1.msra.mxu0 0.0
    %2480 = vmatprep.subr.mxu0 0.0
    %2481 = vmatpush1.msra.mxu0 0.0
    %2482 = vmatprep.subr.mxu0 0.0
    %2483 = vmatpush1.msra.mxu0 0.0
    %2484 = vmatprep.subr.mxu0 0.0
    %2485 = vmatpush1.msra.mxu0 0.0
    %2486 = vmatprep.subr.mxu0 0.0
    %2487 = vmatpush1.msra.mxu0 0.0
    %2488 = vmatprep.subr.mxu0 0.0
    %2489 = vmatpush1.msra.mxu0 0.0
    %2490 = vmatprep.subr.mxu0 0.0
    %2491 = vmatpush1.msra.mxu0 0.0
    %2492 = vmatprep.subr.mxu0 0.0
    %2493 = vmatpush1.msra.mxu0 0.0
    %2494 = vmatprep.subr.mxu0 0.0
    %2495 = vmatpush1.msra.mxu0 0.0
    %2496 = vmatprep.subr.mxu0 0.0
    %2497 = vmatpush1.msra.mxu0 0.0
    %2498 = vmatprep.subr.mxu0 0.0
    %2499 = vmatpush1.msra.mxu0 0.0
    %2500 = vmatprep.subr.mxu0 0.0
    %2501 = vmatpush1.msra.mxu0 0.0
    %2502 = vmatprep.subr.mxu0 0.0
    %2503 = vmatpush1.msra.mxu0 0.0
    %2504 = vmatprep.subr.mxu0 0.0
    %2505 = vmatpush1.msra.mxu0 0.0
    %2506 = vmatprep.mubr.f32.mxu0 0.0
    %2507 = vmatmul.mubr.f32.gmra.mrb[0].mxu0 %v2440
    %v2508 = vpop.f32.mrb[0].mxu0
    %v2509 = vadd.f32 0.0, %v2508
    %v2510 = vpop.f32.mrb[0].mxu0
    %2511 = vdwg.mxu0
    %s2512 = scalar_lea.vmem %s14, 64
    %v2513 = vld [vmem:[%s2512] sm:$0xff]
    %v2514 = vld [vmem:[%s2512 + $0x8] sm:$0xff]
    %v2515 = vld [vmem:[%s2512 + $0x10] sm:$0xff]
    %v2516 = vld [vmem:[%s2512 + $0x18] sm:$0xff]
    %v2518 = vsel %vm201, %v2509, 0
    %2520 = vmatprep.subr.mxu0 0.0
    %2521 = vmatpush1.msra.mxu0 %v2513
    %2522 = vmatprep.subr.mxu0 0.0
    %2523 = vmatpush1.msra.mxu0 %v2514
    %2524 = vmatprep.subr.mxu0 0.0
    %2525 = vmatpush1.msra.mxu0 %v2515
    %2526 = vmatprep.subr.mxu0 0.0
    %2527 = vmatpush1.msra.mxu0 %v2516
    %2528 = vmatprep.subr.mxu0 0.0
    %2529 = vmatpush1.msra.mxu0 0.0
    %2530 = vmatprep.subr.mxu0 0.0
    %2531 = vmatpush1.msra.mxu0 0.0
    %2532 = vmatprep.subr.mxu0 0.0
    %2533 = vmatpush1.msra.mxu0 0.0
    %2534 = vmatprep.subr.mxu0 0.0
    %2535 = vmatpush1.msra.mxu0 0.0
    %2536 = vmatprep.subr.mxu0 0.0
    %2537 = vmatpush1.msra.mxu0 0.0
    %2538 = vmatprep.subr.mxu0 0.0
    %2539 = vmatpush1.msra.mxu0 0.0
    %2540 = vmatprep.subr.mxu0 0.0
    %2541 = vmatpush1.msra.mxu0 0.0
    %2542 = vmatprep.subr.mxu0 0.0
    %2543 = vmatpush1.msra.mxu0 0.0
    %2544 = vmatprep.subr.mxu0 0.0
    %2545 = vmatpush1.msra.mxu0 0.0
    %2546 = vmatprep.subr.mxu0 0.0
    %2547 = vmatpush1.msra.mxu0 0.0
    %2548 = vmatprep.subr.mxu0 0.0
    %2549 = vmatpush1.msra.mxu0 0.0
    %2550 = vmatprep.subr.mxu0 0.0
    %2551 = vmatpush1.msra.mxu0 0.0
    %2552 = vmatprep.subr.mxu0 0.0
    %2553 = vmatpush1.msra.mxu0 0.0
    %2554 = vmatprep.subr.mxu0 0.0
    %2555 = vmatpush1.msra.mxu0 0.0
    %2556 = vmatprep.subr.mxu0 0.0
    %2557 = vmatpush1.msra.mxu0 0.0
    %2558 = vmatprep.subr.mxu0 0.0
    %2559 = vmatpush1.msra.mxu0 0.0
    %2560 = vmatprep.subr.mxu0 0.0
    %2561 = vmatpush1.msra.mxu0 0.0
    %2562 = vmatprep.subr.mxu0 0.0
    %2563 = vmatpush1.msra.mxu0 0.0
    %2564 = vmatprep.subr.mxu0 0.0
    %2565 = vmatpush1.msra.mxu0 0.0
    %2566 = vmatprep.subr.mxu0 0.0
    %2567 = vmatpush1.msra.mxu0 0.0
    %2568 = vmatprep.subr.mxu0 0.0
    %2569 = vmatpush1.msra.mxu0 0.0
    %2570 = vmatprep.subr.mxu0 0.0
    %2571 = vmatpush1.msra.mxu0 0.0
    %2572 = vmatprep.subr.mxu0 0.0
    %2573 = vmatpush1.msra.mxu0 0.0
    %2574 = vmatprep.subr.mxu0 0.0
    %2575 = vmatpush1.msra.mxu0 0.0
    %2576 = vmatprep.subr.mxu0 0.0
    %2577 = vmatpush1.msra.mxu0 0.0
    %2578 = vmatprep.subr.mxu0 0.0
    %2579 = vmatpush1.msra.mxu0 0.0
    %2580 = vmatprep.subr.mxu0 0.0
    %2581 = vmatpush1.msra.mxu0 0.0
    %2582 = vmatprep.subr.mxu0 0.0
    %2583 = vmatpush1.msra.mxu0 0.0
    %2584 = vmatprep.mubr.f32.mxu0 0.0
    %2585 = vmatmul.mubr.f32.gmra.mrb[0].mxu0 %v2518
    %v2586 = vpop.f32.mrb[0].mxu0
    %v2587 = vadd.f32 0.0, %v2586
    %v2588 = vpop.f32.mrb[0].mxu0
    %2589 = vdwg.mxu0
    %v2590 = vadd.f32 %v2434, %v2587
    %s2591 = scalar_lea.vmem %s13, 24
    %v2592 = vld [vmem:[%s2591] sm:$0xff]
    %v2594 = vsel %vm2133, %v2592, 0
    %2596 = vmatprep.subr.mxu0 0.0
    %2597 = vmatpush1.msra.mxu0 %v2131
    %2598 = vmatprep.subr.mxu0 0.0
    %2599 = vmatpush1.msra.mxu0 0.0
    %2600 = vmatprep.subr.mxu0 0.0
    %2601 = vmatpush1.msra.mxu0 0.0
    %2602 = vmatprep.subr.mxu0 0.0
    %2603 = vmatpush1.msra.mxu0 0.0
    %2604 = vmatprep.subr.mxu0 0.0
    %2605 = vmatpush1.msra.mxu0 0.0
    %2606 = vmatprep.subr.mxu0 0.0
    %2607 = vmatpush1.msra.mxu0 0.0
    %2608 = vmatprep.subr.mxu0 0.0
    %2609 = vmatpush1.msra.mxu0 0.0
    %2610 = vmatprep.subr.mxu0 0.0
    %2611 = vmatpush1.msra.mxu0 0.0
    %2612 = vmatprep.subr.mxu0 0.0
    %2613 = vmatpush1.msra.mxu0 0.0
    %2614 = vmatprep.subr.mxu0 0.0
    %2615 = vmatpush1.msra.mxu0 0.0
    %2616 = vmatprep.subr.mxu0 0.0
    %2617 = vmatpush1.msra.mxu0 0.0
    %2618 = vmatprep.subr.mxu0 0.0
    %2619 = vmatpush1.msra.mxu0 0.0
    %2620 = vmatprep.subr.mxu0 0.0
    %2621 = vmatpush1.msra.mxu0 0.0
    %2622 = vmatprep.subr.mxu0 0.0
    %2623 = vmatpush1.msra.mxu0 0.0
    %2624 = vmatprep.subr.mxu0 0.0
    %2625 = vmatpush1.msra.mxu0 0.0
    %2626 = vmatprep.subr.mxu0 0.0
    %2627 = vmatpush1.msra.mxu0 0.0
    %2628 = vmatprep.subr.mxu0 0.0
    %2629 = vmatpush1.msra.mxu0 0.0
    %2630 = vmatprep.subr.mxu0 0.0
    %2631 = vmatpush1.msra.mxu0 0.0
    %2632 = vmatprep.subr.mxu0 0.0
    %2633 = vmatpush1.msra.mxu0 0.0
    %2634 = vmatprep.subr.mxu0 0.0
    %2635 = vmatpush1.msra.mxu0 0.0
    %2636 = vmatprep.subr.mxu0 0.0
    %2637 = vmatpush1.msra.mxu0 0.0
    %2638 = vmatprep.subr.mxu0 0.0
    %2639 = vmatpush1.msra.mxu0 0.0
    %2640 = vmatprep.subr.mxu0 0.0
    %2641 = vmatpush1.msra.mxu0 0.0
    %2642 = vmatprep.subr.mxu0 0.0
    %2643 = vmatpush1.msra.mxu0 0.0
    %2644 = vmatprep.subr.mxu0 0.0
    %2645 = vmatpush1.msra.mxu0 0.0
    %2646 = vmatprep.subr.mxu0 0.0
    %2647 = vmatpush1.msra.mxu0 0.0
    %2648 = vmatprep.subr.mxu0 0.0
    %2649 = vmatpush1.msra.mxu0 0.0
    %2650 = vmatprep.subr.mxu0 0.0
    %2651 = vmatpush1.msra.mxu0 0.0
    %2652 = vmatprep.subr.mxu0 0.0
    %2653 = vmatpush1.msra.mxu0 0.0
    %2654 = vmatprep.subr.mxu0 0.0
    %2655 = vmatpush1.msra.mxu0 0.0
    %2656 = vmatprep.subr.mxu0 0.0
    %2657 = vmatpush1.msra.mxu0 0.0
    %2658 = vmatprep.subr.mxu0 0.0
    %2659 = vmatpush1.msra.mxu0 0.0
    %2660 = vmatprep.mubr.f32.mxu0 0.0
    %2661 = vmatmul.mubr.f32.gmra.mrb[0].mxu0 %v2594
    %v2662 = vpop.f32.mrb[0].mxu0
    %v2663 = vadd.f32 0.0, %v2662
    %v2664 = vpop.f32.mrb[0].mxu0
    %2665 = vdwg.mxu0
    %s2666 = scalar_lea.vmem %s14, 96
    %v2667 = vld [vmem:[%s2666] sm:$0xff]
    %v2668 = vld [vmem:[%s2666 + $0x8] sm:$0xff]
    %v2669 = vld [vmem:[%s2666 + $0x10] sm:$0xff]
    %v2670 = vld [vmem:[%s2666 + $0x18] sm:$0xff]
    %v2672 = vsel %vm201, %v2663, 0
    %2674 = vmatprep.subr.mxu0 0.0
    %2675 = vmatpush1.msra.mxu0 %v2667
    %2676 = vmatprep.subr.mxu0 0.0
    %2677 = vmatpush1.msra.mxu0 %v2668
    %2678 = vmatprep.subr.mxu0 0.0
    %2679 = vmatpush1.msra.mxu0 %v2669
    %2680 = vmatprep.subr.mxu0 0.0
    %2681 = vmatpush1.msra.mxu0 %v2670
    %2682 = vmatprep.subr.mxu0 0.0
    %2683 = vmatpush1.msra.mxu0 0.0
    %2684 = vmatprep.subr.mxu0 0.0
    %2685 = vmatpush1.msra.mxu0 0.0
    %2686 = vmatprep.subr.mxu0 0.0
    %2687 = vmatpush1.msra.mxu0 0.0
    %2688 = vmatprep.subr.mxu0 0.0
    %2689 = vmatpush1.msra.mxu0 0.0
    %2690 = vmatprep.subr.mxu0 0.0
    %2691 = vmatpush1.msra.mxu0 0.0
    %2692 = vmatprep.subr.mxu0 0.0
    %2693 = vmatpush1.msra.mxu0 0.0
    %2694 = vmatprep.subr.mxu0 0.0
    %2695 = vmatpush1.msra.mxu0 0.0
    %2696 = vmatprep.subr.mxu0 0.0
    %2697 = vmatpush1.msra.mxu0 0.0
    %2698 = vmatprep.subr.mxu0 0.0
    %2699 = vmatpush1.msra.mxu0 0.0
    %2700 = vmatprep.subr.mxu0 0.0
    %2701 = vmatpush1.msra.mxu0 0.0
    %2702 = vmatprep.subr.mxu0 0.0
    %2703 = vmatpush1.msra.mxu0 0.0
    %2704 = vmatprep.subr.mxu0 0.0
    %2705 = vmatpush1.msra.mxu0 0.0
    %2706 = vmatprep.subr.mxu0 0.0
    %2707 = vmatpush1.msra.mxu0 0.0
    %2708 = vmatprep.subr.mxu0 0.0
    %2709 = vmatpush1.msra.mxu0 0.0
    %2710 = vmatprep.subr.mxu0 0.0
    %2711 = vmatpush1.msra.mxu0 0.0
    %2712 = vmatprep.subr.mxu0 0.0
    %2713 = vmatpush1.msra.mxu0 0.0
    %2714 = vmatprep.subr.mxu0 0.0
    %2715 = vmatpush1.msra.mxu0 0.0
    %2716 = vmatprep.subr.mxu0 0.0
    %2717 = vmatpush1.msra.mxu0 0.0
    %2718 = vmatprep.subr.mxu0 0.0
    %2719 = vmatpush1.msra.mxu0 0.0
    %2720 = vmatprep.subr.mxu0 0.0
    %2721 = vmatpush1.msra.mxu0 0.0
    %2722 = vmatprep.subr.mxu0 0.0
    %2723 = vmatpush1.msra.mxu0 0.0
    %2724 = vmatprep.subr.mxu0 0.0
    %2725 = vmatpush1.msra.mxu0 0.0
    %2726 = vmatprep.subr.mxu0 0.0
    %2727 = vmatpush1.msra.mxu0 0.0
    %2728 = vmatprep.subr.mxu0 0.0
    %2729 = vmatpush1.msra.mxu0 0.0
    %2730 = vmatprep.subr.mxu0 0.0
    %2731 = vmatpush1.msra.mxu0 0.0
    %2732 = vmatprep.subr.mxu0 0.0
    %2733 = vmatpush1.msra.mxu0 0.0
    %2734 = vmatprep.subr.mxu0 0.0
    %2735 = vmatpush1.msra.mxu0 0.0
    %2736 = vmatprep.subr.mxu0 0.0
    %2737 = vmatpush1.msra.mxu0 0.0
    %2738 = vmatprep.mubr.f32.mxu0 0.0
    %2739 = vmatmul.mubr.f32.gmra.mrb[0].mxu0 %v2672
    %v2740 = vpop.f32.mrb[0].mxu0
    %v2741 = vadd.f32 0.0, %v2740
    %v2742 = vpop.f32.mrb[0].mxu0
    %2743 = vdwg.mxu0
    %v2744 = vadd.f32 %v2590, %v2741
    %v2745 = vld [vmem:[#allocation14] sm:$0x1]
    %v2747 = vlaneseq
    %v2748 = vshrl.u32 %v2747, 7
    %v2749 = vsub.s32 0, %v2748
    %v2750 = vrot.slane %v2745, %v2749
    %v2752 = vmul.f32 %v2744, %v2750
    %v2753 = vld [vmem:[%s16] sm:$0xff]
    %v2754 = vadd.f32 %v2752, %v2753
    %v2755 = vmax.f32 %v2754, 0.0
    %v2756 = vld [vmem:[%s17] sm:$0xf]
    %v2758 = vsel %vm2133, %v2756, 0
    %2760 = vmatprep.subr.mxu0 0.0
    %2761 = vmatpush1.msra.mxu0 %v2755
    %2762 = vmatprep.subr.mxu0 0.0
    %2763 = vmatpush1.msra.mxu0 0.0
    %2764 = vmatprep.subr.mxu0 0.0
    %2765 = vmatpush1.msra.mxu0 0.0
    %2766 = vmatprep.subr.mxu0 0.0
    %2767 = vmatpush1.msra.mxu0 0.0
    %2768 = vmatprep.subr.mxu0 0.0
    %2769 = vmatpush1.msra.mxu0 0.0
    %2770 = vmatprep.subr.mxu0 0.0
    %2771 = vmatpush1.msra.mxu0 0.0
    %2772 = vmatprep.subr.mxu0 0.0
    %2773 = vmatpush1.msra.mxu0 0.0
    %2774 = vmatprep.subr.mxu0 0.0
    %2775 = vmatpush1.msra.mxu0 0.0
    %2776 = vmatprep.subr.mxu0 0.0
    %2777 = vmatpush1.msra.mxu0 0.0
    %2778 = vmatprep.subr.mxu0 0.0
    %2779 = vmatpush1.msra.mxu0 0.0
    %2780 = vmatprep.subr.mxu0 0.0
    %2781 = vmatpush1.msra.mxu0 0.0
    %2782 = vmatprep.subr.mxu0 0.0
    %2783 = vmatpush1.msra.mxu0 0.0
    %2784 = vmatprep.subr.mxu0 0.0
    %2785 = vmatpush1.msra.mxu0 0.0
    %2786 = vmatprep.subr.mxu0 0.0
    %2787 = vmatpush1.msra.mxu0 0.0
    %2788 = vmatprep.subr.mxu0 0.0
    %2789 = vmatpush1.msra.mxu0 0.0
    %2790 = vmatprep.subr.mxu0 0.0
    %2791 = vmatpush1.msra.mxu0 0.0
    %2792 = vmatprep.subr.mxu0 0.0
    %2793 = vmatpush1.msra.mxu0 0.0
    %2794 = vmatprep.subr.mxu0 0.0
    %2795 = vmatpush1.msra.mxu0 0.0
    %2796 = vmatprep.subr.mxu0 0.0
    %2797 = vmatpush1.msra.mxu0 0.0
    %2798 = vmatprep.subr.mxu0 0.0
    %2799 = vmatpush1.msra.mxu0 0.0
    %2800 = vmatprep.subr.mxu0 0.0
    %2801 = vmatpush1.msra.mxu0 0.0
    %2802 = vmatprep.subr.mxu0 0.0
    %2803 = vmatpush1.msra.mxu0 0.0
    %2804 = vmatprep.subr.mxu0 0.0
    %2805 = vmatpush1.msra.mxu0 0.0
    %2806 = vmatprep.subr.mxu0 0.0
    %2807 = vmatpush1.msra.mxu0 0.0
    %2808 = vmatprep.subr.mxu0 0.0
    %2809 = vmatpush1.msra.mxu0 0.0
    %2810 = vmatprep.subr.mxu0 0.0
    %2811 = vmatpush1.msra.mxu0 0.0
    %2812 = vmatprep.subr.mxu0 0.0
    %2813 = vmatpush1.msra.mxu0 0.0
    %2814 = vmatprep.subr.mxu0 0.0
    %2815 = vmatpush1.msra.mxu0 0.0
    %2816 = vmatprep.subr.mxu0 0.0
    %2817 = vmatpush1.msra.mxu0 0.0
    %2818 = vmatprep.subr.mxu0 0.0
    %2819 = vmatpush1.msra.mxu0 0.0
    %2820 = vmatprep.subr.mxu0 0.0
    %2821 = vmatpush1.msra.mxu0 0.0
    %2822 = vmatprep.subr.mxu0 0.0
    %2823 = vmatpush1.msra.mxu0 0.0
    %2824 = vmatprep.mubr.f32.mxu0 0.0
    %2825 = vmatmul.mubr.f32.gmra.mrb[0].mxu0 %v2758
    %v2826 = vpop.f32.mrb[0].mxu0
    %v2827 = vadd.f32 0.0, %v2826
    %v2828 = vpop.f32.mrb[0].mxu0
    %2829 = vdwg.mxu0
    %s2830 = scalar_lea.vmem %s17, 4
    %v2831 = vld [vmem:[%s2830] sm:$0xf]
    %v2833 = vsel %vm2133, %v2831, 0
    %2835 = vmatprep.subr.mxu0 0.0
    %2836 = vmatpush1.msra.mxu0 %v2755
    %2837 = vmatprep.subr.mxu0 0.0
    %2838 = vmatpush1.msra.mxu0 0.0
    %2839 = vmatprep.subr.mxu0 0.0
    %2840 = vmatpush1.msra.mxu0 0.0
    %2841 = vmatprep.subr.mxu0 0.0
    %2842 = vmatpush1.msra.mxu0 0.0
    %2843 = vmatprep.subr.mxu0 0.0
    %2844 = vmatpush1.msra.mxu0 0.0
    %2845 = vmatprep.subr.mxu0 0.0
    %2846 = vmatpush1.msra.mxu0 0.0
    %2847 = vmatprep.subr.mxu0 0.0
    %2848 = vmatpush1.msra.mxu0 0.0
    %2849 = vmatprep.subr.mxu0 0.0
    %2850 = vmatpush1.msra.mxu0 0.0
    %2851 = vmatprep.subr.mxu0 0.0
    %2852 = vmatpush1.msra.mxu0 0.0
    %2853 = vmatprep.subr.mxu0 0.0
    %2854 = vmatpush1.msra.mxu0 0.0
    %2855 = vmatprep.subr.mxu0 0.0
    %2856 = vmatpush1.msra.mxu0 0.0
    %2857 = vmatprep.subr.mxu0 0.0
    %2858 = vmatpush1.msra.mxu0 0.0
    %2859 = vmatprep.subr.mxu0 0.0
    %2860 = vmatpush1.msra.mxu0 0.0
    %2861 = vmatprep.subr.mxu0 0.0
    %2862 = vmatpush1.msra.mxu0 0.0
    %2863 = vmatprep.subr.mxu0 0.0
    %2864 = vmatpush1.msra.mxu0 0.0
    %2865 = vmatprep.subr.mxu0 0.0
    %2866 = vmatpush1.msra.mxu0 0.0
    %2867 = vmatprep.subr.mxu0 0.0
    %2868 = vmatpush1.msra.mxu0 0.0
    %2869 = vmatprep.subr.mxu0 0.0
    %2870 = vmatpush1.msra.mxu0 0.0
    %2871 = vmatprep.subr.mxu0 0.0
    %2872 = vmatpush1.msra.mxu0 0.0
    %2873 = vmatprep.subr.mxu0 0.0
    %2874 = vmatpush1.msra.mxu0 0.0
    %2875 = vmatprep.subr.mxu0 0.0
    %2876 = vmatpush1.msra.mxu0 0.0
    %2877 = vmatprep.subr.mxu0 0.0
    %2878 = vmatpush1.msra.mxu0 0.0
    %2879 = vmatprep.subr.mxu0 0.0
    %2880 = vmatpush1.msra.mxu0 0.0
    %2881 = vmatprep.subr.mxu0 0.0
    %2882 = vmatpush1.msra.mxu0 0.0
    %2883 = vmatprep.subr.mxu0 0.0
    %2884 = vmatpush1.msra.mxu0 0.0
    %2885 = vmatprep.subr.mxu0 0.0
    %2886 = vmatpush1.msra.mxu0 0.0
    %2887 = vmatprep.subr.mxu0 0.0
    %2888 = vmatpush1.msra.mxu0 0.0
    %2889 = vmatprep.subr.mxu0 0.0
    %2890 = vmatpush1.msra.mxu0 0.0
    %2891 = vmatprep.subr.mxu0 0.0
    %2892 = vmatpush1.msra.mxu0 0.0
    %2893 = vmatprep.subr.mxu0 0.0
    %2894 = vmatpush1.msra.mxu0 0.0
    %2895 = vmatprep.subr.mxu0 0.0
    %2896 = vmatpush1.msra.mxu0 0.0
    %2897 = vmatprep.subr.mxu0 0.0
    %2898 = vmatpush1.msra.mxu0 0.0
    %2899 = vmatprep.mubr.f32.mxu0 0.0
    %2900 = vmatmul.mubr.f32.gmra.mrb[0].mxu0 %v2833
    %v2901 = vpop.f32.mrb[0].mxu0
    %v2902 = vadd.f32 0.0, %v2901
    %v2903 = vpop.f32.mrb[0].mxu0
    %2904 = vdwg.mxu0
    %v2905 = vld [vmem:[%s18] sm:$0xff]
    %v2906 = vld [vmem:[%s18 + $0x8] sm:$0xff]
    %v2907 = vld [vmem:[%s18 + $0x10] sm:$0xff]
    %v2908 = vld [vmem:[%s18 + $0x18] sm:$0xff]
    %v2910 = vsel %vm201, %v2827, 0
    %2912 = vmatprep.subr.mxu0 0.0
    %2913 = vmatpush1.msra.mxu0 %v2905
    %2914 = vmatprep.subr.mxu0 0.0
    %2915 = vmatpush1.msra.mxu0 %v2906
    %2916 = vmatprep.subr.mxu0 0.0
    %2917 = vmatpush1.msra.mxu0 %v2907
    %2918 = vmatprep.subr.mxu0 0.0
    %2919 = vmatpush1.msra.mxu0 %v2908
    %2920 = vmatprep.subr.mxu0 0.0
    %2921 = vmatpush1.msra.mxu0 0.0
    %2922 = vmatprep.subr.mxu0 0.0
    %2923 = vmatpush1.msra.mxu0 0.0
    %2924 = vmatprep.subr.mxu0 0.0
    %2925 = vmatpush1.msra.mxu0 0.0
    %2926 = vmatprep.subr.mxu0 0.0
    %2927 = vmatpush1.msra.mxu0 0.0
    %2928 = vmatprep.subr.mxu0 0.0
    %2929 = vmatpush1.msra.mxu0 0.0
    %2930 = vmatprep.subr.mxu0 0.0
    %2931 = vmatpush1.msra.mxu0 0.0
    %2932 = vmatprep.subr.mxu0 0.0
    %2933 = vmatpush1.msra.mxu0 0.0
    %2934 = vmatprep.subr.mxu0 0.0
    %2935 = vmatpush1.msra.mxu0 0.0
    %2936 = vmatprep.subr.mxu0 0.0
    %2937 = vmatpush1.msra.mxu0 0.0
    %2938 = vmatprep.subr.mxu0 0.0
    %2939 = vmatpush1.msra.mxu0 0.0
    %2940 = vmatprep.subr.mxu0 0.0
    %2941 = vmatpush1.msra.mxu0 0.0
    %2942 = vmatprep.subr.mxu0 0.0
    %2943 = vmatpush1.msra.mxu0 0.0
    %2944 = vmatprep.subr.mxu0 0.0
    %2945 = vmatpush1.msra.mxu0 0.0
    %2946 = vmatprep.subr.mxu0 0.0
    %2947 = vmatpush1.msra.mxu0 0.0
    %2948 = vmatprep.subr.mxu0 0.0
    %2949 = vmatpush1.msra.mxu0 0.0
    %2950 = vmatprep.subr.mxu0 0.0
    %2951 = vmatpush1.msra.mxu0 0.0
    %2952 = vmatprep.subr.mxu0 0.0
    %2953 = vmatpush1.msra.mxu0 0.0
    %2954 = vmatprep.subr.mxu0 0.0
    %2955 = vmatpush1.msra.mxu0 0.0
    %2956 = vmatprep.subr.mxu0 0.0
    %2957 = vmatpush1.msra.mxu0 0.0
    %2958 = vmatprep.subr.mxu0 0.0
    %2959 = vmatpush1.msra.mxu0 0.0
    %2960 = vmatprep.subr.mxu0 0.0
    %2961 = vmatpush1.msra.mxu0 0.0
    %2962 = vmatprep.subr.mxu0 0.0
    %2963 = vmatpush1.msra.mxu0 0.0
    %2964 = vmatprep.subr.mxu0 0.0
    %2965 = vmatpush1.msra.mxu0 0.0
    %2966 = vmatprep.subr.mxu0 0.0
    %2967 = vmatpush1.msra.mxu0 0.0
    %2968 = vmatprep.subr.mxu0 0.0
    %2969 = vmatpush1.msra.mxu0 0.0
    %2970 = vmatprep.subr.mxu0 0.0
    %2971 = vmatpush1.msra.mxu0 0.0
    %2972 = vmatprep.subr.mxu0 0.0
    %2973 = vmatpush1.msra.mxu0 0.0
    %2974 = vmatprep.subr.mxu0 0.0
    %2975 = vmatpush1.msra.mxu0 0.0
    %2976 = vmatprep.mubr.f32.mxu0 0.0
    %2977 = vmatmul.mubr.f32.gmra.mrb[0].mxu0 %v2910
    %v2978 = vpop.f32.mrb[0].mxu0
    %v2979 = vadd.f32 0.0, %v2978
    %v2980 = vpop.f32.mrb[0].mxu0
    %2981 = vdwg.mxu0
    %s2982 = scalar_lea.vmem %s18, 32
    %v2983 = vld [vmem:[%s2982] sm:$0xff]
    %v2984 = vld [vmem:[%s2982 + $0x8] sm:$0xff]
    %v2985 = vld [vmem:[%s2982 + $0x10] sm:$0xff]
    %v2986 = vld [vmem:[%s2982 + $0x18] sm:$0xff]
    %2987 = vmatprep.subr.mxu0 0.0
    %2988 = vmatpush1.msra.mxu0 %v2983
    %2989 = vmatprep.subr.mxu0 0.0
    %2990 = vmatpush1.msra.mxu0 %v2984
    %2991 = vmatprep.subr.mxu0 0.0
    %2992 = vmatpush1.msra.mxu0 %v2985
    %2993 = vmatprep.subr.mxu0 0.0
    %2994 = vmatpush1.msra.mxu0 %v2986
    %2995 = vmatprep.subr.mxu0 0.0
    %2996 = vmatpush1.msra.mxu0 0.0
    %2997 = vmatprep.subr.mxu0 0.0
    %2998 = vmatpush1.msra.mxu0 0.0
    %2999 = vmatprep.subr.mxu0 0.0
    %3000 = vmatpush1.msra.mxu0 0.0
    %3001 = vmatprep.subr.mxu0 0.0
    %3002 = vmatpush1.msra.mxu0 0.0
    %3003 = vmatprep.subr.mxu0 0.0
    %3004 = vmatpush1.msra.mxu0 0.0
    %3005 = vmatprep.subr.mxu0 0.0
    %3006 = vmatpush1.msra.mxu0 0.0
    %3007 = vmatprep.subr.mxu0 0.0
    %3008 = vmatpush1.msra.mxu0 0.0
    %3009 = vmatprep.subr.mxu0 0.0
    %3010 = vmatpush1.msra.mxu0 0.0
    %3011 = vmatprep.subr.mxu0 0.0
    %3012 = vmatpush1.msra.mxu0 0.0
    %3013 = vmatprep.subr.mxu0 0.0
    %3014 = vmatpush1.msra.mxu0 0.0
    %3015 = vmatprep.subr.mxu0 0.0
    %3016 = vmatpush1.msra.mxu0 0.0
    %3017 = vmatprep.subr.mxu0 0.0
    %3018 = vmatpush1.msra.mxu0 0.0
    %3019 = vmatprep.subr.mxu0 0.0
    %3020 = vmatpush1.msra.mxu0 0.0
    %3021 = vmatprep.subr.mxu0 0.0
    %3022 = vmatpush1.msra.mxu0 0.0
    %3023 = vmatprep.subr.mxu0 0.0
    %3024 = vmatpush1.msra.mxu0 0.0
    %3025 = vmatprep.subr.mxu0 0.0
    %3026 = vmatpush1.msra.mxu0 0.0
    %3027 = vmatprep.subr.mxu0 0.0
    %3028 = vmatpush1.msra.mxu0 0.0
    %3029 = vmatprep.subr.mxu0 0.0
    %3030 = vmatpush1.msra.mxu0 0.0
    %3031 = vmatprep.subr.mxu0 0.0
    %3032 = vmatpush1.msra.mxu0 0.0
    %3033 = vmatprep.subr.mxu0 0.0
    %3034 = vmatpush1.msra.mxu0 0.0
    %3035 = vmatprep.subr.mxu0 0.0
    %3036 = vmatpush1.msra.mxu0 0.0
    %3037 = vmatprep.subr.mxu0 0.0
    %3038 = vmatpush1.msra.mxu0 0.0
    %3039 = vmatprep.subr.mxu0 0.0
    %3040 = vmatpush1.msra.mxu0 0.0
    %3041 = vmatprep.subr.mxu0 0.0
    %3042 = vmatpush1.msra.mxu0 0.0
    %3043 = vmatprep.subr.mxu0 0.0
    %3044 = vmatpush1.msra.mxu0 0.0
    %3045 = vmatprep.subr.mxu0 0.0
    %3046 = vmatpush1.msra.mxu0 0.0
    %3047 = vmatprep.subr.mxu0 0.0
    %3048 = vmatpush1.msra.mxu0 0.0
    %3049 = vmatprep.subr.mxu0 0.0
    %3050 = vmatpush1.msra.mxu0 0.0
    %3051 = vmatprep.mubr.f32.mxu0 0.0
    %3052 = vmatmul.mubr.f32.gmra.mrb[0].mxu0 %v2910
    %v3053 = vpop.f32.mrb[0].mxu0
    %v3054 = vadd.f32 0.0, %v3053
    %v3055 = vpop.f32.mrb[0].mxu0
    %3056 = vdwg.mxu0
    %v3057 = vmax.f32 %v2979, %v3054
    %v3059 = vsel %vm201, %v2902, 0
    %3061 = vmatprep.subr.mxu0 0.0
    %3062 = vmatpush1.msra.mxu0 %v2905
    %3063 = vmatprep.subr.mxu0 0.0
    %3064 = vmatpush1.msra.mxu0 %v2906
    %3065 = vmatprep.subr.mxu0 0.0
    %3066 = vmatpush1.msra.mxu0 %v2907
    %3067 = vmatprep.subr.mxu0 0.0
    %3068 = vmatpush1.msra.mxu0 %v2908
    %3069 = vmatprep.subr.mxu0 0.0
    %3070 = vmatpush1.msra.mxu0 0.0
    %3071 = vmatprep.subr.mxu0 0.0
    %3072 = vmatpush1.msra.mxu0 0.0
    %3073 = vmatprep.subr.mxu0 0.0
    %3074 = vmatpush1.msra.mxu0 0.0
    %3075 = vmatprep.subr.mxu0 0.0
    %3076 = vmatpush1.msra.mxu0 0.0
    %3077 = vmatprep.subr.mxu0 0.0
    %3078 = vmatpush1.msra.mxu0 0.0
    %3079 = vmatprep.subr.mxu0 0.0
    %3080 = vmatpush1.msra.mxu0 0.0
    %3081 = vmatprep.subr.mxu0 0.0
    %3082 = vmatpush1.msra.mxu0 0.0
    %3083 = vmatprep.subr.mxu0 0.0
    %3084 = vmatpush1.msra.mxu0 0.0
    %3085 = vmatprep.subr.mxu0 0.0
    %3086 = vmatpush1.msra.mxu0 0.0
    %3087 = vmatprep.subr.mxu0 0.0
    %3088 = vmatpush1.msra.mxu0 0.0
    %3089 = vmatprep.subr.mxu0 0.0
    %3090 = vmatpush1.msra.mxu0 0.0
    %3091 = vmatprep.subr.mxu0 0.0
    %3092 = vmatpush1.msra.mxu0 0.0
    %3093 = vmatprep.subr.mxu0 0.0
    %3094 = vmatpush1.msra.mxu0 0.0
    %3095 = vmatprep.subr.mxu0 0.0
    %3096 = vmatpush1.msra.mxu0 0.0
    %3097 = vmatprep.subr.mxu0 0.0
    %3098 = vmatpush1.msra.mxu0 0.0
    %3099 = vmatprep.subr.mxu0 0.0
    %3100 = vmatpush1.msra.mxu0 0.0
    %3101 = vmatprep.subr.mxu0 0.0
    %3102 = vmatpush1.msra.mxu0 0.0
    %3103 = vmatprep.subr.mxu0 0.0
    %3104 = vmatpush1.msra.mxu0 0.0
    %3105 = vmatprep.subr.mxu0 0.0
    %3106 = vmatpush1.msra.mxu0 0.0
    %3107 = vmatprep.subr.mxu0 0.0
    %3108 = vmatpush1.msra.mxu0 0.0
    %3109 = vmatprep.subr.mxu0 0.0
    %3110 = vmatpush1.msra.mxu0 0.0
    %3111 = vmatprep.subr.mxu0 0.0
    %3112 = vmatpush1.msra.mxu0 0.0
    %3113 = vmatprep.subr.mxu0 0.0
    %3114 = vmatpush1.msra.mxu0 0.0
    %3115 = vmatprep.subr.mxu0 0.0
    %3116 = vmatpush1.msra.mxu0 0.0
    %3117 = vmatprep.subr.mxu0 0.0
    %3118 = vmatpush1.msra.mxu0 0.0
    %3119 = vmatprep.subr.mxu0 0.0
    %3120 = vmatpush1.msra.mxu0 0.0
    %3121 = vmatprep.subr.mxu0 0.0
    %3122 = vmatpush1.msra.mxu0 0.0
    %3123 = vmatprep.subr.mxu0 0.0
    %3124 = vmatpush1.msra.mxu0 0.0
    %3125 = vmatprep.mubr.f32.mxu0 0.0
    %3126 = vmatmul.mubr.f32.gmra.mrb[0].mxu0 %v3059
    %v3127 = vpop.f32.mrb[0].mxu0
    %v3128 = vadd.f32 0.0, %v3127
    %v3129 = vpop.f32.mrb[0].mxu0
    %3130 = vdwg.mxu0
    %3131 = vmatprep.subr.mxu0 0.0
    %3132 = vmatpush1.msra.mxu0 %v2983
    %3133 = vmatprep.subr.mxu0 0.0
    %3134 = vmatpush1.msra.mxu0 %v2984
    %3135 = vmatprep.subr.mxu0 0.0
    %3136 = vmatpush1.msra.mxu0 %v2985
    %3137 = vmatprep.subr.mxu0 0.0
    %3138 = vmatpush1.msra.mxu0 %v2986
    %3139 = vmatprep.subr.mxu0 0.0
    %3140 = vmatpush1.msra.mxu0 0.0
    %3141 = vmatprep.subr.mxu0 0.0
    %3142 = vmatpush1.msra.mxu0 0.0
    %3143 = vmatprep.subr.mxu0 0.0
    %3144 = vmatpush1.msra.mxu0 0.0
    %3145 = vmatprep.subr.mxu0 0.0
    %3146 = vmatpush1.msra.mxu0 0.0
    %3147 = vmatprep.subr.mxu0 0.0
    %3148 = vmatpush1.msra.mxu0 0.0
    %3149 = vmatprep.subr.mxu0 0.0
    %3150 = vmatpush1.msra.mxu0 0.0
    %3151 = vmatprep.subr.mxu0 0.0
    %3152 = vmatpush1.msra.mxu0 0.0
    %3153 = vmatprep.subr.mxu0 0.0
    %3154 = vmatpush1.msra.mxu0 0.0
    %3155 = vmatprep.subr.mxu0 0.0
    %3156 = vmatpush1.msra.mxu0 0.0
    %3157 = vmatprep.subr.mxu0 0.0
    %3158 = vmatpush1.msra.mxu0 0.0
    %3159 = vmatprep.subr.mxu0 0.0
    %3160 = vmatpush1.msra.mxu0 0.0
    %3161 = vmatprep.subr.mxu0 0.0
    %3162 = vmatpush1.msra.mxu0 0.0
    %3163 = vmatprep.subr.mxu0 0.0
    %3164 = vmatpush1.msra.mxu0 0.0
    %3165 = vmatprep.subr.mxu0 0.0
    %3166 = vmatpush1.msra.mxu0 0.0
    %3167 = vmatprep.subr.mxu0 0.0
    %3168 = vmatpush1.msra.mxu0 0.0
    %3169 = vmatprep.subr.mxu0 0.0
    %3170 = vmatpush1.msra.mxu0 0.0
    %3171 = vmatprep.subr.mxu0 0.0
    %3172 = vmatpush1.msra.mxu0 0.0
    %3173 = vmatprep.subr.mxu0 0.0
    %3174 = vmatpush1.msra.mxu0 0.0
    %3175 = vmatprep.subr.mxu0 0.0
    %3176 = vmatpush1.msra.mxu0 0.0
    %3177 = vmatprep.subr.mxu0 0.0
    %3178 = vmatpush1.msra.mxu0 0.0
    %3179 = vmatprep.subr.mxu0 0.0
    %3180 = vmatpush1.msra.mxu0 0.0
    %3181 = vmatprep.subr.mxu0 0.0
    %3182 = vmatpush1.msra.mxu0 0.0
    %3183 = vmatprep.subr.mxu0 0.0
    %3184 = vmatpush1.msra.mxu0 0.0
    %3185 = vmatprep.subr.mxu0 0.0
    %3186 = vmatpush1.msra.mxu0 0.0
    %3187 = vmatprep.subr.mxu0 0.0
    %3188 = vmatpush1.msra.mxu0 0.0
    %3189 = vmatprep.subr.mxu0 0.0
    %3190 = vmatpush1.msra.mxu0 0.0
    %3191 = vmatprep.subr.mxu0 0.0
    %3192 = vmatpush1.msra.mxu0 0.0
    %3193 = vmatprep.subr.mxu0 0.0
    %3194 = vmatpush1.msra.mxu0 0.0
    %3195 = vmatprep.mubr.f32.mxu0 0.0
    %3196 = vmatmul.mubr.f32.gmra.mrb[0].mxu0 %v3059
    %v3197 = vpop.f32.mrb[0].mxu0
    %v3198 = vadd.f32 0.0, %v3197
    %v3199 = vpop.f32.mrb[0].mxu0
    %3200 = vdwg.mxu0
    %v3201 = vmax.f32 %v3128, %v3198
    %v3202 = vmax.f32 %v3057, %v3201
    %v3203 = vld [vmem:[%s19] sm:$0x3]
    %vm3204 = vcmask 31744
    %v3206 = vsel %vm3204, %v3203, 0
    %vm3208 = vcmask 1043456
    %v3210 = vsel %vm3208, %v3202, 0
    %3212 = vmatprep.subr.mxu0 0.0
    %3213 = vmatpush1.msra.mxu0 %v3210
    %3214 = vmatprep.subr.mxu0 0.0
    %3215 = vmatpush1.msra.mxu0 0.0
    %3216 = vmatprep.subr.mxu0 0.0
    %3217 = vmatpush1.msra.mxu0 0.0
    %3218 = vmatprep.subr.mxu0 0.0
    %3219 = vmatpush1.msra.mxu0 0.0
    %3220 = vmatprep.subr.mxu0 0.0
    %3221 = vmatpush1.msra.mxu0 0.0
    %3222 = vmatprep.subr.mxu0 0.0
    %3223 = vmatpush1.msra.mxu0 0.0
    %3224 = vmatprep.subr.mxu0 0.0
    %3225 = vmatpush1.msra.mxu0 0.0
    %3226 = vmatprep.subr.mxu0 0.0
    %3227 = vmatpush1.msra.mxu0 0.0
    %3228 = vmatprep.subr.mxu0 0.0
    %3229 = vmatpush1.msra.mxu0 0.0
    %3230 = vmatprep.subr.mxu0 0.0
    %3231 = vmatpush1.msra.mxu0 0.0
    %3232 = vmatprep.subr.mxu0 0.0
    %3233 = vmatpush1.msra.mxu0 0.0
    %3234 = vmatprep.subr.mxu0 0.0
    %3235 = vmatpush1.msra.mxu0 0.0
    %3236 = vmatprep.subr.mxu0 0.0
    %3237 = vmatpush1.msra.mxu0 0.0
    %3238 = vmatprep.subr.mxu0 0.0
    %3239 = vmatpush1.msra.mxu0 0.0
    %3240 = vmatprep.subr.mxu0 0.0
    %3241 = vmatpush1.msra.mxu0 0.0
    %3242 = vmatprep.subr.mxu0 0.0
    %3243 = vmatpush1.msra.mxu0 0.0
    %3244 = vmatprep.subr.mxu0 0.0
    %3245 = vmatpush1.msra.mxu0 0.0
    %3246 = vmatprep.subr.mxu0 0.0
    %3247 = vmatpush1.msra.mxu0 0.0
    %3248 = vmatprep.subr.mxu0 0.0
    %3249 = vmatpush1.msra.mxu0 0.0
    %3250 = vmatprep.subr.mxu0 0.0
    %3251 = vmatpush1.msra.mxu0 0.0
    %3252 = vmatprep.subr.mxu0 0.0
    %3253 = vmatpush1.msra.mxu0 0.0
    %3254 = vmatprep.subr.mxu0 0.0
    %3255 = vmatpush1.msra.mxu0 0.0
    %3256 = vmatprep.subr.mxu0 0.0
    %3257 = vmatpush1.msra.mxu0 0.0
    %3258 = vmatprep.subr.mxu0 0.0
    %3259 = vmatpush1.msra.mxu0 0.0
    %3260 = vmatprep.subr.mxu0 0.0
    %3261 = vmatpush1.msra.mxu0 0.0
    %3262 = vmatprep.subr.mxu0 0.0
    %3263 = vmatpush1.msra.mxu0 0.0
    %3264 = vmatprep.subr.mxu0 0.0
    %3265 = vmatpush1.msra.mxu0 0.0
    %3266 = vmatprep.subr.mxu0 0.0
    %3267 = vmatpush1.msra.mxu0 0.0
    %3268 = vmatprep.subr.mxu0 0.0
    %3269 = vmatpush1.msra.mxu0 0.0
    %3270 = vmatprep.subr.mxu0 0.0
    %3271 = vmatpush1.msra.mxu0 0.0
    %3272 = vmatprep.subr.mxu0 0.0
    %3273 = vmatpush1.msra.mxu0 0.0
    %3274 = vmatprep.subr.mxu0 0.0
    %3275 = vmatpush1.msra.mxu0 0.0
    %3276 = vmatprep.mubr.f32.mxu0 0.0
    %3277 = vmatmul.mubr.f32.gmra.mrb[0].mxu0 %v3206
    %v3278 = vpop.f32.mrb[0].mxu0
    %v3279 = vadd.f32 0.0, %v3278
    %v3280 = vpop.f32.mrb[0].mxu0
    %3281 = vdwg.mxu0
    %v3282 = vld [vmem:[#allocation16] sm:$0xff]
    %v3283 = vld [vmem:[#allocation16 + $0x8] sm:$0xff]
    %s3284 = scalar_lea.vmem %s19, 2
    %v3285 = vld [vmem:[%s3284] sm:$0x3]
    %v3287 = vsel %vm3204, %v3285, 0
    %3289 = vmatprep.subr.mxu0 0.0
    %3290 = vmatpush1.msra.mxu0 %v3210
    %3291 = vmatprep.subr.mxu0 0.0
    %3292 = vmatpush1.msra.mxu0 0.0
    %3293 = vmatprep.subr.mxu0 0.0
    %3294 = vmatpush1.msra.mxu0 0.0
    %3295 = vmatprep.subr.mxu0 0.0
    %3296 = vmatpush1.msra.mxu0 0.0
    %3297 = vmatprep.subr.mxu0 0.0
    %3298 = vmatpush1.msra.mxu0 0.0
    %3299 = vmatprep.subr.mxu0 0.0
    %3300 = vmatpush1.msra.mxu0 0.0
    %3301 = vmatprep.subr.mxu0 0.0
    %3302 = vmatpush1.msra.mxu0 0.0
    %3303 = vmatprep.subr.mxu0 0.0
    %3304 = vmatpush1.msra.mxu0 0.0
    %3305 = vmatprep.subr.mxu0 0.0
    %3306 = vmatpush1.msra.mxu0 0.0
    %3307 = vmatprep.subr.mxu0 0.0
    %3308 = vmatpush1.msra.mxu0 0.0
    %3309 = vmatprep.subr.mxu0 0.0
    %3310 = vmatpush1.msra.mxu0 0.0
    %3311 = vmatprep.subr.mxu0 0.0
    %3312 = vmatpush1.msra.mxu0 0.0
    %3313 = vmatprep.subr.mxu0 0.0
    %3314 = vmatpush1.msra.mxu0 0.0
    %3315 = vmatprep.subr.mxu0 0.0
    %3316 = vmatpush1.msra.mxu0 0.0
    %3317 = vmatprep.subr.mxu0 0.0
    %3318 = vmatpush1.msra.mxu0 0.0
    %3319 = vmatprep.subr.mxu0 0.0
    %3320 = vmatpush1.msra.mxu0 0.0
    %3321 = vmatprep.subr.mxu0 0.0
    %3322 = vmatpush1.msra.mxu0 0.0
    %3323 = vmatprep.subr.mxu0 0.0
    %3324 = vmatpush1.msra.mxu0 0.0
    %3325 = vmatprep.subr.mxu0 0.0
    %3326 = vmatpush1.msra.mxu0 0.0
    %3327 = vmatprep.subr.mxu0 0.0
    %3328 = vmatpush1.msra.mxu0 0.0
    %3329 = vmatprep.subr.mxu0 0.0
    %3330 = vmatpush1.msra.mxu0 0.0
    %3331 = vmatprep.subr.mxu0 0.0
    %3332 = vmatpush1.msra.mxu0 0.0
    %3333 = vmatprep.subr.mxu0 0.0
    %3334 = vmatpush1.msra.mxu0 0.0
    %3335 = vmatprep.subr.mxu0 0.0
    %3336 = vmatpush1.msra.mxu0 0.0
    %3337 = vmatprep.subr.mxu0 0.0
    %3338 = vmatpush1.msra.mxu0 0.0
    %3339 = vmatprep.subr.mxu0 0.0
    %3340 = vmatpush1.msra.mxu0 0.0
    %3341 = vmatprep.subr.mxu0 0.0
    %3342 = vmatpush1.msra.mxu0 0.0
    %3343 = vmatprep.subr.mxu0 0.0
    %3344 = vmatpush1.msra.mxu0 0.0
    %3345 = vmatprep.subr.mxu0 0.0
    %3346 = vmatpush1.msra.mxu0 0.0
    %3347 = vmatprep.subr.mxu0 0.0
    %3348 = vmatpush1.msra.mxu0 0.0
    %3349 = vmatprep.subr.mxu0 0.0
    %3350 = vmatpush1.msra.mxu0 0.0
    %3351 = vmatprep.subr.mxu0 0.0
    %3352 = vmatpush1.msra.mxu0 0.0
    %3353 = vmatprep.mubr.f32.mxu0 0.0
    %3354 = vmatmul.mubr.f32.gmra.mrb[0].mxu0 %v3287
    %v3355 = vpop.f32.mrb[0].mxu0
    %v3356 = vadd.f32 0.0, %v3355
    %v3357 = vpop.f32.mrb[0].mxu0
    %3358 = vdwg.mxu0
    %s3359 = scalar_lea.vmem [#allocation16], 16
    %v3360 = vld [vmem:[%s3359] sm:$0xff]
    %v3361 = vld [vmem:[%s3359 + $0x8] sm:$0xff]
    %v3363 = vsel %vm301, %v3356, 0
    %3365 = vmatprep.subr.mxu0 0.0
    %3366 = vmatpush1.msra.mxu0 %v3360
    %3367 = vmatprep.subr.mxu0 0.0
    %3368 = vmatpush1.msra.mxu0 %v3361
    %3369 = vmatprep.subr.mxu0 0.0
    %3370 = vmatpush1.msra.mxu0 0.0
    %3371 = vmatprep.subr.mxu0 0.0
    %3372 = vmatpush1.msra.mxu0 0.0
    %3373 = vmatprep.subr.mxu0 0.0
    %3374 = vmatpush1.msra.mxu0 0.0
    %3375 = vmatprep.subr.mxu0 0.0
    %3376 = vmatpush1.msra.mxu0 0.0
    %3377 = vmatprep.subr.mxu0 0.0
    %3378 = vmatpush1.msra.mxu0 0.0
    %3379 = vmatprep.subr.mxu0 0.0
    %3380 = vmatpush1.msra.mxu0 0.0
    %3381 = vmatprep.subr.mxu0 0.0
    %3382 = vmatpush1.msra.mxu0 0.0
    %3383 = vmatprep.subr.mxu0 0.0
    %3384 = vmatpush1.msra.mxu0 0.0
    %3385 = vmatprep.subr.mxu0 0.0
    %3386 = vmatpush1.msra.mxu0 0.0
    %3387 = vmatprep.subr.mxu0 0.0
    %3388 = vmatpush1.msra.mxu0 0.0
    %3389 = vmatprep.subr.mxu0 0.0
    %3390 = vmatpush1.msra.mxu0 0.0
    %3391 = vmatprep.subr.mxu0 0.0
    %3392 = vmatpush1.msra.mxu0 0.0
    %3393 = vmatprep.subr.mxu0 0.0
    %3394 = vmatpush1.msra.mxu0 0.0
    %3395 = vmatprep.subr.mxu0 0.0
    %3396 = vmatpush1.msra.mxu0 0.0
    %3397 = vmatprep.subr.mxu0 0.0
    %3398 = vmatpush1.msra.mxu0 0.0
    %3399 = vmatprep.subr.mxu0 0.0
    %3400 = vmatpush1.msra.mxu0 0.0
    %3401 = vmatprep.subr.mxu0 0.0
    %3402 = vmatpush1.msra.mxu0 0.0
    %3403 = vmatprep.subr.mxu0 0.0
    %3404 = vmatpush1.msra.mxu0 0.0
    %3405 = vmatprep.subr.mxu0 0.0
    %3406 = vmatpush1.msra.mxu0 0.0
    %3407 = vmatprep.subr.mxu0 0.0
    %3408 = vmatpush1.msra.mxu0 0.0
    %3409 = vmatprep.subr.mxu0 0.0
    %3410 = vmatpush1.msra.mxu0 0.0
    %3411 = vmatprep.subr.mxu0 0.0
    %3412 = vmatpush1.msra.mxu0 0.0
    %3413 = vmatprep.subr.mxu0 0.0
    %3414 = vmatpush1.msra.mxu0 0.0
    %3415 = vmatprep.subr.mxu0 0.0
    %3416 = vmatpush1.msra.mxu0 0.0
    %3417 = vmatprep.subr.mxu0 0.0
    %3418 = vmatpush1.msra.mxu0 0.0
    %3419 = vmatprep.subr.mxu0 0.0
    %3420 = vmatpush1.msra.mxu0 0.0
    %3421 = vmatprep.subr.mxu0 0.0
    %3422 = vmatpush1.msra.mxu0 0.0
    %3423 = vmatprep.subr.mxu0 0.0
    %3424 = vmatpush1.msra.mxu0 0.0
    %3425 = vmatprep.subr.mxu0 0.0
    %3426 = vmatpush1.msra.mxu0 0.0
    %3427 = vmatprep.subr.mxu0 0.0
    %3428 = vmatpush1.msra.mxu0 0.0
    %3429 = vmatprep.mubr.f32.mxu0 0.0
    %3430 = vmatmul.mubr.f32.gmra.mrb[0].mxu0 %v3363
    %v3431 = vpop.f32.mrb[0].mxu0
    %v3432 = vadd.f32 0.0, %v3431
    %v3433 = vpop.f32.mrb[0].mxu0
    %3434 = vdwg.mxu0
    %v3436 = vsel %vm301, %v3279, 0
    %3438 = vmatprep.subr.mxu0 0.0
    %3439 = vmatpush1.msra.mxu0 %v3282
    %3440 = vmatprep.subr.mxu0 0.0
    %3441 = vmatpush1.msra.mxu0 %v3283
    %3442 = vmatprep.subr.mxu0 0.0
    %3443 = vmatpush1.msra.mxu0 0.0
    %3444 = vmatprep.subr.mxu0 0.0
    %3445 = vmatpush1.msra.mxu0 0.0
    %3446 = vmatprep.subr.mxu0 0.0
    %3447 = vmatpush1.msra.mxu0 0.0
    %3448 = vmatprep.subr.mxu0 0.0
    %3449 = vmatpush1.msra.mxu0 0.0
    %3450 = vmatprep.subr.mxu0 0.0
    %3451 = vmatpush1.msra.mxu0 0.0
    %3452 = vmatprep.subr.mxu0 0.0
    %3453 = vmatpush1.msra.mxu0 0.0
    %3454 = vmatprep.subr.mxu0 0.0
    %3455 = vmatpush1.msra.mxu0 0.0
    %3456 = vmatprep.subr.mxu0 0.0
    %3457 = vmatpush1.msra.mxu0 0.0
    %3458 = vmatprep.subr.mxu0 0.0
    %3459 = vmatpush1.msra.mxu0 0.0
    %3460 = vmatprep.subr.mxu0 0.0
    %3461 = vmatpush1.msra.mxu0 0.0
    %3462 = vmatprep.subr.mxu0 0.0
    %3463 = vmatpush1.msra.mxu0 0.0
    %3464 = vmatprep.subr.mxu0 0.0
    %3465 = vmatpush1.msra.mxu0 0.0
    %3466 = vmatprep.subr.mxu0 0.0
    %3467 = vmatpush1.msra.mxu0 0.0
    %3468 = vmatprep.subr.mxu0 0.0
    %3469 = vmatpush1.msra.mxu0 0.0
    %3470 = vmatprep.subr.mxu0 0.0
    %3471 = vmatpush1.msra.mxu0 0.0
    %3472 = vmatprep.subr.mxu0 0.0
    %3473 = vmatpush1.msra.mxu0 0.0
    %3474 = vmatprep.subr.mxu0 0.0
    %3475 = vmatpush1.msra.mxu0 0.0
    %3476 = vmatprep.subr.mxu0 0.0
    %3477 = vmatpush1.msra.mxu0 0.0
    %3478 = vmatprep.subr.mxu0 0.0
    %3479 = vmatpush1.msra.mxu0 0.0
    %3480 = vmatprep.subr.mxu0 0.0
    %3481 = vmatpush1.msra.mxu0 0.0
    %3482 = vmatprep.subr.mxu0 0.0
    %3483 = vmatpush1.msra.mxu0 0.0
    %3484 = vmatprep.subr.mxu0 0.0
    %3485 = vmatpush1.msra.mxu0 0.0
    %3486 = vmatprep.subr.mxu0 0.0
    %3487 = vmatpush1.msra.mxu0 0.0
    %3488 = vmatprep.subr.mxu0 0.0
    %3489 = vmatpush1.msra.mxu0 0.0
    %3490 = vmatprep.subr.mxu0 0.0
    %3491 = vmatpush1.msra.mxu0 0.0
    %3492 = vmatprep.subr.mxu0 0.0
    %3493 = vmatpush1.msra.mxu0 0.0
    %3494 = vmatprep.subr.mxu0 0.0
    %3495 = vmatpush1.msra.mxu0 0.0
    %3496 = vmatprep.subr.mxu0 0.0
    %3497 = vmatpush1.msra.mxu0 0.0
    %3498 = vmatprep.subr.mxu0 0.0
    %3499 = vmatpush1.msra.mxu0 0.0
    %3500 = vmatprep.subr.mxu0 0.0
    %3501 = vmatpush1.msra.mxu0 0.0
    %3502 = vmatprep.mubr.f32.mxu0 0.0
    %3503 = vmatmul.mubr.f32.gmra.mrb[0].mxu0 %v3436
    %v3504 = vpop.f32.mrb[0].mxu0
    %v3505 = vadd.f32 %v3432, %v3504
    %v3506 = vpop.f32.mrb[0].mxu0
    %3507 = vdwg.mxu0
    %v3508 = vld [vmem:[%s21] sm:$0x1]
    %v3510 = vlaneseq
    %v3511 = vshrl.u32 %v3510, 7
    %v3512 = vsub.s32 0, %v3511
    %v3513 = vrot.slane %v3508, %v3512
    %v3515 = vadd.f32 %v3505, %v3513
    %v3516 = vmax.f32 %v3515, 0.0
    %v3517 = vld [vmem:[%s22] sm:$0xff]
    %v3518 = vld [vmem:[%s22 + $0x8] sm:$0xff]
    %v3519 = vld [vmem:[%s22 + $0x10] sm:$0xff]
    %v3520 = vld [vmem:[%s22 + $0x18] sm:$0xff]
    %v3521 = vld [vmem:[%s23] sm:$0x1]
    %v3523 = vlaneseq
    %v3524 = vshrl.u32 %v3523, 7
    %v3525 = vsub.s32 0, %v3524
    %v3526 = vrot.slane %v3521, %v3525
    %v3529 = vsel %vm201, %v3516, 0
    %3531 = vmatprep.subr.mxu0 0.0
    %3532 = vmatpush1.msra.mxu0 %v3517
    %3533 = vmatprep.subr.mxu0 0.0
    %3534 = vmatpush1.msra.mxu0 %v3518
    %3535 = vmatprep.subr.mxu0 0.0
    %3536 = vmatpush1.msra.mxu0 %v3519
    %3537 = vmatprep.subr.mxu0 0.0
    %3538 = vmatpush1.msra.mxu0 %v3520
    %3539 = vmatprep.subr.mxu0 0.0
    %3540 = vmatpush1.msra.mxu0 0.0
    %3541 = vmatprep.subr.mxu0 0.0
    %3542 = vmatpush1.msra.mxu0 0.0
    %3543 = vmatprep.subr.mxu0 0.0
    %3544 = vmatpush1.msra.mxu0 0.0
    %3545 = vmatprep.subr.mxu0 0.0
    %3546 = vmatpush1.msra.mxu0 0.0
    %3547 = vmatprep.subr.mxu0 0.0
    %3548 = vmatpush1.msra.mxu0 0.0
    %3549 = vmatprep.subr.mxu0 0.0
    %3550 = vmatpush1.msra.mxu0 0.0
    %3551 = vmatprep.subr.mxu0 0.0
    %3552 = vmatpush1.msra.mxu0 0.0
    %3553 = vmatprep.subr.mxu0 0.0
    %3554 = vmatpush1.msra.mxu0 0.0
    %3555 = vmatprep.subr.mxu0 0.0
    %3556 = vmatpush1.msra.mxu0 0.0
    %3557 = vmatprep.subr.mxu0 0.0
    %3558 = vmatpush1.msra.mxu0 0.0
    %3559 = vmatprep.subr.mxu0 0.0
    %3560 = vmatpush1.msra.mxu0 0.0
    %3561 = vmatprep.subr.mxu0 0.0
    %3562 = vmatpush1.msra.mxu0 0.0
    %3563 = vmatprep.subr.mxu0 0.0
    %3564 = vmatpush1.msra.mxu0 0.0
    %3565 = vmatprep.subr.mxu0 0.0
    %3566 = vmatpush1.msra.mxu0 0.0
    %3567 = vmatprep.subr.mxu0 0.0
    %3568 = vmatpush1.msra.mxu0 0.0
    %3569 = vmatprep.subr.mxu0 0.0
    %3570 = vmatpush1.msra.mxu0 0.0
    %3571 = vmatprep.subr.mxu0 0.0
    %3572 = vmatpush1.msra.mxu0 0.0
    %3573 = vmatprep.subr.mxu0 0.0
    %3574 = vmatpush1.msra.mxu0 0.0
    %3575 = vmatprep.subr.mxu0 0.0
    %3576 = vmatpush1.msra.mxu0 0.0
    %3577 = vmatprep.subr.mxu0 0.0
    %3578 = vmatpush1.msra.mxu0 0.0
    %3579 = vmatprep.subr.mxu0 0.0
    %3580 = vmatpush1.msra.mxu0 0.0
    %3581 = vmatprep.subr.mxu0 0.0
    %3582 = vmatpush1.msra.mxu0 0.0
    %3583 = vmatprep.subr.mxu0 0.0
    %3584 = vmatpush1.msra.mxu0 0.0
    %3585 = vmatprep.subr.mxu0 0.0
    %3586 = vmatpush1.msra.mxu0 0.0
    %3587 = vmatprep.subr.mxu0 0.0
    %3588 = vmatpush1.msra.mxu0 0.0
    %3589 = vmatprep.subr.mxu0 0.0
    %3590 = vmatpush1.msra.mxu0 0.0
    %3591 = vmatprep.subr.mxu0 0.0
    %3592 = vmatpush1.msra.mxu0 0.0
    %3593 = vmatprep.subr.mxu0 0.0
    %3594 = vmatpush1.msra.mxu0 0.0
    %3595 = vmatprep.mubr.f32.mxu0 0.0
    %3596 = vmatmul.mubr.f32.gmra.mrb[0].mxu0 %v3529
    %v3597 = vpop.f32.mrb[0].mxu0
    %v3598 = vadd.f32 %v3526, %v3597
    %v3599 = vpop.f32.mrb[0].mxu0
    %3600 = vdwg.mxu0
    %vm3601 = vcmask 17408
    %3602 = vst.msk [vmem:[#allocation17] sm:$0x3] %vm3601, %v3598
    // Predicated region
    $region134: #{lc_clf_forward.1} parent=1 // pred_check
      _
    $region135: #{lc_clf_forward.1} parent=1 // pred_check_branch
      %3604 = sbr.rel (0) target = $region137
    $region136: #{lc_clf_forward.1} parent=1 // pred_region
      %s3606 = ssub.s32 32, 32
      %3607 = vsyncadd [#allocation4], %s3606
      %s3609 = sshll.u32 [#allocation17], 4
      %s3610 = int_to_ptr.vmem [resolvable:$true] %s3609
      %3612 = dma.vmem_to_hbm [thread:$0]  %s3610, 32, %s24, [#allocation4]
    $region137: #{lc_clf_forward.1} parent=1 // pred_fallthru
      _
    // Predicated region
    $region138: #{lc_clf_forward.1} parent=1 // pred_check
      _
    $region139: #{lc_clf_forward.1} parent=1 // pred_check_branch
      %3614 = sbr.rel (0) target = $region141
    $region140: #{lc_clf_forward.1} parent=1 // pred_region
      %3615 = dma.done [#allocation4], 32
    $region141: #{lc_clf_forward.1} parent=1 // pred_fallthru
      _
    %3616 = vsyncpa [#allocation3], 1
    %3617 = vsyncpa [#allocation6], 1
    %3618 = vsyncpa [#allocation9], 1
    %3619 = vsyncpa [#allocation12], 1
    %3620 = vsyncpa [#allocation15], 1
    %3621 = vsyncpa [#allocation4], 1

</llo_original>
